<compile_context>
chip_gen: v5e
topology: v5e:2x2
jax: 0.10.0
libtpu: 0.0.40
codegen_flags: <defaults>
</compile_context>

<pallas_src>
import jax
import jax.numpy as jnp
import numpy as np
from jax.experimental import pallas as pl
from jax.experimental.pallas import tpu as pltpu


# 3x3 taps in (dy, dx) order; matches w.reshape(9*Cin, Cout) row ordering.
_TAPS = tuple((dy, dx) for dy in range(3) for dx in range(3))


def down_kernel(x_ref, w1_ref, b1_ref, w2_ref, b2_ref, o_ref,
                pad1_ref, col1_ref, pad2_ref, col2_ref):
    # x_ref   : (nb, H, W, Cin)         nb images per grid step
    # w1_ref  : (9*Cin, Cmid)           conv1 weights, rows ordered (dy,dx,ci)
    # b1_ref  : (1, Cmid)
    # w2_ref  : (9*Cmid, Cout)
    # b2_ref  : (1, Cout)
    # o_ref   : (nb*Hp, Wp*Cout)        lane-dense output slab
    # pad1_ref: VMEM (nb, Hp+2, Wp+2, Cin)   zero-padded pooled activations
    # col1_ref: VMEM (nb*Hp*Wp, 9*Cin)       conv1 im2col patches
    # pad2_ref: VMEM (nb, Hp+2, Wp+2, Cmid)  zero-padded conv1 activations
    # col2_ref: VMEM (nb*Hp*Wp, 9*Cmid)      conv2 im2col patches
    nb, H, W, Cin = x_ref.shape
    Hp, Wp = H // 2, W // 2
    Cmid = w1_ref.shape[1]
    Cout = w2_ref.shape[1]
    M = nb * Hp * Wp

    # ---- MaxPool2d(kernel=2, stride=2) into the zero-padded halo buffer ----
    # Whole nb-block pooled in one reshape/reduce chain (single VMEM store).
    pad1_ref[...] = jnp.zeros_like(pad1_ref)
    pooled = (x_ref[...]
              .reshape(nb * Hp, 2, Wp, 2, Cin)     # split H,W; Cin stays minor
              .max(axis=3).max(axis=1)             # (nb*Hp, Wp, Cin)
              .reshape(nb, Hp, Wp, Cin))           # major-dim split only
    pad1_ref[:, 1:Hp + 1, 1:Wp + 1, :] = pooled

    # ---- Conv1: im2col -> single (M, 9*Cin) @ (9*Cin, Cmid) matmul -> ReLU --
    for k, (dy, dx) in enumerate(_TAPS):
        col1_ref[:, k * Cin:(k + 1) * Cin] = (
            pad1_ref[:, dy:dy + Hp, dx:dx + Wp, :].reshape(M, Cin))
    h1 = jnp.dot(col1_ref[...], w1_ref[...],
                 preferred_element_type=jnp.float32)
    h1 = jnp.maximum(h1 + b1_ref[...], 0.0)                      # (M, Cmid)

    # ---- Conv2 staging (zero-padded halo) ----
    pad2_ref[...] = jnp.zeros_like(pad2_ref)
    pad2_ref[:, 1:Hp + 1, 1:Wp + 1, :] = h1.reshape(nb, Hp, Wp, Cmid)

    # ---- Conv2: im2col -> single (M, 9*Cmid) @ (9*Cmid, Cout) matmul -> ReLU
    for k, (dy, dx) in enumerate(_TAPS):
        col2_ref[:, k * Cmid:(k + 1) * Cmid] = (
            pad2_ref[:, dy:dy + Hp, dx:dx + Wp, :].reshape(M, Cmid))
    h2 = jnp.dot(col2_ref[...], w2_ref[...],
                 preferred_element_type=jnp.float32)
    h2 = jnp.maximum(h2 + b2_ref[...], 0.0)                      # (M, Cout)

    # ---- Lane-dense output store: rows = (n, h), lanes = (w, cout) ----
    h2r = h2.reshape(nb * Hp, Wp, Cout)        # major-dim split, minor intact
    for xcol in range(Wp):
        o_ref[:, xcol * Cout:(xcol + 1) * Cout] = (
            h2r[:, xcol, :].astype(o_ref.dtype))


def down_pallas(x_nchw, w1, b1, w2, b2):
    """Down.forward.  x_nchw: (N, Cin, H, W) f32 -> (N, Cout, H//2, W//2)."""
    N, Cin, H, W = x_nchw.shape
    assert H % 2 == 0 and W % 2 == 0, "MaxPool2d(2) path assumes even H/W"
    Cmid = w1.shape[3]
    Cout = w2.shape[3]
    Hp, Wp = H // 2, W // 2

    # Fold several images per grid step so the im2col matmul M-dim is large
    # (~128-512 rows) and per-step grid overhead is amortized.  For larger N
    # the grid scales and the "parallel" axis lets v7x use both TensorCores.
    nb = max(1, min(N, 512 // (Hp * Wp) if Hp * Wp <= 512 else 1))
    while N % nb:
        nb -= 1
    grid = (N // nb,)
    M = nb * Hp * Wp

    x = jnp.transpose(x_nchw, (0, 2, 3, 1))          # NCHW -> NHWC
    w1_2d = w1.reshape(9 * Cin, Cmid)                # (dy, dx, ci) -> rows
    w2_2d = w2.reshape(9 * Cmid, Cout)
    b1_2d = b1.reshape(1, Cmid)
    b2_2d = b2.reshape(1, Cout)

    # Advisory scheduling hint for XLA around the custom call.
    flops_per_step = 2 * M * (9 * Cin * Cmid + 9 * Cmid * Cout)
    bytes_per_step = 4 * (nb * H * W * Cin            # input tile
                          + nb * Hp * Wp * Cout       # output tile
                          + 9 * Cin * Cmid + Cmid     # conv1 params
                          + 9 * Cmid * Cout + Cout)   # conv2 params
    cost = pl.CostEstimate(flops=flops_per_step * (N // nb),
                           transcendentals=0,
                           bytes_accessed=bytes_per_step * (N // nb))

    # TODO(synk): for realistic U-Net shapes (C~256-512, H=W~64-128), tile over
    # output rows with a 1-row halo and re-budget VMEM for v7x's 64 MiB.
    out2d = pl.pallas_call(
        down_kernel,
        out_shape=jax.ShapeDtypeStruct((N * Hp, Wp * Cout), x.dtype),
        grid_spec=pltpu.PrefetchScalarGridSpec(
            num_scalar_prefetch=0,
            grid=grid,
            in_specs=[
                pl.BlockSpec((nb, H, W, Cin), lambda i: (i, 0, 0, 0)),
                pl.BlockSpec((9 * Cin, Cmid), lambda i: (0, 0)),
                pl.BlockSpec((1, Cmid), lambda i: (0, 0)),
                pl.BlockSpec((9 * Cmid, Cout), lambda i: (0, 0)),
                pl.BlockSpec((1, Cout), lambda i: (0, 0)),
            ],
            out_specs=pl.BlockSpec((nb * Hp, Wp * Cout), lambda i: (i, 0)),
            scratch_shapes=[
                pltpu.VMEM((nb, Hp + 2, Wp + 2, Cin), jnp.float32),
                pltpu.VMEM((M, 9 * Cin), jnp.float32),
                pltpu.VMEM((nb, Hp + 2, Wp + 2, Cmid), jnp.float32),
                pltpu.VMEM((M, 9 * Cmid), jnp.float32),
            ],
        ),
        compiler_params=pltpu.CompilerParams(
            dimension_semantics=("parallel",)),
        cost_estimate=cost,
    )(x, w1_2d, b1_2d, w2_2d, b2_2d)

    out = out2d.reshape(N, Hp, Wp, Cout)             # rows=(n,h), lanes=(w,co)
    return jnp.transpose(out, (0, 3, 1, 2))          # -> NCHW


def ref_down(x_nchw, w1, b1, w2, b2):
    """Pure-JAX reference matching PyTorch Down semantics."""
    pooled = jax.lax.reduce_window(
        x_nchw, -jnp.inf, jax.lax.max,
        window_dimensions=(1, 1, 2, 2), window_strides=(1, 1, 2, 2),
        padding="VALID")

    def conv_relu(x, w, b):
        y = jax.lax.conv_general_dilated(
            x, w, window_strides=(1, 1), padding="SAME",
            dimension_numbers=("NCHW", "HWIO", "NCHW"))
        return jax.nn.relu(y + b[None, :, None, None])

    h = conv_relu(pooled, w1, b1)
    return conv_relu(h, w2, b2)


if __name__ == "__main__":
    key = jax.random.PRNGKey(0)
    k1, k2, k3, k4, k5 = jax.random.split(key, 5)

    N, Cin, H, W = 2, 4, 16, 16      # small NCHW input
    Cout = 8                          # Down(in_channels=4, out_channels=8)

    x = jax.random.normal(k1, (N, Cin, H, W), jnp.float32)
    # Deterministic synthetic parameters (HWIO conv weights, per-channel bias).
    w1 = jax.random.normal(k2, (3, 3, Cin, Cout), jnp.float32) * 0.1
    b1 = jax.random.normal(k3, (Cout,), jnp.float32) * 0.1
    w2 = jax.random.normal(k4, (3, 3, Cout, Cout), jnp.float32) * 0.1
    b2 = jax.random.normal(k5, (Cout,), jnp.float32) * 0.1

    out = down_pallas(x, w1, b1, w2, b2)
    out = jax.block_until_ready(out)

    ref = ref_down(x, w1, b1, w2, b2)
    assert out.shape == ref.shape == (N, Cout, H // 2, W // 2)
    np.testing.assert_allclose(np.asarray(out), np.asarray(ref),
                               rtol=1e-4, atol=1e-4)
    print("KERNEL_OK")
</pallas_src>

<mosaic_0001>
module attributes {stable_mosaic.version = 11 : i64} {
  func.func @down_kernel(%arg0: i32, %arg1: memref<2x16x16x4xf32, #tpu.memory_space<vmem>>, %arg2: memref<36x8xf32, #tpu.memory_space<vmem>>, %arg3: memref<1x8xf32, #tpu.memory_space<vmem>>, %arg4: memref<72x8xf32, #tpu.memory_space<vmem>>, %arg5: memref<1x8xf32, #tpu.memory_space<vmem>>, %arg6: memref<16x64xf32, #tpu.memory_space<vmem>>, %arg7: memref<2x10x10x4xf32, #tpu.memory_space<vmem>>, %arg8: memref<128x36xf32, #tpu.memory_space<vmem>>, %arg9: memref<2x10x10x8xf32, #tpu.memory_space<vmem>>, %arg10: memref<128x72xf32, #tpu.memory_space<vmem>>) attributes {dimension_semantics = [#tpu.dimension_semantics<parallel>], iteration_bounds = array<i64: 1>, scalar_prefetch = 0 : i64, scratch_operands = 4 : i64, tpu.core_type = #tpu.core_type<tc>, window_params = [{transform_indices = @transform_0, window_bounds = array<i64: 2, 16, 16, 4>}, {pipeline_mode = #tpu.pipeline_mode<synchronous>, transform_indices = @transform_1, window_bounds = array<i64: 36, 8>}, {pipeline_mode = #tpu.pipeline_mode<synchronous>, transform_indices = @transform_2, window_bounds = array<i64: 1, 8>}, {pipeline_mode = #tpu.pipeline_mode<synchronous>, transform_indices = @transform_3, window_bounds = array<i64: 72, 8>}, {pipeline_mode = #tpu.pipeline_mode<synchronous>, transform_indices = @transform_4, window_bounds = array<i64: 1, 8>}, {transform_indices = @transform_5, window_bounds = array<i64: 16, 64>}]} {
    %cst = arith.constant 0.000000e+00 : f32
    %0 = vector.broadcast %cst : f32 to vector<2x10x10x4xf32>
    %c0 = arith.constant 0 : index
    %c0_0 = arith.constant 0 : index
    %c0_1 = arith.constant 0 : index
    %c0_2 = arith.constant 0 : index
    %1 = vector.load %arg7[%c0, %c0_0, %c0_1, %c0_2] : memref<2x10x10x4xf32, #tpu.memory_space<vmem>>, vector<2x10x10x4xf32>
    tpu.vector_store %arg7[%c0, %c0_0, %c0_1, %c0_2], %0 {strides = array<i32>} : memref<2x10x10x4xf32, #tpu.memory_space<vmem>>, vector<2x10x10x4xf32>,
    %c0_3 = arith.constant 0 : index
    %c0_4 = arith.constant 0 : index
    %c0_5 = arith.constant 0 : index
    %c0_6 = arith.constant 0 : index
    %2 = vector.load %arg1[%c0_3, %c0_4, %c0_5, %c0_6] : memref<2x16x16x4xf32, #tpu.memory_space<vmem>>, vector<2x16x16x4xf32>
    %3 = vector.shape_cast %2 : vector<2x16x16x4xf32> to vector<16x2x8x2x4xf32>
    %cst_7 = arith.constant dense<0xFF800000> : vector<16x2x8x4xf32>
    %4 = vector.multi_reduction <maximumf>, %3, %cst_7 [3] : vector<16x2x8x2x4xf32> to vector<16x2x8x4xf32>
    %cst_8 = arith.constant dense<0xFF800000> : vector<16x8x4xf32>
    %5 = vector.multi_reduction <maximumf>, %4, %cst_8 [1] : vector<16x2x8x4xf32> to vector<16x8x4xf32>
    %6 = vector.shape_cast %5 : vector<16x8x4xf32> to vector<2x8x8x4xf32>
    %c0_9 = arith.constant 0 : index
    %c1 = arith.constant 1 : index
    %c1_10 = arith.constant 1 : index
    %c0_11 = arith.constant 0 : index
    %7 = vector.load %arg7[%c0_9, %c1, %c1_10, %c0_11] : memref<2x10x10x4xf32, #tpu.memory_space<vmem>>, vector<2x8x8x4xf32>
    tpu.vector_store %arg7[%c0_9, %c1, %c1_10, %c0_11], %6 {strides = array<i32>} : memref<2x10x10x4xf32, #tpu.memory_space<vmem>>, vector<2x8x8x4xf32>,
    %c0_12 = arith.constant 0 : index
    %c0_13 = arith.constant 0 : index
    %c0_14 = arith.constant 0 : index
    %c0_15 = arith.constant 0 : index
    %8 = vector.load %arg7[%c0_12, %c0_13, %c0_14, %c0_15] : memref<2x10x10x4xf32, #tpu.memory_space<vmem>>, vector<2x8x8x4xf32>
    %9 = vector.shape_cast %8 : vector<2x8x8x4xf32> to vector<128x4xf32>
    %c0_16 = arith.constant 0 : index
    %c0_17 = arith.constant 0 : index
    %10 = vector.load %arg8[%c0_16, %c0_17] : memref<128x36xf32, #tpu.memory_space<vmem>>, vector<128x4xf32>
    tpu.vector_store %arg8[%c0_16, %c0_17], %9 {strides = array<i32>} : memref<128x36xf32, #tpu.memory_space<vmem>>, vector<128x4xf32>,
    %c0_18 = arith.constant 0 : index
    %c0_19 = arith.constant 0 : index
    %c1_20 = arith.constant 1 : index
    %c0_21 = arith.constant 0 : index
    %11 = vector.load %arg7[%c0_18, %c0_19, %c1_20, %c0_21] : memref<2x10x10x4xf32, #tpu.memory_space<vmem>>, vector<2x8x8x4xf32>
    %12 = vector.shape_cast %11 : vector<2x8x8x4xf32> to vector<128x4xf32>
    %c0_22 = arith.constant 0 : index
    %c4 = arith.constant 4 : index
    %13 = vector.load %arg8[%c0_22, %c4] : memref<128x36xf32, #tpu.memory_space<vmem>>, vector<128x4xf32>
    tpu.vector_store %arg8[%c0_22, %c4], %12 {strides = array<i32>} : memref<128x36xf32, #tpu.memory_space<vmem>>, vector<128x4xf32>,
    %c0_23 = arith.constant 0 : index
    %c0_24 = arith.constant 0 : index
    %c2 = arith.constant 2 : index
    %c0_25 = arith.constant 0 : index
    %14 = vector.load %arg7[%c0_23, %c0_24, %c2, %c0_25] : memref<2x10x10x4xf32, #tpu.memory_space<vmem>>, vector<2x8x8x4xf32>
    %15 = vector.shape_cast %14 : vector<2x8x8x4xf32> to vector<128x4xf32>
    %c0_26 = arith.constant 0 : index
    %c8 = arith.constant 8 : index
    %16 = vector.load %arg8[%c0_26, %c8] : memref<128x36xf32, #tpu.memory_space<vmem>>, vector<128x4xf32>
    tpu.vector_store %arg8[%c0_26, %c8], %15 {strides = array<i32>} : memref<128x36xf32, #tpu.memory_space<vmem>>, vector<128x4xf32>,
    %c0_27 = arith.constant 0 : index
    %c1_28 = arith.constant 1 : index
    %c0_29 = arith.constant 0 : index
    %c0_30 = arith.constant 0 : index
    %17 = vector.load %arg7[%c0_27, %c1_28, %c0_29, %c0_30] : memref<2x10x10x4xf32, #tpu.memory_space<vmem>>, vector<2x8x8x4xf32>
    %18 = vector.shape_cast %17 : vector<2x8x8x4xf32> to vector<128x4xf32>
    %c0_31 = arith.constant 0 : index
    %c12 = arith.constant 12 : index
    %19 = vector.load %arg8[%c0_31, %c12] : memref<128x36xf32, #tpu.memory_space<vmem>>, vector<128x4xf32>
    tpu.vector_store %arg8[%c0_31, %c12], %18 {strides = array<i32>} : memref<128x36xf32, #tpu.memory_space<vmem>>, vector<128x4xf32>,
    %c0_32 = arith.constant 0 : index
    %c1_33 = arith.constant 1 : index
    %c1_34 = arith.constant 1 : index
    %c0_35 = arith.constant 0 : index
    %20 = vector.load %arg7[%c0_32, %c1_33, %c1_34, %c0_35] : memref<2x10x10x4xf32, #tpu.memory_space<vmem>>, vector<2x8x8x4xf32>
    %21 = vector.shape_cast %20 : vector<2x8x8x4xf32> to vector<128x4xf32>
    %c0_36 = arith.constant 0 : index
    %c16 = arith.constant 16 : index
    %22 = vector.load %arg8[%c0_36, %c16] : memref<128x36xf32, #tpu.memory_space<vmem>>, vector<128x4xf32>
    tpu.vector_store %arg8[%c0_36, %c16], %21 {strides = array<i32>} : memref<128x36xf32, #tpu.memory_space<vmem>>, vector<128x4xf32>,
    %c0_37 = arith.constant 0 : index
    %c1_38 = arith.constant 1 : index
    %c2_39 = arith.constant 2 : index
    %c0_40 = arith.constant 0 : index
    %23 = vector.load %arg7[%c0_37, %c1_38, %c2_39, %c0_40] : memref<2x10x10x4xf32, #tpu.memory_space<vmem>>, vector<2x8x8x4xf32>
    %24 = vector.shape_cast %23 : vector<2x8x8x4xf32> to vector<128x4xf32>
    %c0_41 = arith.constant 0 : index
    %c20 = arith.constant 20 : index
    %25 = vector.load %arg8[%c0_41, %c20] : memref<128x36xf32, #tpu.memory_space<vmem>>, vector<128x4xf32>
    tpu.vector_store %arg8[%c0_41, %c20], %24 {strides = array<i32>} : memref<128x36xf32, #tpu.memory_space<vmem>>, vector<128x4xf32>,
    %c0_42 = arith.constant 0 : index
    %c2_43 = arith.constant 2 : index
    %c0_44 = arith.constant 0 : index
    %c0_45 = arith.constant 0 : index
    %26 = vector.load %arg7[%c0_42, %c2_43, %c0_44, %c0_45] : memref<2x10x10x4xf32, #tpu.memory_space<vmem>>, vector<2x8x8x4xf32>
    %27 = vector.shape_cast %26 : vector<2x8x8x4xf32> to vector<128x4xf32>
    %c0_46 = arith.constant 0 : index
    %c24 = arith.constant 24 : index
    %28 = vector.load %arg8[%c0_46, %c24] : memref<128x36xf32, #tpu.memory_space<vmem>>, vector<128x4xf32>
    tpu.vector_store %arg8[%c0_46, %c24], %27 {strides = array<i32>} : memref<128x36xf32, #tpu.memory_space<vmem>>, vector<128x4xf32>,
    %c0_47 = arith.constant 0 : index
    %c2_48 = arith.constant 2 : index
    %c1_49 = arith.constant 1 : index
    %c0_50 = arith.constant 0 : index
    %29 = vector.load %arg7[%c0_47, %c2_48, %c1_49, %c0_50] : memref<2x10x10x4xf32, #tpu.memory_space<vmem>>, vector<2x8x8x4xf32>
    %30 = vector.shape_cast %29 : vector<2x8x8x4xf32> to vector<128x4xf32>
    %c0_51 = arith.constant 0 : index
    %c28 = arith.constant 28 : index
    %31 = vector.load %arg8[%c0_51, %c28] : memref<128x36xf32, #tpu.memory_space<vmem>>, vector<128x4xf32>
    tpu.vector_store %arg8[%c0_51, %c28], %30 {strides = array<i32>} : memref<128x36xf32, #tpu.memory_space<vmem>>, vector<128x4xf32>,
    %c0_52 = arith.constant 0 : index
    %c2_53 = arith.constant 2 : index
    %c2_54 = arith.constant 2 : index
    %c0_55 = arith.constant 0 : index
    %32 = vector.load %arg7[%c0_52, %c2_53, %c2_54, %c0_55] : memref<2x10x10x4xf32, #tpu.memory_space<vmem>>, vector<2x8x8x4xf32>
    %33 = vector.shape_cast %32 : vector<2x8x8x4xf32> to vector<128x4xf32>
    %c0_56 = arith.constant 0 : index
    %c32 = arith.constant 32 : index
    %34 = vector.load %arg8[%c0_56, %c32] : memref<128x36xf32, #tpu.memory_space<vmem>>, vector<128x4xf32>
    tpu.vector_store %arg8[%c0_56, %c32], %33 {strides = array<i32>} : memref<128x36xf32, #tpu.memory_space<vmem>>, vector<128x4xf32>,
    %c0_57 = arith.constant 0 : index
    %c0_58 = arith.constant 0 : index
    %35 = vector.load %arg8[%c0_57, %c0_58] : memref<128x36xf32, #tpu.memory_space<vmem>>, vector<128x36xf32>
    %c0_59 = arith.constant 0 : index
    %c0_60 = arith.constant 0 : index
    %36 = vector.load %arg2[%c0_59, %c0_60] : memref<36x8xf32, #tpu.memory_space<vmem>>, vector<36x8xf32>
    %cst_61 = arith.constant dense<0.000000e+00> : vector<128x8xf32>
    %37 = tpu.matmul %35, %36, %cst_61 {dimension_numbers = #tpu.dot_dimension_numbers<[1], [0], [0], [1], [0, 0, 1, 1], [], []>} : vector<128x36xf32>, vector<36x8xf32>, vector<128x8xf32> -> vector<128x8xf32>
    %c0_62 = arith.constant 0 : index
    %c0_63 = arith.constant 0 : index
    %38 = vector.load %arg3[%c0_62, %c0_63] : memref<1x8xf32, #tpu.memory_space<vmem>>, vector<1x8xf32>
    %39 = vector.broadcast %38 : vector<1x8xf32> to vector<128x8xf32>
    %40 = arith.addf %37, %39 : vector<128x8xf32>
    %cst_64 = arith.constant 0.000000e+00 : f32
    %41 = vector.broadcast %cst_64 : f32 to vector<128x8xf32>
    %42 = arith.maximumf %40, %41 : vector<128x8xf32>
    %cst_65 = arith.constant 0.000000e+00 : f32
    %43 = vector.broadcast %cst_65 : f32 to vector<2x10x10x8xf32>
    %c0_66 = arith.constant 0 : index
    %c0_67 = arith.constant 0 : index
    %c0_68 = arith.constant 0 : index
    %c0_69 = arith.constant 0 : index
    %44 = vector.load %arg9[%c0_66, %c0_67, %c0_68, %c0_69] : memref<2x10x10x8xf32, #tpu.memory_space<vmem>>, vector<2x10x10x8xf32>
    tpu.vector_store %arg9[%c0_66, %c0_67, %c0_68, %c0_69], %43 {strides = array<i32>} : memref<2x10x10x8xf32, #tpu.memory_space<vmem>>, vector<2x10x10x8xf32>,
    %45 = vector.shape_cast %42 : vector<128x8xf32> to vector<2x8x8x8xf32>
    %c0_70 = arith.constant 0 : index
    %c1_71 = arith.constant 1 : index
    %c1_72 = arith.constant 1 : index
    %c0_73 = arith.constant 0 : index
    %46 = vector.load %arg9[%c0_70, %c1_71, %c1_72, %c0_73] : memref<2x10x10x8xf32, #tpu.memory_space<vmem>>, vector<2x8x8x8xf32>
    tpu.vector_store %arg9[%c0_70, %c1_71, %c1_72, %c0_73], %45 {strides = array<i32>} : memref<2x10x10x8xf32, #tpu.memory_space<vmem>>, vector<2x8x8x8xf32>,
    %c0_74 = arith.constant 0 : index
    %c0_75 = arith.constant 0 : index
    %c0_76 = arith.constant 0 : index
    %c0_77 = arith.constant 0 : index
    %47 = vector.load %arg9[%c0_74, %c0_75, %c0_76, %c0_77] : memref<2x10x10x8xf32, #tpu.memory_space<vmem>>, vector<2x8x8x8xf32>
    %48 = vector.shape_cast %47 : vector<2x8x8x8xf32> to vector<128x8xf32>
    %c0_78 = arith.constant 0 : index
    %c0_79 = arith.constant 0 : index
    %49 = vector.load %arg10[%c0_78, %c0_79] : memref<128x72xf32, #tpu.memory_space<vmem>>, vector<128x8xf32>
    tpu.vector_store %arg10[%c0_78, %c0_79], %48 {strides = array<i32>} : memref<128x72xf32, #tpu.memory_space<vmem>>, vector<128x8xf32>,
    %c0_80 = arith.constant 0 : index
    %c0_81 = arith.constant 0 : index
    %c1_82 = arith.constant 1 : index
    %c0_83 = arith.constant 0 : index
    %50 = vector.load %arg9[%c0_80, %c0_81, %c1_82, %c0_83] : memref<2x10x10x8xf32, #tpu.memory_space<vmem>>, vector<2x8x8x8xf32>
    %51 = vector.shape_cast %50 : vector<2x8x8x8xf32> to vector<128x8xf32>
    %c0_84 = arith.constant 0 : index
    %c8_85 = arith.constant 8 : index
    %52 = vector.load %arg10[%c0_84, %c8_85] : memref<128x72xf32, #tpu.memory_space<vmem>>, vector<128x8xf32>
    tpu.vector_store %arg10[%c0_84, %c8_85], %51 {strides = array<i32>} : memref<128x72xf32, #tpu.memory_space<vmem>>, vector<128x8xf32>,
    %c0_86 = arith.constant 0 : index
    %c0_87 = arith.constant 0 : index
    %c2_88 = arith.constant 2 : index
    %c0_89 = arith.constant 0 : index
    %53 = vector.load %arg9[%c0_86, %c0_87, %c2_88, %c0_89] : memref<2x10x10x8xf32, #tpu.memory_space<vmem>>, vector<2x8x8x8xf32>
    %54 = vector.shape_cast %53 : vector<2x8x8x8xf32> to vector<128x8xf32>
    %c0_90 = arith.constant 0 : index
    %c16_91 = arith.constant 16 : index
    %55 = vector.load %arg10[%c0_90, %c16_91] : memref<128x72xf32, #tpu.memory_space<vmem>>, vector<128x8xf32>
    tpu.vector_store %arg10[%c0_90, %c16_91], %54 {strides = array<i32>} : memref<128x72xf32, #tpu.memory_space<vmem>>, vector<128x8xf32>,
    %c0_92 = arith.constant 0 : index
    %c1_93 = arith.constant 1 : index
    %c0_94 = arith.constant 0 : index
    %c0_95 = arith.constant 0 : index
    %56 = vector.load %arg9[%c0_92, %c1_93, %c0_94, %c0_95] : memref<2x10x10x8xf32, #tpu.memory_space<vmem>>, vector<2x8x8x8xf32>
    %57 = vector.shape_cast %56 : vector<2x8x8x8xf32> to vector<128x8xf32>
    %c0_96 = arith.constant 0 : index
    %c24_97 = arith.constant 24 : index
    %58 = vector.load %arg10[%c0_96, %c24_97] : memref<128x72xf32, #tpu.memory_space<vmem>>, vector<128x8xf32>
    tpu.vector_store %arg10[%c0_96, %c24_97], %57 {strides = array<i32>} : memref<128x72xf32, #tpu.memory_space<vmem>>, vector<128x8xf32>,
    %c0_98 = arith.constant 0 : index
    %c1_99 = arith.constant 1 : index
    %c1_100 = arith.constant 1 : index
    %c0_101 = arith.constant 0 : index
    %59 = vector.load %arg9[%c0_98, %c1_99, %c1_100, %c0_101] : memref<2x10x10x8xf32, #tpu.memory_space<vmem>>, vector<2x8x8x8xf32>
    %60 = vector.shape_cast %59 : vector<2x8x8x8xf32> to vector<128x8xf32>
    %c0_102 = arith.constant 0 : index
    %c32_103 = arith.constant 32 : index
    %61 = vector.load %arg10[%c0_102, %c32_103] : memref<128x72xf32, #tpu.memory_space<vmem>>, vector<128x8xf32>
    tpu.vector_store %arg10[%c0_102, %c32_103], %60 {strides = array<i32>} : memref<128x72xf32, #tpu.memory_space<vmem>>, vector<128x8xf32>,
    %c0_104 = arith.constant 0 : index
    %c1_105 = arith.constant 1 : index
    %c2_106 = arith.constant 2 : index
    %c0_107 = arith.constant 0 : index
    %62 = vector.load %arg9[%c0_104, %c1_105, %c2_106, %c0_107] : memref<2x10x10x8xf32, #tpu.memory_space<vmem>>, vector<2x8x8x8xf32>
    %63 = vector.shape_cast %62 : vector<2x8x8x8xf32> to vector<128x8xf32>
    %c0_108 = arith.constant 0 : index
    %c40 = arith.constant 40 : index
    %64 = vector.load %arg10[%c0_108, %c40] : memref<128x72xf32, #tpu.memory_space<vmem>>, vector<128x8xf32>
    tpu.vector_store %arg10[%c0_108, %c40], %63 {strides = array<i32>} : memref<128x72xf32, #tpu.memory_space<vmem>>, vector<128x8xf32>,
    %c0_109 = arith.constant 0 : index
    %c2_110 = arith.constant 2 : index
    %c0_111 = arith.constant 0 : index
    %c0_112 = arith.constant 0 : index
    %65 = vector.load %arg9[%c0_109, %c2_110, %c0_111, %c0_112] : memref<2x10x10x8xf32, #tpu.memory_space<vmem>>, vector<2x8x8x8xf32>
    %66 = vector.shape_cast %65 : vector<2x8x8x8xf32> to vector<128x8xf32>
    %c0_113 = arith.constant 0 : index
    %c48 = arith.constant 48 : index
    %67 = vector.load %arg10[%c0_113, %c48] : memref<128x72xf32, #tpu.memory_space<vmem>>, vector<128x8xf32>
    tpu.vector_store %arg10[%c0_113, %c48], %66 {strides = array<i32>} : memref<128x72xf32, #tpu.memory_space<vmem>>, vector<128x8xf32>,
    %c0_114 = arith.constant 0 : index
    %c2_115 = arith.constant 2 : index
    %c1_116 = arith.constant 1 : index
    %c0_117 = arith.constant 0 : index
    %68 = vector.load %arg9[%c0_114, %c2_115, %c1_116, %c0_117] : memref<2x10x10x8xf32, #tpu.memory_space<vmem>>, vector<2x8x8x8xf32>
    %69 = vector.shape_cast %68 : vector<2x8x8x8xf32> to vector<128x8xf32>
    %c0_118 = arith.constant 0 : index
    %c56 = arith.constant 56 : index
    %70 = vector.load %arg10[%c0_118, %c56] : memref<128x72xf32, #tpu.memory_space<vmem>>, vector<128x8xf32>
    tpu.vector_store %arg10[%c0_118, %c56], %69 {strides = array<i32>} : memref<128x72xf32, #tpu.memory_space<vmem>>, vector<128x8xf32>,
    %c0_119 = arith.constant 0 : index
    %c2_120 = arith.constant 2 : index
    %c2_121 = arith.constant 2 : index
    %c0_122 = arith.constant 0 : index
    %71 = vector.load %arg9[%c0_119, %c2_120, %c2_121, %c0_122] : memref<2x10x10x8xf32, #tpu.memory_space<vmem>>, vector<2x8x8x8xf32>
    %72 = vector.shape_cast %71 : vector<2x8x8x8xf32> to vector<128x8xf32>
    %c0_123 = arith.constant 0 : index
    %c64 = arith.constant 64 : index
    %73 = vector.load %arg10[%c0_123, %c64] : memref<128x72xf32, #tpu.memory_space<vmem>>, vector<128x8xf32>
    tpu.vector_store %arg10[%c0_123, %c64], %72 {strides = array<i32>} : memref<128x72xf32, #tpu.memory_space<vmem>>, vector<128x8xf32>,
    %c0_124 = arith.constant 0 : index
    %c0_125 = arith.constant 0 : index
    %74 = vector.load %arg10[%c0_124, %c0_125] : memref<128x72xf32, #tpu.memory_space<vmem>>, vector<128x72xf32>
    %c0_126 = arith.constant 0 : index
    %c0_127 = arith.constant 0 : index
    %75 = vector.load %arg4[%c0_126, %c0_127] : memref<72x8xf32, #tpu.memory_space<vmem>>, vector<72x8xf32>
    %cst_128 = arith.constant dense<0.000000e+00> : vector<128x8xf32>
    %76 = tpu.matmul %74, %75, %cst_128 {dimension_numbers = #tpu.dot_dimension_numbers<[1], [0], [0], [1], [0, 0, 1, 1], [], []>} : vector<128x72xf32>, vector<72x8xf32>, vector<128x8xf32> -> vector<128x8xf32>
    %c0_129 = arith.constant 0 : index
    %c0_130 = arith.constant 0 : index
    %77 = vector.load %arg5[%c0_129, %c0_130] : memref<1x8xf32, #tpu.memory_space<vmem>>, vector<1x8xf32>
    %78 = vector.broadcast %77 : vector<1x8xf32> to vector<128x8xf32>
    %79 = arith.addf %76, %78 : vector<128x8xf32>
    %cst_131 = arith.constant 0.000000e+00 : f32
    %80 = vector.broadcast %cst_131 : f32 to vector<128x8xf32>
    %81 = arith.maximumf %79, %80 : vector<128x8xf32>
    %82 = vector.shape_cast %81 : vector<128x8xf32> to vector<16x8x8xf32>
    %83 = vector.extract_strided_slice %82 {offsets = [0, 0, 0], sizes = [16, 1, 8], strides = [1, 1, 1]} : vector<16x8x8xf32> to vector<16x1x8xf32>
    %84 = vector.shape_cast %83 : vector<16x1x8xf32> to vector<16x8xf32>
    %c0_132 = arith.constant 0 : index
    %c0_133 = arith.constant 0 : index
    %85 = vector.load %arg6[%c0_132, %c0_133] : memref<16x64xf32, #tpu.memory_space<vmem>>, vector<16x8xf32>
    tpu.vector_store %arg6[%c0_132, %c0_133], %84 {strides = array<i32>} : memref<16x64xf32, #tpu.memory_space<vmem>>, vector<16x8xf32>,
    %86 = vector.extract_strided_slice %82 {offsets = [0, 1, 0], sizes = [16, 1, 8], strides = [1, 1, 1]} : vector<16x8x8xf32> to vector<16x1x8xf32>
    %87 = vector.shape_cast %86 : vector<16x1x8xf32> to vector<16x8xf32>
    %c0_134 = arith.constant 0 : index
    %c8_135 = arith.constant 8 : index
    %88 = vector.load %arg6[%c0_134, %c8_135] : memref<16x64xf32, #tpu.memory_space<vmem>>, vector<16x8xf32>
    tpu.vector_store %arg6[%c0_134, %c8_135], %87 {strides = array<i32>} : memref<16x64xf32, #tpu.memory_space<vmem>>, vector<16x8xf32>,
    %89 = vector.extract_strided_slice %82 {offsets = [0, 2, 0], sizes = [16, 1, 8], strides = [1, 1, 1]} : vector<16x8x8xf32> to vector<16x1x8xf32>
    %90 = vector.shape_cast %89 : vector<16x1x8xf32> to vector<16x8xf32>
    %c0_136 = arith.constant 0 : index
    %c16_137 = arith.constant 16 : index
    %91 = vector.load %arg6[%c0_136, %c16_137] : memref<16x64xf32, #tpu.memory_space<vmem>>, vector<16x8xf32>
    tpu.vector_store %arg6[%c0_136, %c16_137], %90 {strides = array<i32>} : memref<16x64xf32, #tpu.memory_space<vmem>>, vector<16x8xf32>,
    %92 = vector.extract_strided_slice %82 {offsets = [0, 3, 0], sizes = [16, 1, 8], strides = [1, 1, 1]} : vector<16x8x8xf32> to vector<16x1x8xf32>
    %93 = vector.shape_cast %92 : vector<16x1x8xf32> to vector<16x8xf32>
    %c0_138 = arith.constant 0 : index
    %c24_139 = arith.constant 24 : index
    %94 = vector.load %arg6[%c0_138, %c24_139] : memref<16x64xf32, #tpu.memory_space<vmem>>, vector<16x8xf32>
    tpu.vector_store %arg6[%c0_138, %c24_139], %93 {strides = array<i32>} : memref<16x64xf32, #tpu.memory_space<vmem>>, vector<16x8xf32>,
    %95 = vector.extract_strided_slice %82 {offsets = [0, 4, 0], sizes = [16, 1, 8], strides = [1, 1, 1]} : vector<16x8x8xf32> to vector<16x1x8xf32>
    %96 = vector.shape_cast %95 : vector<16x1x8xf32> to vector<16x8xf32>
    %c0_140 = arith.constant 0 : index
    %c32_141 = arith.constant 32 : index
    %97 = vector.load %arg6[%c0_140, %c32_141] : memref<16x64xf32, #tpu.memory_space<vmem>>, vector<16x8xf32>
    tpu.vector_store %arg6[%c0_140, %c32_141], %96 {strides = array<i32>} : memref<16x64xf32, #tpu.memory_space<vmem>>, vector<16x8xf32>,
    %98 = vector.extract_strided_slice %82 {offsets = [0, 5, 0], sizes = [16, 1, 8], strides = [1, 1, 1]} : vector<16x8x8xf32> to vector<16x1x8xf32>
    %99 = vector.shape_cast %98 : vector<16x1x8xf32> to vector<16x8xf32>
    %c0_142 = arith.constant 0 : index
    %c40_143 = arith.constant 40 : index
    %100 = vector.load %arg6[%c0_142, %c40_143] : memref<16x64xf32, #tpu.memory_space<vmem>>, vector<16x8xf32>
    tpu.vector_store %arg6[%c0_142, %c40_143], %99 {strides = array<i32>} : memref<16x64xf32, #tpu.memory_space<vmem>>, vector<16x8xf32>,
    %101 = vector.extract_strided_slice %82 {offsets = [0, 6, 0], sizes = [16, 1, 8], strides = [1, 1, 1]} : vector<16x8x8xf32> to vector<16x1x8xf32>
    %102 = vector.shape_cast %101 : vector<16x1x8xf32> to vector<16x8xf32>
    %c0_144 = arith.constant 0 : index
    %c48_145 = arith.constant 48 : index
    %103 = vector.load %arg6[%c0_144, %c48_145] : memref<16x64xf32, #tpu.memory_space<vmem>>, vector<16x8xf32>
    tpu.vector_store %arg6[%c0_144, %c48_145], %102 {strides = array<i32>} : memref<16x64xf32, #tpu.memory_space<vmem>>, vector<16x8xf32>,
    %104 = vector.extract_strided_slice %82 {offsets = [0, 7, 0], sizes = [16, 1, 8], strides = [1, 1, 1]} : vector<16x8x8xf32> to vector<16x1x8xf32>
    %105 = vector.shape_cast %104 : vector<16x1x8xf32> to vector<16x8xf32>
    %c0_146 = arith.constant 0 : index
    %c56_147 = arith.constant 56 : index
    %106 = vector.load %arg6[%c0_146, %c56_147] : memref<16x64xf32, #tpu.memory_space<vmem>>, vector<16x8xf32>
    tpu.vector_store %arg6[%c0_146, %c56_147], %105 {strides = array<i32>} : memref<16x64xf32, #tpu.memory_space<vmem>>, vector<16x8xf32>,
    return
  }
  func.func @transform_0(%arg0: i32) -> (i32, i32, i32, i32) {
    %c0_i32 = arith.constant 0 : i32
    %c0_i32_0 = arith.constant 0 : i32
    %c0_i32_1 = arith.constant 0 : i32
    %c0_i32_2 = arith.constant 0 : i32
    return %arg0, %c0_i32, %c0_i32_0, %c0_i32_1 : i32, i32, i32, i32
  }
  func.func @transform_1(%arg0: i32) -> (i32, i32) {
    %c0_i32 = arith.constant 0 : i32
    %c0_i32_0 = arith.constant 0 : i32
    %c0_i32_1 = arith.constant 0 : i32
    return %c0_i32, %c0_i32_0 : i32, i32
  }
  func.func @transform_2(%arg0: i32) -> (i32, i32) {
    %c0_i32 = arith.constant 0 : i32
    %c0_i32_0 = arith.constant 0 : i32
    %c0_i32_1 = arith.constant 0 : i32
    return %c0_i32, %c0_i32_0 : i32, i32
  }
  func.func @transform_3(%arg0: i32) -> (i32, i32) {
    %c0_i32 = arith.constant 0 : i32
    %c0_i32_0 = arith.constant 0 : i32
    %c0_i32_1 = arith.constant 0 : i32
    return %c0_i32, %c0_i32_0 : i32, i32
  }
  func.func @transform_4(%arg0: i32) -> (i32, i32) {
    %c0_i32 = arith.constant 0 : i32
    %c0_i32_0 = arith.constant 0 : i32
    %c0_i32_1 = arith.constant 0 : i32
    return %c0_i32, %c0_i32_0 : i32, i32
  }
  func.func @transform_5(%arg0: i32) -> (i32, i32) {
    %c0_i32 = arith.constant 0 : i32
    %c0_i32_0 = arith.constant 0 : i32
    return %arg0, %c0_i32 : i32, i32
  }
}

</mosaic_0001>

<llo_original>
// kernel: tpu_custom_call.1
$region0: #{tpu_custom_call.1}
  #allocation0 [shape = 'u32[]', space=smem, size = 0x4, offset = 0x4, fixed_abs, tag = 'smem constant byte address 0x4 - core index']
  #allocation1 [shape = 'u32[72,128]{1,0:T(1,128)}', space=vmem, size = 0x9000, scoped, tag = 'internal scratch']
  #allocation2 [shape = 'f32[2,10,10,4]{3,2,1,0:T(8,128)}', space=vmem, size = 0x28000, scoped, tag = 'scratch operand']
  #allocation3 [shape = 'f32[128,36]{1,0:T(8,128)}', space=vmem, size = 0x10000, scoped, tag = 'scratch operand']
  #allocation4 [shape = 'f32[2,10,10,8]{3,2,1,0:T(8,128)}', space=vmem, size = 0x28000, scoped, tag = 'scratch operand']
  #allocation5 [shape = 'f32[128,72]{1,0:T(8,128)}', space=vmem, size = 0x10000, scoped, tag = 'scratch operand']
  %s0 = inlined_call_operand.vmem [shape: f32[2,16,16,4], index: 0, kind: input, shape index: {}]
  %s1 = inlined_call_operand.vmem [shape: f32[36,8], index: 1, kind: input, shape index: {}]
  %s2 = inlined_call_operand.vmem [shape: f32[1,8], index: 2, kind: input, shape index: {}]
  %s3 = inlined_call_operand.vmem [shape: f32[72,8], index: 3, kind: input, shape index: {}]
  %s4 = inlined_call_operand.vmem [shape: f32[1,8], index: 4, kind: input, shape index: {}]
  %s5 = inlined_call_operand.hbm [shape: f32[16,64], index: 5, kind: output, shape index: {}]
  %s6 = sld [smem:[#allocation0]]
  $region30: #{tpu_custom_call.1} parent=0
    _
  %s8 = ssub.s32 1, %s6
  %s9 = scalar_select 0, %s8, %s6
  $region1: #{tpu_custom_call.1} parent=0
    #allocation6 [shape = 'u8[8192]{0}', space=vmem, size = 0x2000, scoped, tag = 'output window, operand 0, single buffered']
    #allocation7 [shape = 's32[1]{0}', space=sflag, size = 0x4, scoped, tag = 'scoped memory for tpu_custom_call.1']
    %10 = vsyncpa [#allocation7], 0
    // Predicated region
    $region2: #{tpu_custom_call.1} parent=1 // pred_check
      _
    $region3: #{tpu_custom_call.1} parent=1 // pred_check_branch
      %12 = sbr.rel (0) target = $region5
    $region4: #{tpu_custom_call.1} parent=1 // pred_region
      _
    $region5: #{tpu_custom_call.1} parent=1 // pred_fallthru
      _
    // Predicated region
    $region6: #{tpu_custom_call.1} parent=1 // pred_check
      _
    $region7: #{tpu_custom_call.1} parent=1 // pred_check_branch
      %14 = sbr.rel (0) target = $region9
    $region8: #{tpu_custom_call.1} parent=1 // pred_region
      _
    $region9: #{tpu_custom_call.1} parent=1 // pred_fallthru
      _
    // Predicated region
    $region10: #{tpu_custom_call.1} parent=1 // pred_check
      _
    $region11: #{tpu_custom_call.1} parent=1 // pred_check_branch
      %16 = sbr.rel (0) target = $region13
    $region12: #{tpu_custom_call.1} parent=1 // pred_region
      _
    $region13: #{tpu_custom_call.1} parent=1 // pred_fallthru
      _
    // Predicated region
    $region14: #{tpu_custom_call.1} parent=1 // pred_check
      _
    $region15: #{tpu_custom_call.1} parent=1 // pred_check_branch
      %18 = sbr.rel (0) target = $region17
    $region16: #{tpu_custom_call.1} parent=1 // pred_region
      _
    $region17: #{tpu_custom_call.1} parent=1 // pred_fallthru
      _
    // Predicated region
    $region18: #{tpu_custom_call.1} parent=1 // pred_check
      _
    $region19: #{tpu_custom_call.1} parent=1 // pred_check_branch
      %20 = sbr.rel (0) target = $region21
    $region20: #{tpu_custom_call.1} parent=1 // pred_region
      _
    $region21: #{tpu_custom_call.1} parent=1 // pred_fallthru
      _
    %vm21 = vcmask 31744
    %22 = vst.msk [vmem:[#allocation2] sm:$0xff] %vm21, 0.0
    %vm23 = vcmask 25600
    %24 = vst.msk [vmem:[#allocation2 + $0x8] sm:$0x3] %vm23, 0.0
    %25 = vst.msk [vmem:[#allocation2 + $0x10] sm:$0xff] %vm21, 0.0
    %26 = vst.msk [vmem:[#allocation2 + $0x18] sm:$0x3] %vm23, 0.0
    %27 = vst.msk [vmem:[#allocation2 + $0x20] sm:$0xff] %vm21, 0.0
    %28 = vst.msk [vmem:[#allocation2 + $0x28] sm:$0x3] %vm23, 0.0
    %29 = vst.msk [vmem:[#allocation2 + $0x30] sm:$0xff] %vm21, 0.0
    %30 = vst.msk [vmem:[#allocation2 + $0x38] sm:$0x3] %vm23, 0.0
    %31 = vst.msk [vmem:[#allocation2 + $0x40] sm:$0xff] %vm21, 0.0
    %32 = vst.msk [vmem:[#allocation2 + $0x48] sm:$0x3] %vm23, 0.0
    %33 = vst.msk [vmem:[#allocation2 + $0x50] sm:$0xff] %vm21, 0.0
    %34 = vst.msk [vmem:[#allocation2 + $0x58] sm:$0x3] %vm23, 0.0
    %35 = vst.msk [vmem:[#allocation2 + $0x60] sm:$0xff] %vm21, 0.0
    %36 = vst.msk [vmem:[#allocation2 + $0x68] sm:$0x3] %vm23, 0.0
    %37 = vst.msk [vmem:[#allocation2 + $0x70] sm:$0xff] %vm21, 0.0
    %38 = vst.msk [vmem:[#allocation2 + $0x78] sm:$0x3] %vm23, 0.0
    %39 = vst.msk [vmem:[#allocation2 + $0x80] sm:$0xff] %vm21, 0.0
    %40 = vst.msk [vmem:[#allocation2 + $0x88] sm:$0x3] %vm23, 0.0
    %41 = vst.msk [vmem:[#allocation2 + $0x90] sm:$0xff] %vm21, 0.0
    %42 = vst.msk [vmem:[#allocation2 + $0x98] sm:$0x3] %vm23, 0.0
    %43 = vst.msk [vmem:[#allocation2 + $0xa0] sm:$0xff] %vm21, 0.0
    %44 = vst.msk [vmem:[#allocation2 + $0xa8] sm:$0x3] %vm23, 0.0
    %45 = vst.msk [vmem:[#allocation2 + $0xb0] sm:$0xff] %vm21, 0.0
    %46 = vst.msk [vmem:[#allocation2 + $0xb8] sm:$0x3] %vm23, 0.0
    %47 = vst.msk [vmem:[#allocation2 + $0xc0] sm:$0xff] %vm21, 0.0
    %48 = vst.msk [vmem:[#allocation2 + $0xc8] sm:$0x3] %vm23, 0.0
    %49 = vst.msk [vmem:[#allocation2 + $0xd0] sm:$0xff] %vm21, 0.0
    %50 = vst.msk [vmem:[#allocation2 + $0xd8] sm:$0x3] %vm23, 0.0
    %51 = vst.msk [vmem:[#allocation2 + $0xe0] sm:$0xff] %vm21, 0.0
    %52 = vst.msk [vmem:[#allocation2 + $0xe8] sm:$0x3] %vm23, 0.0
    %53 = vst.msk [vmem:[#allocation2 + $0xf0] sm:$0xff] %vm21, 0.0
    %54 = vst.msk [vmem:[#allocation2 + $0xf8] sm:$0x3] %vm23, 0.0
    %55 = vst.msk [vmem:[#allocation2 + $0x100] sm:$0xff] %vm21, 0.0
    %56 = vst.msk [vmem:[#allocation2 + $0x108] sm:$0x3] %vm23, 0.0
    %57 = vst.msk [vmem:[#allocation2 + $0x110] sm:$0xff] %vm21, 0.0
    %58 = vst.msk [vmem:[#allocation2 + $0x118] sm:$0x3] %vm23, 0.0
    %59 = vst.msk [vmem:[#allocation2 + $0x120] sm:$0xff] %vm21, 0.0
    %60 = vst.msk [vmem:[#allocation2 + $0x128] sm:$0x3] %vm23, 0.0
    %61 = vst.msk [vmem:[#allocation2 + $0x130] sm:$0xff] %vm21, 0.0
    %62 = vst.msk [vmem:[#allocation2 + $0x138] sm:$0x3] %vm23, 0.0
    %v63 = vld [vmem:[%s0] sm:$0xff]
    %v64 = vld [vmem:[%s0 + $0x8] sm:$0xff]
    %v65 = vld [vmem:[%s0 + $0x10] sm:$0xff]
    %v66 = vld [vmem:[%s0 + $0x18] sm:$0xff]
    %v67 = vld [vmem:[%s0 + $0x20] sm:$0xff]
    %v68 = vld [vmem:[%s0 + $0x28] sm:$0xff]
    %v69 = vld [vmem:[%s0 + $0x30] sm:$0xff]
    %v70 = vld [vmem:[%s0 + $0x38] sm:$0xff]
    %v71 = vld [vmem:[%s0 + $0x40] sm:$0xff]
    %v72 = vld [vmem:[%s0 + $0x48] sm:$0xff]
    %v73 = vld [vmem:[%s0 + $0x50] sm:$0xff]
    %v74 = vld [vmem:[%s0 + $0x58] sm:$0xff]
    %v75 = vld [vmem:[%s0 + $0x60] sm:$0xff]
    %v76 = vld [vmem:[%s0 + $0x68] sm:$0xff]
    %v77 = vld [vmem:[%s0 + $0x70] sm:$0xff]
    %v78 = vld [vmem:[%s0 + $0x78] sm:$0xff]
    %v79 = vld [vmem:[%s0 + $0x80] sm:$0xff]
    %v80 = vld [vmem:[%s0 + $0x88] sm:$0xff]
    %v81 = vld [vmem:[%s0 + $0x90] sm:$0xff]
    %v82 = vld [vmem:[%s0 + $0x98] sm:$0xff]
    %v83 = vld [vmem:[%s0 + $0xa0] sm:$0xff]
    %v84 = vld [vmem:[%s0 + $0xa8] sm:$0xff]
    %v85 = vld [vmem:[%s0 + $0xb0] sm:$0xff]
    %v86 = vld [vmem:[%s0 + $0xb8] sm:$0xff]
    %v87 = vld [vmem:[%s0 + $0xc0] sm:$0xff]
    %v88 = vld [vmem:[%s0 + $0xc8] sm:$0xff]
    %v89 = vld [vmem:[%s0 + $0xd0] sm:$0xff]
    %v90 = vld [vmem:[%s0 + $0xd8] sm:$0xff]
    %v91 = vld [vmem:[%s0 + $0xe0] sm:$0xff]
    %v92 = vld [vmem:[%s0 + $0xe8] sm:$0xff]
    %v93 = vld [vmem:[%s0 + $0xf0] sm:$0xff]
    %v94 = vld [vmem:[%s0 + $0xf8] sm:$0xff]
    %v95 = vld [vmem:[%s0 + $0x100] sm:$0xff]
    %v96 = vld [vmem:[%s0 + $0x108] sm:$0xff]
    %v97 = vld [vmem:[%s0 + $0x110] sm:$0xff]
    %v98 = vld [vmem:[%s0 + $0x118] sm:$0xff]
    %v99 = vld [vmem:[%s0 + $0x120] sm:$0xff]
    %v100 = vld [vmem:[%s0 + $0x128] sm:$0xff]
    %v101 = vld [vmem:[%s0 + $0x130] sm:$0xff]
    %v102 = vld [vmem:[%s0 + $0x138] sm:$0xff]
    %v103 = vld [vmem:[%s0 + $0x140] sm:$0xff]
    %v104 = vld [vmem:[%s0 + $0x148] sm:$0xff]
    %v105 = vld [vmem:[%s0 + $0x150] sm:$0xff]
    %v106 = vld [vmem:[%s0 + $0x158] sm:$0xff]
    %v107 = vld [vmem:[%s0 + $0x160] sm:$0xff]
    %v108 = vld [vmem:[%s0 + $0x168] sm:$0xff]
    %v109 = vld [vmem:[%s0 + $0x170] sm:$0xff]
    %v110 = vld [vmem:[%s0 + $0x178] sm:$0xff]
    %v111 = vld [vmem:[%s0 + $0x180] sm:$0xff]
    %v112 = vld [vmem:[%s0 + $0x188] sm:$0xff]
    %v113 = vld [vmem:[%s0 + $0x190] sm:$0xff]
    %v114 = vld [vmem:[%s0 + $0x198] sm:$0xff]
    %v115 = vld [vmem:[%s0 + $0x1a0] sm:$0xff]
    %v116 = vld [vmem:[%s0 + $0x1a8] sm:$0xff]
    %v117 = vld [vmem:[%s0 + $0x1b0] sm:$0xff]
    %v118 = vld [vmem:[%s0 + $0x1b8] sm:$0xff]
    %v119 = vld [vmem:[%s0 + $0x1c0] sm:$0xff]
    %v120 = vld [vmem:[%s0 + $0x1c8] sm:$0xff]
    %v121 = vld [vmem:[%s0 + $0x1d0] sm:$0xff]
    %v122 = vld [vmem:[%s0 + $0x1d8] sm:$0xff]
    %v123 = vld [vmem:[%s0 + $0x1e0] sm:$0xff]
    %v124 = vld [vmem:[%s0 + $0x1e8] sm:$0xff]
    %v125 = vld [vmem:[%s0 + $0x1f0] sm:$0xff]
    %v126 = vld [vmem:[%s0 + $0x1f8] sm:$0xff]
    %v191 = vrot.slane %v63, 2
    %v192 = vrot.slane %v63, 4
    %v193 = vrot.slane %v63, 6
    %v194 = vrot.slane %v64, 2
    %v195 = vrot.slane %v64, 4
    %v196 = vrot.slane %v64, 6
    %v197 = vrot.slane %v65, 2
    %v198 = vrot.slane %v65, 4
    %v199 = vrot.slane %v65, 6
    %v200 = vrot.slane %v66, 2
    %v201 = vrot.slane %v66, 4
    %v202 = vrot.slane %v66, 6
    %v203 = vrot.slane %v67, 2
    %v204 = vrot.slane %v67, 4
    %v205 = vrot.slane %v67, 6
    %v206 = vrot.slane %v68, 2
    %v207 = vrot.slane %v68, 4
    %v208 = vrot.slane %v68, 6
    %v209 = vrot.slane %v69, 2
    %v210 = vrot.slane %v69, 4
    %v211 = vrot.slane %v69, 6
    %v212 = vrot.slane %v70, 2
    %v213 = vrot.slane %v70, 4
    %v214 = vrot.slane %v70, 6
    %v215 = vrot.slane %v71, 2
    %v216 = vrot.slane %v71, 4
    %v217 = vrot.slane %v71, 6
    %v218 = vrot.slane %v72, 2
    %v219 = vrot.slane %v72, 4
    %v220 = vrot.slane %v72, 6
    %v221 = vrot.slane %v73, 2
    %v222 = vrot.slane %v73, 4
    %v223 = vrot.slane %v73, 6
    %v224 = vrot.slane %v74, 2
    %v225 = vrot.slane %v74, 4
    %v226 = vrot.slane %v74, 6
    %v227 = vrot.slane %v75, 2
    %v228 = vrot.slane %v75, 4
    %v229 = vrot.slane %v75, 6
    %v230 = vrot.slane %v76, 2
    %v231 = vrot.slane %v76, 4
    %v232 = vrot.slane %v76, 6
    %v233 = vrot.slane %v77, 2
    %v234 = vrot.slane %v77, 4
    %v235 = vrot.slane %v77, 6
    %v236 = vrot.slane %v78, 2
    %v237 = vrot.slane %v78, 4
    %v238 = vrot.slane %v78, 6
    %v239 = vrot.slane %v79, 2
    %v240 = vrot.slane %v79, 4
    %v241 = vrot.slane %v79, 6
    %v242 = vrot.slane %v80, 2
    %v243 = vrot.slane %v80, 4
    %v244 = vrot.slane %v80, 6
    %v245 = vrot.slane %v81, 2
    %v246 = vrot.slane %v81, 4
    %v247 = vrot.slane %v81, 6
    %v248 = vrot.slane %v82, 2
    %v249 = vrot.slane %v82, 4
    %v250 = vrot.slane %v82, 6
    %v251 = vrot.slane %v83, 2
    %v252 = vrot.slane %v83, 4
    %v253 = vrot.slane %v83, 6
    %v254 = vrot.slane %v84, 2
    %v255 = vrot.slane %v84, 4
    %v256 = vrot.slane %v84, 6
    %v257 = vrot.slane %v85, 2
    %v258 = vrot.slane %v85, 4
    %v259 = vrot.slane %v85, 6
    %v260 = vrot.slane %v86, 2
    %v261 = vrot.slane %v86, 4
    %v262 = vrot.slane %v86, 6
    %v263 = vrot.slane %v87, 2
    %v264 = vrot.slane %v87, 4
    %v265 = vrot.slane %v87, 6
    %v266 = vrot.slane %v88, 2
    %v267 = vrot.slane %v88, 4
    %v268 = vrot.slane %v88, 6
    %v269 = vrot.slane %v89, 2
    %v270 = vrot.slane %v89, 4
    %v271 = vrot.slane %v89, 6
    %v272 = vrot.slane %v90, 2
    %v273 = vrot.slane %v90, 4
    %v274 = vrot.slane %v90, 6
    %v275 = vrot.slane %v91, 2
    %v276 = vrot.slane %v91, 4
    %v277 = vrot.slane %v91, 6
    %v278 = vrot.slane %v92, 2
    %v279 = vrot.slane %v92, 4
    %v280 = vrot.slane %v92, 6
    %v281 = vrot.slane %v93, 2
    %v282 = vrot.slane %v93, 4
    %v283 = vrot.slane %v93, 6
    %v284 = vrot.slane %v94, 2
    %v285 = vrot.slane %v94, 4
    %v286 = vrot.slane %v94, 6
    %v287 = vrot.slane %v95, 2
    %v288 = vrot.slane %v95, 4
    %v289 = vrot.slane %v95, 6
    %v290 = vrot.slane %v96, 2
    %v291 = vrot.slane %v96, 4
    %v292 = vrot.slane %v96, 6
    %v293 = vrot.slane %v97, 2
    %v294 = vrot.slane %v97, 4
    %v295 = vrot.slane %v97, 6
    %v296 = vrot.slane %v98, 2
    %v297 = vrot.slane %v98, 4
    %v298 = vrot.slane %v98, 6
    %v299 = vrot.slane %v99, 2
    %v300 = vrot.slane %v99, 4
    %v301 = vrot.slane %v99, 6
    %v302 = vrot.slane %v100, 2
    %v303 = vrot.slane %v100, 4
    %v304 = vrot.slane %v100, 6
    %v305 = vrot.slane %v101, 2
    %v306 = vrot.slane %v101, 4
    %v307 = vrot.slane %v101, 6
    %v308 = vrot.slane %v102, 2
    %v309 = vrot.slane %v102, 4
    %v310 = vrot.slane %v102, 6
    %v311 = vrot.slane %v103, 2
    %v312 = vrot.slane %v103, 4
    %v313 = vrot.slane %v103, 6
    %v314 = vrot.slane %v104, 2
    %v315 = vrot.slane %v104, 4
    %v316 = vrot.slane %v104, 6
    %v317 = vrot.slane %v105, 2
    %v318 = vrot.slane %v105, 4
    %v319 = vrot.slane %v105, 6
    %v320 = vrot.slane %v106, 2
    %v321 = vrot.slane %v106, 4
    %v322 = vrot.slane %v106, 6
    %v323 = vrot.slane %v107, 2
    %v324 = vrot.slane %v107, 4
    %v325 = vrot.slane %v107, 6
    %v326 = vrot.slane %v108, 2
    %v327 = vrot.slane %v108, 4
    %v328 = vrot.slane %v108, 6
    %v329 = vrot.slane %v109, 2
    %v330 = vrot.slane %v109, 4
    %v331 = vrot.slane %v109, 6
    %v332 = vrot.slane %v110, 2
    %v333 = vrot.slane %v110, 4
    %v334 = vrot.slane %v110, 6
    %v335 = vrot.slane %v111, 2
    %v336 = vrot.slane %v111, 4
    %v337 = vrot.slane %v111, 6
    %v338 = vrot.slane %v112, 2
    %v339 = vrot.slane %v112, 4
    %v340 = vrot.slane %v112, 6
    %v341 = vrot.slane %v113, 2
    %v342 = vrot.slane %v113, 4
    %v343 = vrot.slane %v113, 6
    %v344 = vrot.slane %v114, 2
    %v345 = vrot.slane %v114, 4
    %v346 = vrot.slane %v114, 6
    %v347 = vrot.slane %v115, 2
    %v348 = vrot.slane %v115, 4
    %v349 = vrot.slane %v115, 6
    %v350 = vrot.slane %v116, 2
    %v351 = vrot.slane %v116, 4
    %v352 = vrot.slane %v116, 6
    %v353 = vrot.slane %v117, 2
    %v354 = vrot.slane %v117, 4
    %v355 = vrot.slane %v117, 6
    %v356 = vrot.slane %v118, 2
    %v357 = vrot.slane %v118, 4
    %v358 = vrot.slane %v118, 6
    %v359 = vrot.slane %v119, 2
    %v360 = vrot.slane %v119, 4
    %v361 = vrot.slane %v119, 6
    %v362 = vrot.slane %v120, 2
    %v363 = vrot.slane %v120, 4
    %v364 = vrot.slane %v120, 6
    %v365 = vrot.slane %v121, 2
    %v366 = vrot.slane %v121, 4
    %v367 = vrot.slane %v121, 6
    %v368 = vrot.slane %v122, 2
    %v369 = vrot.slane %v122, 4
    %v370 = vrot.slane %v122, 6
    %v371 = vrot.slane %v123, 2
    %v372 = vrot.slane %v123, 4
    %v373 = vrot.slane %v123, 6
    %v374 = vrot.slane %v124, 2
    %v375 = vrot.slane %v124, 4
    %v376 = vrot.slane %v124, 6
    %v377 = vrot.slane %v125, 2
    %v378 = vrot.slane %v125, 4
    %v379 = vrot.slane %v125, 6
    %v380 = vrot.slane %v126, 2
    %v381 = vrot.slane %v126, 4
    %v382 = vrot.slane %v126, 6
    %v575 = vsel %vm23, %v63, -inf
    %v576 = vrot.slane %v575, 4
    %v577 = vmax.f32 %v575, %v576
    %v578 = vrot.slane %v577, 2
    %v579 = vmax.f32 %v577, %v578
    %v580 = vrot.slane %v579, 1
    %v581 = vmax.f32 %v579, %v580
    %v582 = vsel %vm23, %v191, -inf
    %v583 = vrot.slane %v582, 4
    %v584 = vmax.f32 %v582, %v583
    %v585 = vrot.slane %v584, 2
    %v586 = vmax.f32 %v584, %v585
    %v587 = vrot.slane %v586, 1
    %v588 = vmax.f32 %v586, %v587
    %v589 = vsel %vm23, %v192, -inf
    %v590 = vrot.slane %v589, 4
    %v591 = vmax.f32 %v589, %v590
    %v592 = vrot.slane %v591, 2
    %v593 = vmax.f32 %v591, %v592
    %v594 = vrot.slane %v593, 1
    %v595 = vmax.f32 %v593, %v594
    %v596 = vsel %vm23, %v193, -inf
    %v597 = vrot.slane %v596, 4
    %v598 = vmax.f32 %v596, %v597
    %v599 = vrot.slane %v598, 2
    %v600 = vmax.f32 %v598, %v599
    %v601 = vrot.slane %v600, 1
    %v602 = vmax.f32 %v600, %v601
    %v603 = vsel %vm23, %v64, -inf
    %v604 = vrot.slane %v603, 4
    %v605 = vmax.f32 %v603, %v604
    %v606 = vrot.slane %v605, 2
    %v607 = vmax.f32 %v605, %v606
    %v608 = vrot.slane %v607, 1
    %v609 = vmax.f32 %v607, %v608
    %v610 = vsel %vm23, %v194, -inf
    %v611 = vrot.slane %v610, 4
    %v612 = vmax.f32 %v610, %v611
    %v613 = vrot.slane %v612, 2
    %v614 = vmax.f32 %v612, %v613
    %v615 = vrot.slane %v614, 1
    %v616 = vmax.f32 %v614, %v615
    %v617 = vsel %vm23, %v195, -inf
    %v618 = vrot.slane %v617, 4
    %v619 = vmax.f32 %v617, %v618
    %v620 = vrot.slane %v619, 2
    %v621 = vmax.f32 %v619, %v620
    %v622 = vrot.slane %v621, 1
    %v623 = vmax.f32 %v621, %v622
    %v624 = vsel %vm23, %v196, -inf
    %v625 = vrot.slane %v624, 4
    %v626 = vmax.f32 %v624, %v625
    %v627 = vrot.slane %v626, 2
    %v628 = vmax.f32 %v626, %v627
    %v629 = vrot.slane %v628, 1
    %v630 = vmax.f32 %v628, %v629
    %v631 = vsel %vm23, %v65, -inf
    %v632 = vrot.slane %v631, 4
    %v633 = vmax.f32 %v631, %v632
    %v634 = vrot.slane %v633, 2
    %v635 = vmax.f32 %v633, %v634
    %v636 = vrot.slane %v635, 1
    %v637 = vmax.f32 %v635, %v636
    %v638 = vsel %vm23, %v197, -inf
    %v639 = vrot.slane %v638, 4
    %v640 = vmax.f32 %v638, %v639
    %v641 = vrot.slane %v640, 2
    %v642 = vmax.f32 %v640, %v641
    %v643 = vrot.slane %v642, 1
    %v644 = vmax.f32 %v642, %v643
    %v645 = vsel %vm23, %v198, -inf
    %v646 = vrot.slane %v645, 4
    %v647 = vmax.f32 %v645, %v646
    %v648 = vrot.slane %v647, 2
    %v649 = vmax.f32 %v647, %v648
    %v650 = vrot.slane %v649, 1
    %v651 = vmax.f32 %v649, %v650
    %v652 = vsel %vm23, %v199, -inf
    %v653 = vrot.slane %v652, 4
    %v654 = vmax.f32 %v652, %v653
    %v655 = vrot.slane %v654, 2
    %v656 = vmax.f32 %v654, %v655
    %v657 = vrot.slane %v656, 1
    %v658 = vmax.f32 %v656, %v657
    %v659 = vsel %vm23, %v66, -inf
    %v660 = vrot.slane %v659, 4
    %v661 = vmax.f32 %v659, %v660
    %v662 = vrot.slane %v661, 2
    %v663 = vmax.f32 %v661, %v662
    %v664 = vrot.slane %v663, 1
    %v665 = vmax.f32 %v663, %v664
    %v666 = vsel %vm23, %v200, -inf
    %v667 = vrot.slane %v666, 4
    %v668 = vmax.f32 %v666, %v667
    %v669 = vrot.slane %v668, 2
    %v670 = vmax.f32 %v668, %v669
    %v671 = vrot.slane %v670, 1
    %v672 = vmax.f32 %v670, %v671
    %v673 = vsel %vm23, %v201, -inf
    %v674 = vrot.slane %v673, 4
    %v675 = vmax.f32 %v673, %v674
    %v676 = vrot.slane %v675, 2
    %v677 = vmax.f32 %v675, %v676
    %v678 = vrot.slane %v677, 1
    %v679 = vmax.f32 %v677, %v678
    %v680 = vsel %vm23, %v202, -inf
    %v681 = vrot.slane %v680, 4
    %v682 = vmax.f32 %v680, %v681
    %v683 = vrot.slane %v682, 2
    %v684 = vmax.f32 %v682, %v683
    %v685 = vrot.slane %v684, 1
    %v686 = vmax.f32 %v684, %v685
    %v687 = vsel %vm23, %v67, -inf
    %v688 = vrot.slane %v687, 4
    %v689 = vmax.f32 %v687, %v688
    %v690 = vrot.slane %v689, 2
    %v691 = vmax.f32 %v689, %v690
    %v692 = vrot.slane %v691, 1
    %v693 = vmax.f32 %v691, %v692
    %v694 = vsel %vm23, %v203, -inf
    %v695 = vrot.slane %v694, 4
    %v696 = vmax.f32 %v694, %v695
    %v697 = vrot.slane %v696, 2
    %v698 = vmax.f32 %v696, %v697
    %v699 = vrot.slane %v698, 1
    %v700 = vmax.f32 %v698, %v699
    %v701 = vsel %vm23, %v204, -inf
    %v702 = vrot.slane %v701, 4
    %v703 = vmax.f32 %v701, %v702
    %v704 = vrot.slane %v703, 2
    %v705 = vmax.f32 %v703, %v704
    %v706 = vrot.slane %v705, 1
    %v707 = vmax.f32 %v705, %v706
    %v708 = vsel %vm23, %v205, -inf
    %v709 = vrot.slane %v708, 4
    %v710 = vmax.f32 %v708, %v709
    %v711 = vrot.slane %v710, 2
    %v712 = vmax.f32 %v710, %v711
    %v713 = vrot.slane %v712, 1
    %v714 = vmax.f32 %v712, %v713
    %v715 = vsel %vm23, %v68, -inf
    %v716 = vrot.slane %v715, 4
    %v717 = vmax.f32 %v715, %v716
    %v718 = vrot.slane %v717, 2
    %v719 = vmax.f32 %v717, %v718
    %v720 = vrot.slane %v719, 1
    %v721 = vmax.f32 %v719, %v720
    %v722 = vsel %vm23, %v206, -inf
    %v723 = vrot.slane %v722, 4
    %v724 = vmax.f32 %v722, %v723
    %v725 = vrot.slane %v724, 2
    %v726 = vmax.f32 %v724, %v725
    %v727 = vrot.slane %v726, 1
    %v728 = vmax.f32 %v726, %v727
    %v729 = vsel %vm23, %v207, -inf
    %v730 = vrot.slane %v729, 4
    %v731 = vmax.f32 %v729, %v730
    %v732 = vrot.slane %v731, 2
    %v733 = vmax.f32 %v731, %v732
    %v734 = vrot.slane %v733, 1
    %v735 = vmax.f32 %v733, %v734
    %v736 = vsel %vm23, %v208, -inf
    %v737 = vrot.slane %v736, 4
    %v738 = vmax.f32 %v736, %v737
    %v739 = vrot.slane %v738, 2
    %v740 = vmax.f32 %v738, %v739
    %v741 = vrot.slane %v740, 1
    %v742 = vmax.f32 %v740, %v741
    %v743 = vsel %vm23, %v69, -inf
    %v744 = vrot.slane %v743, 4
    %v745 = vmax.f32 %v743, %v744
    %v746 = vrot.slane %v745, 2
    %v747 = vmax.f32 %v745, %v746
    %v748 = vrot.slane %v747, 1
    %v749 = vmax.f32 %v747, %v748
    %v750 = vsel %vm23, %v209, -inf
    %v751 = vrot.slane %v750, 4
    %v752 = vmax.f32 %v750, %v751
    %v753 = vrot.slane %v752, 2
    %v754 = vmax.f32 %v752, %v753
    %v755 = vrot.slane %v754, 1
    %v756 = vmax.f32 %v754, %v755
    %v757 = vsel %vm23, %v210, -inf
    %v758 = vrot.slane %v757, 4
    %v759 = vmax.f32 %v757, %v758
    %v760 = vrot.slane %v759, 2
    %v761 = vmax.f32 %v759, %v760
    %v762 = vrot.slane %v761, 1
    %v763 = vmax.f32 %v761, %v762
    %v764 = vsel %vm23, %v211, -inf
    %v765 = vrot.slane %v764, 4
    %v766 = vmax.f32 %v764, %v765
    %v767 = vrot.slane %v766, 2
    %v768 = vmax.f32 %v766, %v767
    %v769 = vrot.slane %v768, 1
    %v770 = vmax.f32 %v768, %v769
    %v771 = vsel %vm23, %v70, -inf
    %v772 = vrot.slane %v771, 4
    %v773 = vmax.f32 %v771, %v772
    %v774 = vrot.slane %v773, 2
    %v775 = vmax.f32 %v773, %v774
    %v776 = vrot.slane %v775, 1
    %v777 = vmax.f32 %v775, %v776
    %v778 = vsel %vm23, %v212, -inf
    %v779 = vrot.slane %v778, 4
    %v780 = vmax.f32 %v778, %v779
    %v781 = vrot.slane %v780, 2
    %v782 = vmax.f32 %v780, %v781
    %v783 = vrot.slane %v782, 1
    %v784 = vmax.f32 %v782, %v783
    %v785 = vsel %vm23, %v213, -inf
    %v786 = vrot.slane %v785, 4
    %v787 = vmax.f32 %v785, %v786
    %v788 = vrot.slane %v787, 2
    %v789 = vmax.f32 %v787, %v788
    %v790 = vrot.slane %v789, 1
    %v791 = vmax.f32 %v789, %v790
    %v792 = vsel %vm23, %v214, -inf
    %v793 = vrot.slane %v792, 4
    %v794 = vmax.f32 %v792, %v793
    %v795 = vrot.slane %v794, 2
    %v796 = vmax.f32 %v794, %v795
    %v797 = vrot.slane %v796, 1
    %v798 = vmax.f32 %v796, %v797
    %v799 = vsel %vm23, %v71, -inf
    %v800 = vrot.slane %v799, 4
    %v801 = vmax.f32 %v799, %v800
    %v802 = vrot.slane %v801, 2
    %v803 = vmax.f32 %v801, %v802
    %v804 = vrot.slane %v803, 1
    %v805 = vmax.f32 %v803, %v804
    %v806 = vsel %vm23, %v215, -inf
    %v807 = vrot.slane %v806, 4
    %v808 = vmax.f32 %v806, %v807
    %v809 = vrot.slane %v808, 2
    %v810 = vmax.f32 %v808, %v809
    %v811 = vrot.slane %v810, 1
    %v812 = vmax.f32 %v810, %v811
    %v813 = vsel %vm23, %v216, -inf
    %v814 = vrot.slane %v813, 4
    %v815 = vmax.f32 %v813, %v814
    %v816 = vrot.slane %v815, 2
    %v817 = vmax.f32 %v815, %v816
    %v818 = vrot.slane %v817, 1
    %v819 = vmax.f32 %v817, %v818
    %v820 = vsel %vm23, %v217, -inf
    %v821 = vrot.slane %v820, 4
    %v822 = vmax.f32 %v820, %v821
    %v823 = vrot.slane %v822, 2
    %v824 = vmax.f32 %v822, %v823
    %v825 = vrot.slane %v824, 1
    %v826 = vmax.f32 %v824, %v825
    %v827 = vsel %vm23, %v72, -inf
    %v828 = vrot.slane %v827, 4
    %v829 = vmax.f32 %v827, %v828
    %v830 = vrot.slane %v829, 2
    %v831 = vmax.f32 %v829, %v830
    %v832 = vrot.slane %v831, 1
    %v833 = vmax.f32 %v831, %v832
    %v834 = vsel %vm23, %v218, -inf
    %v835 = vrot.slane %v834, 4
    %v836 = vmax.f32 %v834, %v835
    %v837 = vrot.slane %v836, 2
    %v838 = vmax.f32 %v836, %v837
    %v839 = vrot.slane %v838, 1
    %v840 = vmax.f32 %v838, %v839
    %v841 = vsel %vm23, %v219, -inf
    %v842 = vrot.slane %v841, 4
    %v843 = vmax.f32 %v841, %v842
    %v844 = vrot.slane %v843, 2
    %v845 = vmax.f32 %v843, %v844
    %v846 = vrot.slane %v845, 1
    %v847 = vmax.f32 %v845, %v846
    %v848 = vsel %vm23, %v220, -inf
    %v849 = vrot.slane %v848, 4
    %v850 = vmax.f32 %v848, %v849
    %v851 = vrot.slane %v850, 2
    %v852 = vmax.f32 %v850, %v851
    %v853 = vrot.slane %v852, 1
    %v854 = vmax.f32 %v852, %v853
    %v855 = vsel %vm23, %v73, -inf
    %v856 = vrot.slane %v855, 4
    %v857 = vmax.f32 %v855, %v856
    %v858 = vrot.slane %v857, 2
    %v859 = vmax.f32 %v857, %v858
    %v860 = vrot.slane %v859, 1
    %v861 = vmax.f32 %v859, %v860
    %v862 = vsel %vm23, %v221, -inf
    %v863 = vrot.slane %v862, 4
    %v864 = vmax.f32 %v862, %v863
    %v865 = vrot.slane %v864, 2
    %v866 = vmax.f32 %v864, %v865
    %v867 = vrot.slane %v866, 1
    %v868 = vmax.f32 %v866, %v867
    %v869 = vsel %vm23, %v222, -inf
    %v870 = vrot.slane %v869, 4
    %v871 = vmax.f32 %v869, %v870
    %v872 = vrot.slane %v871, 2
    %v873 = vmax.f32 %v871, %v872
    %v874 = vrot.slane %v873, 1
    %v875 = vmax.f32 %v873, %v874
    %v876 = vsel %vm23, %v223, -inf
    %v877 = vrot.slane %v876, 4
    %v878 = vmax.f32 %v876, %v877
    %v879 = vrot.slane %v878, 2
    %v880 = vmax.f32 %v878, %v879
    %v881 = vrot.slane %v880, 1
    %v882 = vmax.f32 %v880, %v881
    %v883 = vsel %vm23, %v74, -inf
    %v884 = vrot.slane %v883, 4
    %v885 = vmax.f32 %v883, %v884
    %v886 = vrot.slane %v885, 2
    %v887 = vmax.f32 %v885, %v886
    %v888 = vrot.slane %v887, 1
    %v889 = vmax.f32 %v887, %v888
    %v890 = vsel %vm23, %v224, -inf
    %v891 = vrot.slane %v890, 4
    %v892 = vmax.f32 %v890, %v891
    %v893 = vrot.slane %v892, 2
    %v894 = vmax.f32 %v892, %v893
    %v895 = vrot.slane %v894, 1
    %v896 = vmax.f32 %v894, %v895
    %v897 = vsel %vm23, %v225, -inf
    %v898 = vrot.slane %v897, 4
    %v899 = vmax.f32 %v897, %v898
    %v900 = vrot.slane %v899, 2
    %v901 = vmax.f32 %v899, %v900
    %v902 = vrot.slane %v901, 1
    %v903 = vmax.f32 %v901, %v902
    %v904 = vsel %vm23, %v226, -inf
    %v905 = vrot.slane %v904, 4
    %v906 = vmax.f32 %v904, %v905
    %v907 = vrot.slane %v906, 2
    %v908 = vmax.f32 %v906, %v907
    %v909 = vrot.slane %v908, 1
    %v910 = vmax.f32 %v908, %v909
    %v911 = vsel %vm23, %v75, -inf
    %v912 = vrot.slane %v911, 4
    %v913 = vmax.f32 %v911, %v912
    %v914 = vrot.slane %v913, 2
    %v915 = vmax.f32 %v913, %v914
    %v916 = vrot.slane %v915, 1
    %v917 = vmax.f32 %v915, %v916
    %v918 = vsel %vm23, %v227, -inf
    %v919 = vrot.slane %v918, 4
    %v920 = vmax.f32 %v918, %v919
    %v921 = vrot.slane %v920, 2
    %v922 = vmax.f32 %v920, %v921
    %v923 = vrot.slane %v922, 1
    %v924 = vmax.f32 %v922, %v923
    %v925 = vsel %vm23, %v228, -inf
    %v926 = vrot.slane %v925, 4
    %v927 = vmax.f32 %v925, %v926
    %v928 = vrot.slane %v927, 2
    %v929 = vmax.f32 %v927, %v928
    %v930 = vrot.slane %v929, 1
    %v931 = vmax.f32 %v929, %v930
    %v932 = vsel %vm23, %v229, -inf
    %v933 = vrot.slane %v932, 4
    %v934 = vmax.f32 %v932, %v933
    %v935 = vrot.slane %v934, 2
    %v936 = vmax.f32 %v934, %v935
    %v937 = vrot.slane %v936, 1
    %v938 = vmax.f32 %v936, %v937
    %v939 = vsel %vm23, %v76, -inf
    %v940 = vrot.slane %v939, 4
    %v941 = vmax.f32 %v939, %v940
    %v942 = vrot.slane %v941, 2
    %v943 = vmax.f32 %v941, %v942
    %v944 = vrot.slane %v943, 1
    %v945 = vmax.f32 %v943, %v944
    %v946 = vsel %vm23, %v230, -inf
    %v947 = vrot.slane %v946, 4
    %v948 = vmax.f32 %v946, %v947
    %v949 = vrot.slane %v948, 2
    %v950 = vmax.f32 %v948, %v949
    %v951 = vrot.slane %v950, 1
    %v952 = vmax.f32 %v950, %v951
    %v953 = vsel %vm23, %v231, -inf
    %v954 = vrot.slane %v953, 4
    %v955 = vmax.f32 %v953, %v954
    %v956 = vrot.slane %v955, 2
    %v957 = vmax.f32 %v955, %v956
    %v958 = vrot.slane %v957, 1
    %v959 = vmax.f32 %v957, %v958
    %v960 = vsel %vm23, %v232, -inf
    %v961 = vrot.slane %v960, 4
    %v962 = vmax.f32 %v960, %v961
    %v963 = vrot.slane %v962, 2
    %v964 = vmax.f32 %v962, %v963
    %v965 = vrot.slane %v964, 1
    %v966 = vmax.f32 %v964, %v965
    %v967 = vsel %vm23, %v77, -inf
    %v968 = vrot.slane %v967, 4
    %v969 = vmax.f32 %v967, %v968
    %v970 = vrot.slane %v969, 2
    %v971 = vmax.f32 %v969, %v970
    %v972 = vrot.slane %v971, 1
    %v973 = vmax.f32 %v971, %v972
    %v974 = vsel %vm23, %v233, -inf
    %v975 = vrot.slane %v974, 4
    %v976 = vmax.f32 %v974, %v975
    %v977 = vrot.slane %v976, 2
    %v978 = vmax.f32 %v976, %v977
    %v979 = vrot.slane %v978, 1
    %v980 = vmax.f32 %v978, %v979
    %v981 = vsel %vm23, %v234, -inf
    %v982 = vrot.slane %v981, 4
    %v983 = vmax.f32 %v981, %v982
    %v984 = vrot.slane %v983, 2
    %v985 = vmax.f32 %v983, %v984
    %v986 = vrot.slane %v985, 1
    %v987 = vmax.f32 %v985, %v986
    %v988 = vsel %vm23, %v235, -inf
    %v989 = vrot.slane %v988, 4
    %v990 = vmax.f32 %v988, %v989
    %v991 = vrot.slane %v990, 2
    %v992 = vmax.f32 %v990, %v991
    %v993 = vrot.slane %v992, 1
    %v994 = vmax.f32 %v992, %v993
    %v995 = vsel %vm23, %v78, -inf
    %v996 = vrot.slane %v995, 4
    %v997 = vmax.f32 %v995, %v996
    %v998 = vrot.slane %v997, 2
    %v999 = vmax.f32 %v997, %v998
    %v1000 = vrot.slane %v999, 1
    %v1001 = vmax.f32 %v999, %v1000
    %v1002 = vsel %vm23, %v236, -inf
    %v1003 = vrot.slane %v1002, 4
    %v1004 = vmax.f32 %v1002, %v1003
    %v1005 = vrot.slane %v1004, 2
    %v1006 = vmax.f32 %v1004, %v1005
    %v1007 = vrot.slane %v1006, 1
    %v1008 = vmax.f32 %v1006, %v1007
    %v1009 = vsel %vm23, %v237, -inf
    %v1010 = vrot.slane %v1009, 4
    %v1011 = vmax.f32 %v1009, %v1010
    %v1012 = vrot.slane %v1011, 2
    %v1013 = vmax.f32 %v1011, %v1012
    %v1014 = vrot.slane %v1013, 1
    %v1015 = vmax.f32 %v1013, %v1014
    %v1016 = vsel %vm23, %v238, -inf
    %v1017 = vrot.slane %v1016, 4
    %v1018 = vmax.f32 %v1016, %v1017
    %v1019 = vrot.slane %v1018, 2
    %v1020 = vmax.f32 %v1018, %v1019
    %v1021 = vrot.slane %v1020, 1
    %v1022 = vmax.f32 %v1020, %v1021
    %v1023 = vsel %vm23, %v79, -inf
    %v1024 = vrot.slane %v1023, 4
    %v1025 = vmax.f32 %v1023, %v1024
    %v1026 = vrot.slane %v1025, 2
    %v1027 = vmax.f32 %v1025, %v1026
    %v1028 = vrot.slane %v1027, 1
    %v1029 = vmax.f32 %v1027, %v1028
    %v1030 = vsel %vm23, %v239, -inf
    %v1031 = vrot.slane %v1030, 4
    %v1032 = vmax.f32 %v1030, %v1031
    %v1033 = vrot.slane %v1032, 2
    %v1034 = vmax.f32 %v1032, %v1033
    %v1035 = vrot.slane %v1034, 1
    %v1036 = vmax.f32 %v1034, %v1035
    %v1037 = vsel %vm23, %v240, -inf
    %v1038 = vrot.slane %v1037, 4
    %v1039 = vmax.f32 %v1037, %v1038
    %v1040 = vrot.slane %v1039, 2
    %v1041 = vmax.f32 %v1039, %v1040
    %v1042 = vrot.slane %v1041, 1
    %v1043 = vmax.f32 %v1041, %v1042
    %v1044 = vsel %vm23, %v241, -inf
    %v1045 = vrot.slane %v1044, 4
    %v1046 = vmax.f32 %v1044, %v1045
    %v1047 = vrot.slane %v1046, 2
    %v1048 = vmax.f32 %v1046, %v1047
    %v1049 = vrot.slane %v1048, 1
    %v1050 = vmax.f32 %v1048, %v1049
    %v1051 = vsel %vm23, %v80, -inf
    %v1052 = vrot.slane %v1051, 4
    %v1053 = vmax.f32 %v1051, %v1052
    %v1054 = vrot.slane %v1053, 2
    %v1055 = vmax.f32 %v1053, %v1054
    %v1056 = vrot.slane %v1055, 1
    %v1057 = vmax.f32 %v1055, %v1056
    %v1058 = vsel %vm23, %v242, -inf
    %v1059 = vrot.slane %v1058, 4
    %v1060 = vmax.f32 %v1058, %v1059
    %v1061 = vrot.slane %v1060, 2
    %v1062 = vmax.f32 %v1060, %v1061
    %v1063 = vrot.slane %v1062, 1
    %v1064 = vmax.f32 %v1062, %v1063
    %v1065 = vsel %vm23, %v243, -inf
    %v1066 = vrot.slane %v1065, 4
    %v1067 = vmax.f32 %v1065, %v1066
    %v1068 = vrot.slane %v1067, 2
    %v1069 = vmax.f32 %v1067, %v1068
    %v1070 = vrot.slane %v1069, 1
    %v1071 = vmax.f32 %v1069, %v1070
    %v1072 = vsel %vm23, %v244, -inf
    %v1073 = vrot.slane %v1072, 4
    %v1074 = vmax.f32 %v1072, %v1073
    %v1075 = vrot.slane %v1074, 2
    %v1076 = vmax.f32 %v1074, %v1075
    %v1077 = vrot.slane %v1076, 1
    %v1078 = vmax.f32 %v1076, %v1077
    %v1079 = vsel %vm23, %v81, -inf
    %v1080 = vrot.slane %v1079, 4
    %v1081 = vmax.f32 %v1079, %v1080
    %v1082 = vrot.slane %v1081, 2
    %v1083 = vmax.f32 %v1081, %v1082
    %v1084 = vrot.slane %v1083, 1
    %v1085 = vmax.f32 %v1083, %v1084
    %v1086 = vsel %vm23, %v245, -inf
    %v1087 = vrot.slane %v1086, 4
    %v1088 = vmax.f32 %v1086, %v1087
    %v1089 = vrot.slane %v1088, 2
    %v1090 = vmax.f32 %v1088, %v1089
    %v1091 = vrot.slane %v1090, 1
    %v1092 = vmax.f32 %v1090, %v1091
    %v1093 = vsel %vm23, %v246, -inf
    %v1094 = vrot.slane %v1093, 4
    %v1095 = vmax.f32 %v1093, %v1094
    %v1096 = vrot.slane %v1095, 2
    %v1097 = vmax.f32 %v1095, %v1096
    %v1098 = vrot.slane %v1097, 1
    %v1099 = vmax.f32 %v1097, %v1098
    %v1100 = vsel %vm23, %v247, -inf
    %v1101 = vrot.slane %v1100, 4
    %v1102 = vmax.f32 %v1100, %v1101
    %v1103 = vrot.slane %v1102, 2
    %v1104 = vmax.f32 %v1102, %v1103
    %v1105 = vrot.slane %v1104, 1
    %v1106 = vmax.f32 %v1104, %v1105
    %v1107 = vsel %vm23, %v82, -inf
    %v1108 = vrot.slane %v1107, 4
    %v1109 = vmax.f32 %v1107, %v1108
    %v1110 = vrot.slane %v1109, 2
    %v1111 = vmax.f32 %v1109, %v1110
    %v1112 = vrot.slane %v1111, 1
    %v1113 = vmax.f32 %v1111, %v1112
    %v1114 = vsel %vm23, %v248, -inf
    %v1115 = vrot.slane %v1114, 4
    %v1116 = vmax.f32 %v1114, %v1115
    %v1117 = vrot.slane %v1116, 2
    %v1118 = vmax.f32 %v1116, %v1117
    %v1119 = vrot.slane %v1118, 1
    %v1120 = vmax.f32 %v1118, %v1119
    %v1121 = vsel %vm23, %v249, -inf
    %v1122 = vrot.slane %v1121, 4
    %v1123 = vmax.f32 %v1121, %v1122
    %v1124 = vrot.slane %v1123, 2
    %v1125 = vmax.f32 %v1123, %v1124
    %v1126 = vrot.slane %v1125, 1
    %v1127 = vmax.f32 %v1125, %v1126
    %v1128 = vsel %vm23, %v250, -inf
    %v1129 = vrot.slane %v1128, 4
    %v1130 = vmax.f32 %v1128, %v1129
    %v1131 = vrot.slane %v1130, 2
    %v1132 = vmax.f32 %v1130, %v1131
    %v1133 = vrot.slane %v1132, 1
    %v1134 = vmax.f32 %v1132, %v1133
    %v1135 = vsel %vm23, %v83, -inf
    %v1136 = vrot.slane %v1135, 4
    %v1137 = vmax.f32 %v1135, %v1136
    %v1138 = vrot.slane %v1137, 2
    %v1139 = vmax.f32 %v1137, %v1138
    %v1140 = vrot.slane %v1139, 1
    %v1141 = vmax.f32 %v1139, %v1140
    %v1142 = vsel %vm23, %v251, -inf
    %v1143 = vrot.slane %v1142, 4
    %v1144 = vmax.f32 %v1142, %v1143
    %v1145 = vrot.slane %v1144, 2
    %v1146 = vmax.f32 %v1144, %v1145
    %v1147 = vrot.slane %v1146, 1
    %v1148 = vmax.f32 %v1146, %v1147
    %v1149 = vsel %vm23, %v252, -inf
    %v1150 = vrot.slane %v1149, 4
    %v1151 = vmax.f32 %v1149, %v1150
    %v1152 = vrot.slane %v1151, 2
    %v1153 = vmax.f32 %v1151, %v1152
    %v1154 = vrot.slane %v1153, 1
    %v1155 = vmax.f32 %v1153, %v1154
    %v1156 = vsel %vm23, %v253, -inf
    %v1157 = vrot.slane %v1156, 4
    %v1158 = vmax.f32 %v1156, %v1157
    %v1159 = vrot.slane %v1158, 2
    %v1160 = vmax.f32 %v1158, %v1159
    %v1161 = vrot.slane %v1160, 1
    %v1162 = vmax.f32 %v1160, %v1161
    %v1163 = vsel %vm23, %v84, -inf
    %v1164 = vrot.slane %v1163, 4
    %v1165 = vmax.f32 %v1163, %v1164
    %v1166 = vrot.slane %v1165, 2
    %v1167 = vmax.f32 %v1165, %v1166
    %v1168 = vrot.slane %v1167, 1
    %v1169 = vmax.f32 %v1167, %v1168
    %v1170 = vsel %vm23, %v254, -inf
    %v1171 = vrot.slane %v1170, 4
    %v1172 = vmax.f32 %v1170, %v1171
    %v1173 = vrot.slane %v1172, 2
    %v1174 = vmax.f32 %v1172, %v1173
    %v1175 = vrot.slane %v1174, 1
    %v1176 = vmax.f32 %v1174, %v1175
    %v1177 = vsel %vm23, %v255, -inf
    %v1178 = vrot.slane %v1177, 4
    %v1179 = vmax.f32 %v1177, %v1178
    %v1180 = vrot.slane %v1179, 2
    %v1181 = vmax.f32 %v1179, %v1180
    %v1182 = vrot.slane %v1181, 1
    %v1183 = vmax.f32 %v1181, %v1182
    %v1184 = vsel %vm23, %v256, -inf
    %v1185 = vrot.slane %v1184, 4
    %v1186 = vmax.f32 %v1184, %v1185
    %v1187 = vrot.slane %v1186, 2
    %v1188 = vmax.f32 %v1186, %v1187
    %v1189 = vrot.slane %v1188, 1
    %v1190 = vmax.f32 %v1188, %v1189
    %v1191 = vsel %vm23, %v85, -inf
    %v1192 = vrot.slane %v1191, 4
    %v1193 = vmax.f32 %v1191, %v1192
    %v1194 = vrot.slane %v1193, 2
    %v1195 = vmax.f32 %v1193, %v1194
    %v1196 = vrot.slane %v1195, 1
    %v1197 = vmax.f32 %v1195, %v1196
    %v1198 = vsel %vm23, %v257, -inf
    %v1199 = vrot.slane %v1198, 4
    %v1200 = vmax.f32 %v1198, %v1199
    %v1201 = vrot.slane %v1200, 2
    %v1202 = vmax.f32 %v1200, %v1201
    %v1203 = vrot.slane %v1202, 1
    %v1204 = vmax.f32 %v1202, %v1203
    %v1205 = vsel %vm23, %v258, -inf
    %v1206 = vrot.slane %v1205, 4
    %v1207 = vmax.f32 %v1205, %v1206
    %v1208 = vrot.slane %v1207, 2
    %v1209 = vmax.f32 %v1207, %v1208
    %v1210 = vrot.slane %v1209, 1
    %v1211 = vmax.f32 %v1209, %v1210
    %v1212 = vsel %vm23, %v259, -inf
    %v1213 = vrot.slane %v1212, 4
    %v1214 = vmax.f32 %v1212, %v1213
    %v1215 = vrot.slane %v1214, 2
    %v1216 = vmax.f32 %v1214, %v1215
    %v1217 = vrot.slane %v1216, 1
    %v1218 = vmax.f32 %v1216, %v1217
    %v1219 = vsel %vm23, %v86, -inf
    %v1220 = vrot.slane %v1219, 4
    %v1221 = vmax.f32 %v1219, %v1220
    %v1222 = vrot.slane %v1221, 2
    %v1223 = vmax.f32 %v1221, %v1222
    %v1224 = vrot.slane %v1223, 1
    %v1225 = vmax.f32 %v1223, %v1224
    %v1226 = vsel %vm23, %v260, -inf
    %v1227 = vrot.slane %v1226, 4
    %v1228 = vmax.f32 %v1226, %v1227
    %v1229 = vrot.slane %v1228, 2
    %v1230 = vmax.f32 %v1228, %v1229
    %v1231 = vrot.slane %v1230, 1
    %v1232 = vmax.f32 %v1230, %v1231
    %v1233 = vsel %vm23, %v261, -inf
    %v1234 = vrot.slane %v1233, 4
    %v1235 = vmax.f32 %v1233, %v1234
    %v1236 = vrot.slane %v1235, 2
    %v1237 = vmax.f32 %v1235, %v1236
    %v1238 = vrot.slane %v1237, 1
    %v1239 = vmax.f32 %v1237, %v1238
    %v1240 = vsel %vm23, %v262, -inf
    %v1241 = vrot.slane %v1240, 4
    %v1242 = vmax.f32 %v1240, %v1241
    %v1243 = vrot.slane %v1242, 2
    %v1244 = vmax.f32 %v1242, %v1243
    %v1245 = vrot.slane %v1244, 1
    %v1246 = vmax.f32 %v1244, %v1245
    %v1247 = vsel %vm23, %v87, -inf
    %v1248 = vrot.slane %v1247, 4
    %v1249 = vmax.f32 %v1247, %v1248
    %v1250 = vrot.slane %v1249, 2
    %v1251 = vmax.f32 %v1249, %v1250
    %v1252 = vrot.slane %v1251, 1
    %v1253 = vmax.f32 %v1251, %v1252
    %v1254 = vsel %vm23, %v263, -inf
    %v1255 = vrot.slane %v1254, 4
    %v1256 = vmax.f32 %v1254, %v1255
    %v1257 = vrot.slane %v1256, 2
    %v1258 = vmax.f32 %v1256, %v1257
    %v1259 = vrot.slane %v1258, 1
    %v1260 = vmax.f32 %v1258, %v1259
    %v1261 = vsel %vm23, %v264, -inf
    %v1262 = vrot.slane %v1261, 4
    %v1263 = vmax.f32 %v1261, %v1262
    %v1264 = vrot.slane %v1263, 2
    %v1265 = vmax.f32 %v1263, %v1264
    %v1266 = vrot.slane %v1265, 1
    %v1267 = vmax.f32 %v1265, %v1266
    %v1268 = vsel %vm23, %v265, -inf
    %v1269 = vrot.slane %v1268, 4
    %v1270 = vmax.f32 %v1268, %v1269
    %v1271 = vrot.slane %v1270, 2
    %v1272 = vmax.f32 %v1270, %v1271
    %v1273 = vrot.slane %v1272, 1
    %v1274 = vmax.f32 %v1272, %v1273
    %v1275 = vsel %vm23, %v88, -inf
    %v1276 = vrot.slane %v1275, 4
    %v1277 = vmax.f32 %v1275, %v1276
    %v1278 = vrot.slane %v1277, 2
    %v1279 = vmax.f32 %v1277, %v1278
    %v1280 = vrot.slane %v1279, 1
    %v1281 = vmax.f32 %v1279, %v1280
    %v1282 = vsel %vm23, %v266, -inf
    %v1283 = vrot.slane %v1282, 4
    %v1284 = vmax.f32 %v1282, %v1283
    %v1285 = vrot.slane %v1284, 2
    %v1286 = vmax.f32 %v1284, %v1285
    %v1287 = vrot.slane %v1286, 1
    %v1288 = vmax.f32 %v1286, %v1287
    %v1289 = vsel %vm23, %v267, -inf
    %v1290 = vrot.slane %v1289, 4
    %v1291 = vmax.f32 %v1289, %v1290
    %v1292 = vrot.slane %v1291, 2
    %v1293 = vmax.f32 %v1291, %v1292
    %v1294 = vrot.slane %v1293, 1
    %v1295 = vmax.f32 %v1293, %v1294
    %v1296 = vsel %vm23, %v268, -inf
    %v1297 = vrot.slane %v1296, 4
    %v1298 = vmax.f32 %v1296, %v1297
    %v1299 = vrot.slane %v1298, 2
    %v1300 = vmax.f32 %v1298, %v1299
    %v1301 = vrot.slane %v1300, 1
    %v1302 = vmax.f32 %v1300, %v1301
    %v1303 = vsel %vm23, %v89, -inf
    %v1304 = vrot.slane %v1303, 4
    %v1305 = vmax.f32 %v1303, %v1304
    %v1306 = vrot.slane %v1305, 2
    %v1307 = vmax.f32 %v1305, %v1306
    %v1308 = vrot.slane %v1307, 1
    %v1309 = vmax.f32 %v1307, %v1308
    %v1310 = vsel %vm23, %v269, -inf
    %v1311 = vrot.slane %v1310, 4
    %v1312 = vmax.f32 %v1310, %v1311
    %v1313 = vrot.slane %v1312, 2
    %v1314 = vmax.f32 %v1312, %v1313
    %v1315 = vrot.slane %v1314, 1
    %v1316 = vmax.f32 %v1314, %v1315
    %v1317 = vsel %vm23, %v270, -inf
    %v1318 = vrot.slane %v1317, 4
    %v1319 = vmax.f32 %v1317, %v1318
    %v1320 = vrot.slane %v1319, 2
    %v1321 = vmax.f32 %v1319, %v1320
    %v1322 = vrot.slane %v1321, 1
    %v1323 = vmax.f32 %v1321, %v1322
    %v1324 = vsel %vm23, %v271, -inf
    %v1325 = vrot.slane %v1324, 4
    %v1326 = vmax.f32 %v1324, %v1325
    %v1327 = vrot.slane %v1326, 2
    %v1328 = vmax.f32 %v1326, %v1327
    %v1329 = vrot.slane %v1328, 1
    %v1330 = vmax.f32 %v1328, %v1329
    %v1331 = vsel %vm23, %v90, -inf
    %v1332 = vrot.slane %v1331, 4
    %v1333 = vmax.f32 %v1331, %v1332
    %v1334 = vrot.slane %v1333, 2
    %v1335 = vmax.f32 %v1333, %v1334
    %v1336 = vrot.slane %v1335, 1
    %v1337 = vmax.f32 %v1335, %v1336
    %v1338 = vsel %vm23, %v272, -inf
    %v1339 = vrot.slane %v1338, 4
    %v1340 = vmax.f32 %v1338, %v1339
    %v1341 = vrot.slane %v1340, 2
    %v1342 = vmax.f32 %v1340, %v1341
    %v1343 = vrot.slane %v1342, 1
    %v1344 = vmax.f32 %v1342, %v1343
    %v1345 = vsel %vm23, %v273, -inf
    %v1346 = vrot.slane %v1345, 4
    %v1347 = vmax.f32 %v1345, %v1346
    %v1348 = vrot.slane %v1347, 2
    %v1349 = vmax.f32 %v1347, %v1348
    %v1350 = vrot.slane %v1349, 1
    %v1351 = vmax.f32 %v1349, %v1350
    %v1352 = vsel %vm23, %v274, -inf
    %v1353 = vrot.slane %v1352, 4
    %v1354 = vmax.f32 %v1352, %v1353
    %v1355 = vrot.slane %v1354, 2
    %v1356 = vmax.f32 %v1354, %v1355
    %v1357 = vrot.slane %v1356, 1
    %v1358 = vmax.f32 %v1356, %v1357
    %v1359 = vsel %vm23, %v91, -inf
    %v1360 = vrot.slane %v1359, 4
    %v1361 = vmax.f32 %v1359, %v1360
    %v1362 = vrot.slane %v1361, 2
    %v1363 = vmax.f32 %v1361, %v1362
    %v1364 = vrot.slane %v1363, 1
    %v1365 = vmax.f32 %v1363, %v1364
    %v1366 = vsel %vm23, %v275, -inf
    %v1367 = vrot.slane %v1366, 4
    %v1368 = vmax.f32 %v1366, %v1367
    %v1369 = vrot.slane %v1368, 2
    %v1370 = vmax.f32 %v1368, %v1369
    %v1371 = vrot.slane %v1370, 1
    %v1372 = vmax.f32 %v1370, %v1371
    %v1373 = vsel %vm23, %v276, -inf
    %v1374 = vrot.slane %v1373, 4
    %v1375 = vmax.f32 %v1373, %v1374
    %v1376 = vrot.slane %v1375, 2
    %v1377 = vmax.f32 %v1375, %v1376
    %v1378 = vrot.slane %v1377, 1
    %v1379 = vmax.f32 %v1377, %v1378
    %v1380 = vsel %vm23, %v277, -inf
    %v1381 = vrot.slane %v1380, 4
    %v1382 = vmax.f32 %v1380, %v1381
    %v1383 = vrot.slane %v1382, 2
    %v1384 = vmax.f32 %v1382, %v1383
    %v1385 = vrot.slane %v1384, 1
    %v1386 = vmax.f32 %v1384, %v1385
    %v1387 = vsel %vm23, %v92, -inf
    %v1388 = vrot.slane %v1387, 4
    %v1389 = vmax.f32 %v1387, %v1388
    %v1390 = vrot.slane %v1389, 2
    %v1391 = vmax.f32 %v1389, %v1390
    %v1392 = vrot.slane %v1391, 1
    %v1393 = vmax.f32 %v1391, %v1392
    %v1394 = vsel %vm23, %v278, -inf
    %v1395 = vrot.slane %v1394, 4
    %v1396 = vmax.f32 %v1394, %v1395
    %v1397 = vrot.slane %v1396, 2
    %v1398 = vmax.f32 %v1396, %v1397
    %v1399 = vrot.slane %v1398, 1
    %v1400 = vmax.f32 %v1398, %v1399
    %v1401 = vsel %vm23, %v279, -inf
    %v1402 = vrot.slane %v1401, 4
    %v1403 = vmax.f32 %v1401, %v1402
    %v1404 = vrot.slane %v1403, 2
    %v1405 = vmax.f32 %v1403, %v1404
    %v1406 = vrot.slane %v1405, 1
    %v1407 = vmax.f32 %v1405, %v1406
    %v1408 = vsel %vm23, %v280, -inf
    %v1409 = vrot.slane %v1408, 4
    %v1410 = vmax.f32 %v1408, %v1409
    %v1411 = vrot.slane %v1410, 2
    %v1412 = vmax.f32 %v1410, %v1411
    %v1413 = vrot.slane %v1412, 1
    %v1414 = vmax.f32 %v1412, %v1413
    %v1415 = vsel %vm23, %v93, -inf
    %v1416 = vrot.slane %v1415, 4
    %v1417 = vmax.f32 %v1415, %v1416
    %v1418 = vrot.slane %v1417, 2
    %v1419 = vmax.f32 %v1417, %v1418
    %v1420 = vrot.slane %v1419, 1
    %v1421 = vmax.f32 %v1419, %v1420
    %v1422 = vsel %vm23, %v281, -inf
    %v1423 = vrot.slane %v1422, 4
    %v1424 = vmax.f32 %v1422, %v1423
    %v1425 = vrot.slane %v1424, 2
    %v1426 = vmax.f32 %v1424, %v1425
    %v1427 = vrot.slane %v1426, 1
    %v1428 = vmax.f32 %v1426, %v1427
    %v1429 = vsel %vm23, %v282, -inf
    %v1430 = vrot.slane %v1429, 4
    %v1431 = vmax.f32 %v1429, %v1430
    %v1432 = vrot.slane %v1431, 2
    %v1433 = vmax.f32 %v1431, %v1432
    %v1434 = vrot.slane %v1433, 1
    %v1435 = vmax.f32 %v1433, %v1434
    %v1436 = vsel %vm23, %v283, -inf
    %v1437 = vrot.slane %v1436, 4
    %v1438 = vmax.f32 %v1436, %v1437
    %v1439 = vrot.slane %v1438, 2
    %v1440 = vmax.f32 %v1438, %v1439
    %v1441 = vrot.slane %v1440, 1
    %v1442 = vmax.f32 %v1440, %v1441
    %v1443 = vsel %vm23, %v94, -inf
    %v1444 = vrot.slane %v1443, 4
    %v1445 = vmax.f32 %v1443, %v1444
    %v1446 = vrot.slane %v1445, 2
    %v1447 = vmax.f32 %v1445, %v1446
    %v1448 = vrot.slane %v1447, 1
    %v1449 = vmax.f32 %v1447, %v1448
    %v1450 = vsel %vm23, %v284, -inf
    %v1451 = vrot.slane %v1450, 4
    %v1452 = vmax.f32 %v1450, %v1451
    %v1453 = vrot.slane %v1452, 2
    %v1454 = vmax.f32 %v1452, %v1453
    %v1455 = vrot.slane %v1454, 1
    %v1456 = vmax.f32 %v1454, %v1455
    %v1457 = vsel %vm23, %v285, -inf
    %v1458 = vrot.slane %v1457, 4
    %v1459 = vmax.f32 %v1457, %v1458
    %v1460 = vrot.slane %v1459, 2
    %v1461 = vmax.f32 %v1459, %v1460
    %v1462 = vrot.slane %v1461, 1
    %v1463 = vmax.f32 %v1461, %v1462
    %v1464 = vsel %vm23, %v286, -inf
    %v1465 = vrot.slane %v1464, 4
    %v1466 = vmax.f32 %v1464, %v1465
    %v1467 = vrot.slane %v1466, 2
    %v1468 = vmax.f32 %v1466, %v1467
    %v1469 = vrot.slane %v1468, 1
    %v1470 = vmax.f32 %v1468, %v1469
    %v1471 = vsel %vm23, %v95, -inf
    %v1472 = vrot.slane %v1471, 4
    %v1473 = vmax.f32 %v1471, %v1472
    %v1474 = vrot.slane %v1473, 2
    %v1475 = vmax.f32 %v1473, %v1474
    %v1476 = vrot.slane %v1475, 1
    %v1477 = vmax.f32 %v1475, %v1476
    %v1478 = vsel %vm23, %v287, -inf
    %v1479 = vrot.slane %v1478, 4
    %v1480 = vmax.f32 %v1478, %v1479
    %v1481 = vrot.slane %v1480, 2
    %v1482 = vmax.f32 %v1480, %v1481
    %v1483 = vrot.slane %v1482, 1
    %v1484 = vmax.f32 %v1482, %v1483
    %v1485 = vsel %vm23, %v288, -inf
    %v1486 = vrot.slane %v1485, 4
    %v1487 = vmax.f32 %v1485, %v1486
    %v1488 = vrot.slane %v1487, 2
    %v1489 = vmax.f32 %v1487, %v1488
    %v1490 = vrot.slane %v1489, 1
    %v1491 = vmax.f32 %v1489, %v1490
    %v1492 = vsel %vm23, %v289, -inf
    %v1493 = vrot.slane %v1492, 4
    %v1494 = vmax.f32 %v1492, %v1493
    %v1495 = vrot.slane %v1494, 2
    %v1496 = vmax.f32 %v1494, %v1495
    %v1497 = vrot.slane %v1496, 1
    %v1498 = vmax.f32 %v1496, %v1497
    %v1499 = vsel %vm23, %v96, -inf
    %v1500 = vrot.slane %v1499, 4
    %v1501 = vmax.f32 %v1499, %v1500
    %v1502 = vrot.slane %v1501, 2
    %v1503 = vmax.f32 %v1501, %v1502
    %v1504 = vrot.slane %v1503, 1
    %v1505 = vmax.f32 %v1503, %v1504
    %v1506 = vsel %vm23, %v290, -inf
    %v1507 = vrot.slane %v1506, 4
    %v1508 = vmax.f32 %v1506, %v1507
    %v1509 = vrot.slane %v1508, 2
    %v1510 = vmax.f32 %v1508, %v1509
    %v1511 = vrot.slane %v1510, 1
    %v1512 = vmax.f32 %v1510, %v1511
    %v1513 = vsel %vm23, %v291, -inf
    %v1514 = vrot.slane %v1513, 4
    %v1515 = vmax.f32 %v1513, %v1514
    %v1516 = vrot.slane %v1515, 2
    %v1517 = vmax.f32 %v1515, %v1516
    %v1518 = vrot.slane %v1517, 1
    %v1519 = vmax.f32 %v1517, %v1518
    %v1520 = vsel %vm23, %v292, -inf
    %v1521 = vrot.slane %v1520, 4
    %v1522 = vmax.f32 %v1520, %v1521
    %v1523 = vrot.slane %v1522, 2
    %v1524 = vmax.f32 %v1522, %v1523
    %v1525 = vrot.slane %v1524, 1
    %v1526 = vmax.f32 %v1524, %v1525
    %v1527 = vsel %vm23, %v97, -inf
    %v1528 = vrot.slane %v1527, 4
    %v1529 = vmax.f32 %v1527, %v1528
    %v1530 = vrot.slane %v1529, 2
    %v1531 = vmax.f32 %v1529, %v1530
    %v1532 = vrot.slane %v1531, 1
    %v1533 = vmax.f32 %v1531, %v1532
    %v1534 = vsel %vm23, %v293, -inf
    %v1535 = vrot.slane %v1534, 4
    %v1536 = vmax.f32 %v1534, %v1535
    %v1537 = vrot.slane %v1536, 2
    %v1538 = vmax.f32 %v1536, %v1537
    %v1539 = vrot.slane %v1538, 1
    %v1540 = vmax.f32 %v1538, %v1539
    %v1541 = vsel %vm23, %v294, -inf
    %v1542 = vrot.slane %v1541, 4
    %v1543 = vmax.f32 %v1541, %v1542
    %v1544 = vrot.slane %v1543, 2
    %v1545 = vmax.f32 %v1543, %v1544
    %v1546 = vrot.slane %v1545, 1
    %v1547 = vmax.f32 %v1545, %v1546
    %v1548 = vsel %vm23, %v295, -inf
    %v1549 = vrot.slane %v1548, 4
    %v1550 = vmax.f32 %v1548, %v1549
    %v1551 = vrot.slane %v1550, 2
    %v1552 = vmax.f32 %v1550, %v1551
    %v1553 = vrot.slane %v1552, 1
    %v1554 = vmax.f32 %v1552, %v1553
    %v1555 = vsel %vm23, %v98, -inf
    %v1556 = vrot.slane %v1555, 4
    %v1557 = vmax.f32 %v1555, %v1556
    %v1558 = vrot.slane %v1557, 2
    %v1559 = vmax.f32 %v1557, %v1558
    %v1560 = vrot.slane %v1559, 1
    %v1561 = vmax.f32 %v1559, %v1560
    %v1562 = vsel %vm23, %v296, -inf
    %v1563 = vrot.slane %v1562, 4
    %v1564 = vmax.f32 %v1562, %v1563
    %v1565 = vrot.slane %v1564, 2
    %v1566 = vmax.f32 %v1564, %v1565
    %v1567 = vrot.slane %v1566, 1
    %v1568 = vmax.f32 %v1566, %v1567
    %v1569 = vsel %vm23, %v297, -inf
    %v1570 = vrot.slane %v1569, 4
    %v1571 = vmax.f32 %v1569, %v1570
    %v1572 = vrot.slane %v1571, 2
    %v1573 = vmax.f32 %v1571, %v1572
    %v1574 = vrot.slane %v1573, 1
    %v1575 = vmax.f32 %v1573, %v1574
    %v1576 = vsel %vm23, %v298, -inf
    %v1577 = vrot.slane %v1576, 4
    %v1578 = vmax.f32 %v1576, %v1577
    %v1579 = vrot.slane %v1578, 2
    %v1580 = vmax.f32 %v1578, %v1579
    %v1581 = vrot.slane %v1580, 1
    %v1582 = vmax.f32 %v1580, %v1581
    %v1583 = vsel %vm23, %v99, -inf
    %v1584 = vrot.slane %v1583, 4
    %v1585 = vmax.f32 %v1583, %v1584
    %v1586 = vrot.slane %v1585, 2
    %v1587 = vmax.f32 %v1585, %v1586
    %v1588 = vrot.slane %v1587, 1
    %v1589 = vmax.f32 %v1587, %v1588
    %v1590 = vsel %vm23, %v299, -inf
    %v1591 = vrot.slane %v1590, 4
    %v1592 = vmax.f32 %v1590, %v1591
    %v1593 = vrot.slane %v1592, 2
    %v1594 = vmax.f32 %v1592, %v1593
    %v1595 = vrot.slane %v1594, 1
    %v1596 = vmax.f32 %v1594, %v1595
    %v1597 = vsel %vm23, %v300, -inf
    %v1598 = vrot.slane %v1597, 4
    %v1599 = vmax.f32 %v1597, %v1598
    %v1600 = vrot.slane %v1599, 2
    %v1601 = vmax.f32 %v1599, %v1600
    %v1602 = vrot.slane %v1601, 1
    %v1603 = vmax.f32 %v1601, %v1602
    %v1604 = vsel %vm23, %v301, -inf
    %v1605 = vrot.slane %v1604, 4
    %v1606 = vmax.f32 %v1604, %v1605
    %v1607 = vrot.slane %v1606, 2
    %v1608 = vmax.f32 %v1606, %v1607
    %v1609 = vrot.slane %v1608, 1
    %v1610 = vmax.f32 %v1608, %v1609
    %v1611 = vsel %vm23, %v100, -inf
    %v1612 = vrot.slane %v1611, 4
    %v1613 = vmax.f32 %v1611, %v1612
    %v1614 = vrot.slane %v1613, 2
    %v1615 = vmax.f32 %v1613, %v1614
    %v1616 = vrot.slane %v1615, 1
    %v1617 = vmax.f32 %v1615, %v1616
    %v1618 = vsel %vm23, %v302, -inf
    %v1619 = vrot.slane %v1618, 4
    %v1620 = vmax.f32 %v1618, %v1619
    %v1621 = vrot.slane %v1620, 2
    %v1622 = vmax.f32 %v1620, %v1621
    %v1623 = vrot.slane %v1622, 1
    %v1624 = vmax.f32 %v1622, %v1623
    %v1625 = vsel %vm23, %v303, -inf
    %v1626 = vrot.slane %v1625, 4
    %v1627 = vmax.f32 %v1625, %v1626
    %v1628 = vrot.slane %v1627, 2
    %v1629 = vmax.f32 %v1627, %v1628
    %v1630 = vrot.slane %v1629, 1
    %v1631 = vmax.f32 %v1629, %v1630
    %v1632 = vsel %vm23, %v304, -inf
    %v1633 = vrot.slane %v1632, 4
    %v1634 = vmax.f32 %v1632, %v1633
    %v1635 = vrot.slane %v1634, 2
    %v1636 = vmax.f32 %v1634, %v1635
    %v1637 = vrot.slane %v1636, 1
    %v1638 = vmax.f32 %v1636, %v1637
    %v1639 = vsel %vm23, %v101, -inf
    %v1640 = vrot.slane %v1639, 4
    %v1641 = vmax.f32 %v1639, %v1640
    %v1642 = vrot.slane %v1641, 2
    %v1643 = vmax.f32 %v1641, %v1642
    %v1644 = vrot.slane %v1643, 1
    %v1645 = vmax.f32 %v1643, %v1644
    %v1646 = vsel %vm23, %v305, -inf
    %v1647 = vrot.slane %v1646, 4
    %v1648 = vmax.f32 %v1646, %v1647
    %v1649 = vrot.slane %v1648, 2
    %v1650 = vmax.f32 %v1648, %v1649
    %v1651 = vrot.slane %v1650, 1
    %v1652 = vmax.f32 %v1650, %v1651
    %v1653 = vsel %vm23, %v306, -inf
    %v1654 = vrot.slane %v1653, 4
    %v1655 = vmax.f32 %v1653, %v1654
    %v1656 = vrot.slane %v1655, 2
    %v1657 = vmax.f32 %v1655, %v1656
    %v1658 = vrot.slane %v1657, 1
    %v1659 = vmax.f32 %v1657, %v1658
    %v1660 = vsel %vm23, %v307, -inf
    %v1661 = vrot.slane %v1660, 4
    %v1662 = vmax.f32 %v1660, %v1661
    %v1663 = vrot.slane %v1662, 2
    %v1664 = vmax.f32 %v1662, %v1663
    %v1665 = vrot.slane %v1664, 1
    %v1666 = vmax.f32 %v1664, %v1665
    %v1667 = vsel %vm23, %v102, -inf
    %v1668 = vrot.slane %v1667, 4
    %v1669 = vmax.f32 %v1667, %v1668
    %v1670 = vrot.slane %v1669, 2
    %v1671 = vmax.f32 %v1669, %v1670
    %v1672 = vrot.slane %v1671, 1
    %v1673 = vmax.f32 %v1671, %v1672
    %v1674 = vsel %vm23, %v308, -inf
    %v1675 = vrot.slane %v1674, 4
    %v1676 = vmax.f32 %v1674, %v1675
    %v1677 = vrot.slane %v1676, 2
    %v1678 = vmax.f32 %v1676, %v1677
    %v1679 = vrot.slane %v1678, 1
    %v1680 = vmax.f32 %v1678, %v1679
    %v1681 = vsel %vm23, %v309, -inf
    %v1682 = vrot.slane %v1681, 4
    %v1683 = vmax.f32 %v1681, %v1682
    %v1684 = vrot.slane %v1683, 2
    %v1685 = vmax.f32 %v1683, %v1684
    %v1686 = vrot.slane %v1685, 1
    %v1687 = vmax.f32 %v1685, %v1686
    %v1688 = vsel %vm23, %v310, -inf
    %v1689 = vrot.slane %v1688, 4
    %v1690 = vmax.f32 %v1688, %v1689
    %v1691 = vrot.slane %v1690, 2
    %v1692 = vmax.f32 %v1690, %v1691
    %v1693 = vrot.slane %v1692, 1
    %v1694 = vmax.f32 %v1692, %v1693
    %v1695 = vsel %vm23, %v103, -inf
    %v1696 = vrot.slane %v1695, 4
    %v1697 = vmax.f32 %v1695, %v1696
    %v1698 = vrot.slane %v1697, 2
    %v1699 = vmax.f32 %v1697, %v1698
    %v1700 = vrot.slane %v1699, 1
    %v1701 = vmax.f32 %v1699, %v1700
    %v1702 = vsel %vm23, %v311, -inf
    %v1703 = vrot.slane %v1702, 4
    %v1704 = vmax.f32 %v1702, %v1703
    %v1705 = vrot.slane %v1704, 2
    %v1706 = vmax.f32 %v1704, %v1705
    %v1707 = vrot.slane %v1706, 1
    %v1708 = vmax.f32 %v1706, %v1707
    %v1709 = vsel %vm23, %v312, -inf
    %v1710 = vrot.slane %v1709, 4
    %v1711 = vmax.f32 %v1709, %v1710
    %v1712 = vrot.slane %v1711, 2
    %v1713 = vmax.f32 %v1711, %v1712
    %v1714 = vrot.slane %v1713, 1
    %v1715 = vmax.f32 %v1713, %v1714
    %v1716 = vsel %vm23, %v313, -inf
    %v1717 = vrot.slane %v1716, 4
    %v1718 = vmax.f32 %v1716, %v1717
    %v1719 = vrot.slane %v1718, 2
    %v1720 = vmax.f32 %v1718, %v1719
    %v1721 = vrot.slane %v1720, 1
    %v1722 = vmax.f32 %v1720, %v1721
    %v1723 = vsel %vm23, %v104, -inf
    %v1724 = vrot.slane %v1723, 4
    %v1725 = vmax.f32 %v1723, %v1724
    %v1726 = vrot.slane %v1725, 2
    %v1727 = vmax.f32 %v1725, %v1726
    %v1728 = vrot.slane %v1727, 1
    %v1729 = vmax.f32 %v1727, %v1728
    %v1730 = vsel %vm23, %v314, -inf
    %v1731 = vrot.slane %v1730, 4
    %v1732 = vmax.f32 %v1730, %v1731
    %v1733 = vrot.slane %v1732, 2
    %v1734 = vmax.f32 %v1732, %v1733
    %v1735 = vrot.slane %v1734, 1
    %v1736 = vmax.f32 %v1734, %v1735
    %v1737 = vsel %vm23, %v315, -inf
    %v1738 = vrot.slane %v1737, 4
    %v1739 = vmax.f32 %v1737, %v1738
    %v1740 = vrot.slane %v1739, 2
    %v1741 = vmax.f32 %v1739, %v1740
    %v1742 = vrot.slane %v1741, 1
    %v1743 = vmax.f32 %v1741, %v1742
    %v1744 = vsel %vm23, %v316, -inf
    %v1745 = vrot.slane %v1744, 4
    %v1746 = vmax.f32 %v1744, %v1745
    %v1747 = vrot.slane %v1746, 2
    %v1748 = vmax.f32 %v1746, %v1747
    %v1749 = vrot.slane %v1748, 1
    %v1750 = vmax.f32 %v1748, %v1749
    %v1751 = vsel %vm23, %v105, -inf
    %v1752 = vrot.slane %v1751, 4
    %v1753 = vmax.f32 %v1751, %v1752
    %v1754 = vrot.slane %v1753, 2
    %v1755 = vmax.f32 %v1753, %v1754
    %v1756 = vrot.slane %v1755, 1
    %v1757 = vmax.f32 %v1755, %v1756
    %v1758 = vsel %vm23, %v317, -inf
    %v1759 = vrot.slane %v1758, 4
    %v1760 = vmax.f32 %v1758, %v1759
    %v1761 = vrot.slane %v1760, 2
    %v1762 = vmax.f32 %v1760, %v1761
    %v1763 = vrot.slane %v1762, 1
    %v1764 = vmax.f32 %v1762, %v1763
    %v1765 = vsel %vm23, %v318, -inf
    %v1766 = vrot.slane %v1765, 4
    %v1767 = vmax.f32 %v1765, %v1766
    %v1768 = vrot.slane %v1767, 2
    %v1769 = vmax.f32 %v1767, %v1768
    %v1770 = vrot.slane %v1769, 1
    %v1771 = vmax.f32 %v1769, %v1770
    %v1772 = vsel %vm23, %v319, -inf
    %v1773 = vrot.slane %v1772, 4
    %v1774 = vmax.f32 %v1772, %v1773
    %v1775 = vrot.slane %v1774, 2
    %v1776 = vmax.f32 %v1774, %v1775
    %v1777 = vrot.slane %v1776, 1
    %v1778 = vmax.f32 %v1776, %v1777
    %v1779 = vsel %vm23, %v106, -inf
    %v1780 = vrot.slane %v1779, 4
    %v1781 = vmax.f32 %v1779, %v1780
    %v1782 = vrot.slane %v1781, 2
    %v1783 = vmax.f32 %v1781, %v1782
    %v1784 = vrot.slane %v1783, 1
    %v1785 = vmax.f32 %v1783, %v1784
    %v1786 = vsel %vm23, %v320, -inf
    %v1787 = vrot.slane %v1786, 4
    %v1788 = vmax.f32 %v1786, %v1787
    %v1789 = vrot.slane %v1788, 2
    %v1790 = vmax.f32 %v1788, %v1789
    %v1791 = vrot.slane %v1790, 1
    %v1792 = vmax.f32 %v1790, %v1791
    %v1793 = vsel %vm23, %v321, -inf
    %v1794 = vrot.slane %v1793, 4
    %v1795 = vmax.f32 %v1793, %v1794
    %v1796 = vrot.slane %v1795, 2
    %v1797 = vmax.f32 %v1795, %v1796
    %v1798 = vrot.slane %v1797, 1
    %v1799 = vmax.f32 %v1797, %v1798
    %v1800 = vsel %vm23, %v322, -inf
    %v1801 = vrot.slane %v1800, 4
    %v1802 = vmax.f32 %v1800, %v1801
    %v1803 = vrot.slane %v1802, 2
    %v1804 = vmax.f32 %v1802, %v1803
    %v1805 = vrot.slane %v1804, 1
    %v1806 = vmax.f32 %v1804, %v1805
    %v1807 = vsel %vm23, %v107, -inf
    %v1808 = vrot.slane %v1807, 4
    %v1809 = vmax.f32 %v1807, %v1808
    %v1810 = vrot.slane %v1809, 2
    %v1811 = vmax.f32 %v1809, %v1810
    %v1812 = vrot.slane %v1811, 1
    %v1813 = vmax.f32 %v1811, %v1812
    %v1814 = vsel %vm23, %v323, -inf
    %v1815 = vrot.slane %v1814, 4
    %v1816 = vmax.f32 %v1814, %v1815
    %v1817 = vrot.slane %v1816, 2
    %v1818 = vmax.f32 %v1816, %v1817
    %v1819 = vrot.slane %v1818, 1
    %v1820 = vmax.f32 %v1818, %v1819
    %v1821 = vsel %vm23, %v324, -inf
    %v1822 = vrot.slane %v1821, 4
    %v1823 = vmax.f32 %v1821, %v1822
    %v1824 = vrot.slane %v1823, 2
    %v1825 = vmax.f32 %v1823, %v1824
    %v1826 = vrot.slane %v1825, 1
    %v1827 = vmax.f32 %v1825, %v1826
    %v1828 = vsel %vm23, %v325, -inf
    %v1829 = vrot.slane %v1828, 4
    %v1830 = vmax.f32 %v1828, %v1829
    %v1831 = vrot.slane %v1830, 2
    %v1832 = vmax.f32 %v1830, %v1831
    %v1833 = vrot.slane %v1832, 1
    %v1834 = vmax.f32 %v1832, %v1833
    %v1835 = vsel %vm23, %v108, -inf
    %v1836 = vrot.slane %v1835, 4
    %v1837 = vmax.f32 %v1835, %v1836
    %v1838 = vrot.slane %v1837, 2
    %v1839 = vmax.f32 %v1837, %v1838
    %v1840 = vrot.slane %v1839, 1
    %v1841 = vmax.f32 %v1839, %v1840
    %v1842 = vsel %vm23, %v326, -inf
    %v1843 = vrot.slane %v1842, 4
    %v1844 = vmax.f32 %v1842, %v1843
    %v1845 = vrot.slane %v1844, 2
    %v1846 = vmax.f32 %v1844, %v1845
    %v1847 = vrot.slane %v1846, 1
    %v1848 = vmax.f32 %v1846, %v1847
    %v1849 = vsel %vm23, %v327, -inf
    %v1850 = vrot.slane %v1849, 4
    %v1851 = vmax.f32 %v1849, %v1850
    %v1852 = vrot.slane %v1851, 2
    %v1853 = vmax.f32 %v1851, %v1852
    %v1854 = vrot.slane %v1853, 1
    %v1855 = vmax.f32 %v1853, %v1854
    %v1856 = vsel %vm23, %v328, -inf
    %v1857 = vrot.slane %v1856, 4
    %v1858 = vmax.f32 %v1856, %v1857
    %v1859 = vrot.slane %v1858, 2
    %v1860 = vmax.f32 %v1858, %v1859
    %v1861 = vrot.slane %v1860, 1
    %v1862 = vmax.f32 %v1860, %v1861
    %v1863 = vsel %vm23, %v109, -inf
    %v1864 = vrot.slane %v1863, 4
    %v1865 = vmax.f32 %v1863, %v1864
    %v1866 = vrot.slane %v1865, 2
    %v1867 = vmax.f32 %v1865, %v1866
    %v1868 = vrot.slane %v1867, 1
    %v1869 = vmax.f32 %v1867, %v1868
    %v1870 = vsel %vm23, %v329, -inf
    %v1871 = vrot.slane %v1870, 4
    %v1872 = vmax.f32 %v1870, %v1871
    %v1873 = vrot.slane %v1872, 2
    %v1874 = vmax.f32 %v1872, %v1873
    %v1875 = vrot.slane %v1874, 1
    %v1876 = vmax.f32 %v1874, %v1875
    %v1877 = vsel %vm23, %v330, -inf
    %v1878 = vrot.slane %v1877, 4
    %v1879 = vmax.f32 %v1877, %v1878
    %v1880 = vrot.slane %v1879, 2
    %v1881 = vmax.f32 %v1879, %v1880
    %v1882 = vrot.slane %v1881, 1
    %v1883 = vmax.f32 %v1881, %v1882
    %v1884 = vsel %vm23, %v331, -inf
    %v1885 = vrot.slane %v1884, 4
    %v1886 = vmax.f32 %v1884, %v1885
    %v1887 = vrot.slane %v1886, 2
    %v1888 = vmax.f32 %v1886, %v1887
    %v1889 = vrot.slane %v1888, 1
    %v1890 = vmax.f32 %v1888, %v1889
    %v1891 = vsel %vm23, %v110, -inf
    %v1892 = vrot.slane %v1891, 4
    %v1893 = vmax.f32 %v1891, %v1892
    %v1894 = vrot.slane %v1893, 2
    %v1895 = vmax.f32 %v1893, %v1894
    %v1896 = vrot.slane %v1895, 1
    %v1897 = vmax.f32 %v1895, %v1896
    %v1898 = vsel %vm23, %v332, -inf
    %v1899 = vrot.slane %v1898, 4
    %v1900 = vmax.f32 %v1898, %v1899
    %v1901 = vrot.slane %v1900, 2
    %v1902 = vmax.f32 %v1900, %v1901
    %v1903 = vrot.slane %v1902, 1
    %v1904 = vmax.f32 %v1902, %v1903
    %v1905 = vsel %vm23, %v333, -inf
    %v1906 = vrot.slane %v1905, 4
    %v1907 = vmax.f32 %v1905, %v1906
    %v1908 = vrot.slane %v1907, 2
    %v1909 = vmax.f32 %v1907, %v1908
    %v1910 = vrot.slane %v1909, 1
    %v1911 = vmax.f32 %v1909, %v1910
    %v1912 = vsel %vm23, %v334, -inf
    %v1913 = vrot.slane %v1912, 4
    %v1914 = vmax.f32 %v1912, %v1913
    %v1915 = vrot.slane %v1914, 2
    %v1916 = vmax.f32 %v1914, %v1915
    %v1917 = vrot.slane %v1916, 1
    %v1918 = vmax.f32 %v1916, %v1917
    %v1919 = vsel %vm23, %v111, -inf
    %v1920 = vrot.slane %v1919, 4
    %v1921 = vmax.f32 %v1919, %v1920
    %v1922 = vrot.slane %v1921, 2
    %v1923 = vmax.f32 %v1921, %v1922
    %v1924 = vrot.slane %v1923, 1
    %v1925 = vmax.f32 %v1923, %v1924
    %v1926 = vsel %vm23, %v335, -inf
    %v1927 = vrot.slane %v1926, 4
    %v1928 = vmax.f32 %v1926, %v1927
    %v1929 = vrot.slane %v1928, 2
    %v1930 = vmax.f32 %v1928, %v1929
    %v1931 = vrot.slane %v1930, 1
    %v1932 = vmax.f32 %v1930, %v1931
    %v1933 = vsel %vm23, %v336, -inf
    %v1934 = vrot.slane %v1933, 4
    %v1935 = vmax.f32 %v1933, %v1934
    %v1936 = vrot.slane %v1935, 2
    %v1937 = vmax.f32 %v1935, %v1936
    %v1938 = vrot.slane %v1937, 1
    %v1939 = vmax.f32 %v1937, %v1938
    %v1940 = vsel %vm23, %v337, -inf
    %v1941 = vrot.slane %v1940, 4
    %v1942 = vmax.f32 %v1940, %v1941
    %v1943 = vrot.slane %v1942, 2
    %v1944 = vmax.f32 %v1942, %v1943
    %v1945 = vrot.slane %v1944, 1
    %v1946 = vmax.f32 %v1944, %v1945
    %v1947 = vsel %vm23, %v112, -inf
    %v1948 = vrot.slane %v1947, 4
    %v1949 = vmax.f32 %v1947, %v1948
    %v1950 = vrot.slane %v1949, 2
    %v1951 = vmax.f32 %v1949, %v1950
    %v1952 = vrot.slane %v1951, 1
    %v1953 = vmax.f32 %v1951, %v1952
    %v1954 = vsel %vm23, %v338, -inf
    %v1955 = vrot.slane %v1954, 4
    %v1956 = vmax.f32 %v1954, %v1955
    %v1957 = vrot.slane %v1956, 2
    %v1958 = vmax.f32 %v1956, %v1957
    %v1959 = vrot.slane %v1958, 1
    %v1960 = vmax.f32 %v1958, %v1959
    %v1961 = vsel %vm23, %v339, -inf
    %v1962 = vrot.slane %v1961, 4
    %v1963 = vmax.f32 %v1961, %v1962
    %v1964 = vrot.slane %v1963, 2
    %v1965 = vmax.f32 %v1963, %v1964
    %v1966 = vrot.slane %v1965, 1
    %v1967 = vmax.f32 %v1965, %v1966
    %v1968 = vsel %vm23, %v340, -inf
    %v1969 = vrot.slane %v1968, 4
    %v1970 = vmax.f32 %v1968, %v1969
    %v1971 = vrot.slane %v1970, 2
    %v1972 = vmax.f32 %v1970, %v1971
    %v1973 = vrot.slane %v1972, 1
    %v1974 = vmax.f32 %v1972, %v1973
    %v1975 = vsel %vm23, %v113, -inf
    %v1976 = vrot.slane %v1975, 4
    %v1977 = vmax.f32 %v1975, %v1976
    %v1978 = vrot.slane %v1977, 2
    %v1979 = vmax.f32 %v1977, %v1978
    %v1980 = vrot.slane %v1979, 1
    %v1981 = vmax.f32 %v1979, %v1980
    %v1982 = vsel %vm23, %v341, -inf
    %v1983 = vrot.slane %v1982, 4
    %v1984 = vmax.f32 %v1982, %v1983
    %v1985 = vrot.slane %v1984, 2
    %v1986 = vmax.f32 %v1984, %v1985
    %v1987 = vrot.slane %v1986, 1
    %v1988 = vmax.f32 %v1986, %v1987
    %v1989 = vsel %vm23, %v342, -inf
    %v1990 = vrot.slane %v1989, 4
    %v1991 = vmax.f32 %v1989, %v1990
    %v1992 = vrot.slane %v1991, 2
    %v1993 = vmax.f32 %v1991, %v1992
    %v1994 = vrot.slane %v1993, 1
    %v1995 = vmax.f32 %v1993, %v1994
    %v1996 = vsel %vm23, %v343, -inf
    %v1997 = vrot.slane %v1996, 4
    %v1998 = vmax.f32 %v1996, %v1997
    %v1999 = vrot.slane %v1998, 2
    %v2000 = vmax.f32 %v1998, %v1999
    %v2001 = vrot.slane %v2000, 1
    %v2002 = vmax.f32 %v2000, %v2001
    %v2003 = vsel %vm23, %v114, -inf
    %v2004 = vrot.slane %v2003, 4
    %v2005 = vmax.f32 %v2003, %v2004
    %v2006 = vrot.slane %v2005, 2
    %v2007 = vmax.f32 %v2005, %v2006
    %v2008 = vrot.slane %v2007, 1
    %v2009 = vmax.f32 %v2007, %v2008
    %v2010 = vsel %vm23, %v344, -inf
    %v2011 = vrot.slane %v2010, 4
    %v2012 = vmax.f32 %v2010, %v2011
    %v2013 = vrot.slane %v2012, 2
    %v2014 = vmax.f32 %v2012, %v2013
    %v2015 = vrot.slane %v2014, 1
    %v2016 = vmax.f32 %v2014, %v2015
    %v2017 = vsel %vm23, %v345, -inf
    %v2018 = vrot.slane %v2017, 4
    %v2019 = vmax.f32 %v2017, %v2018
    %v2020 = vrot.slane %v2019, 2
    %v2021 = vmax.f32 %v2019, %v2020
    %v2022 = vrot.slane %v2021, 1
    %v2023 = vmax.f32 %v2021, %v2022
    %v2024 = vsel %vm23, %v346, -inf
    %v2025 = vrot.slane %v2024, 4
    %v2026 = vmax.f32 %v2024, %v2025
    %v2027 = vrot.slane %v2026, 2
    %v2028 = vmax.f32 %v2026, %v2027
    %v2029 = vrot.slane %v2028, 1
    %v2030 = vmax.f32 %v2028, %v2029
    %v2031 = vsel %vm23, %v115, -inf
    %v2032 = vrot.slane %v2031, 4
    %v2033 = vmax.f32 %v2031, %v2032
    %v2034 = vrot.slane %v2033, 2
    %v2035 = vmax.f32 %v2033, %v2034
    %v2036 = vrot.slane %v2035, 1
    %v2037 = vmax.f32 %v2035, %v2036
    %v2038 = vsel %vm23, %v347, -inf
    %v2039 = vrot.slane %v2038, 4
    %v2040 = vmax.f32 %v2038, %v2039
    %v2041 = vrot.slane %v2040, 2
    %v2042 = vmax.f32 %v2040, %v2041
    %v2043 = vrot.slane %v2042, 1
    %v2044 = vmax.f32 %v2042, %v2043
    %v2045 = vsel %vm23, %v348, -inf
    %v2046 = vrot.slane %v2045, 4
    %v2047 = vmax.f32 %v2045, %v2046
    %v2048 = vrot.slane %v2047, 2
    %v2049 = vmax.f32 %v2047, %v2048
    %v2050 = vrot.slane %v2049, 1
    %v2051 = vmax.f32 %v2049, %v2050
    %v2052 = vsel %vm23, %v349, -inf
    %v2053 = vrot.slane %v2052, 4
    %v2054 = vmax.f32 %v2052, %v2053
    %v2055 = vrot.slane %v2054, 2
    %v2056 = vmax.f32 %v2054, %v2055
    %v2057 = vrot.slane %v2056, 1
    %v2058 = vmax.f32 %v2056, %v2057
    %v2059 = vsel %vm23, %v116, -inf
    %v2060 = vrot.slane %v2059, 4
    %v2061 = vmax.f32 %v2059, %v2060
    %v2062 = vrot.slane %v2061, 2
    %v2063 = vmax.f32 %v2061, %v2062
    %v2064 = vrot.slane %v2063, 1
    %v2065 = vmax.f32 %v2063, %v2064
    %v2066 = vsel %vm23, %v350, -inf
    %v2067 = vrot.slane %v2066, 4
    %v2068 = vmax.f32 %v2066, %v2067
    %v2069 = vrot.slane %v2068, 2
    %v2070 = vmax.f32 %v2068, %v2069
    %v2071 = vrot.slane %v2070, 1
    %v2072 = vmax.f32 %v2070, %v2071
    %v2073 = vsel %vm23, %v351, -inf
    %v2074 = vrot.slane %v2073, 4
    %v2075 = vmax.f32 %v2073, %v2074
    %v2076 = vrot.slane %v2075, 2
    %v2077 = vmax.f32 %v2075, %v2076
    %v2078 = vrot.slane %v2077, 1
    %v2079 = vmax.f32 %v2077, %v2078
    %v2080 = vsel %vm23, %v352, -inf
    %v2081 = vrot.slane %v2080, 4
    %v2082 = vmax.f32 %v2080, %v2081
    %v2083 = vrot.slane %v2082, 2
    %v2084 = vmax.f32 %v2082, %v2083
    %v2085 = vrot.slane %v2084, 1
    %v2086 = vmax.f32 %v2084, %v2085
    %v2087 = vsel %vm23, %v117, -inf
    %v2088 = vrot.slane %v2087, 4
    %v2089 = vmax.f32 %v2087, %v2088
    %v2090 = vrot.slane %v2089, 2
    %v2091 = vmax.f32 %v2089, %v2090
    %v2092 = vrot.slane %v2091, 1
    %v2093 = vmax.f32 %v2091, %v2092
    %v2094 = vsel %vm23, %v353, -inf
    %v2095 = vrot.slane %v2094, 4
    %v2096 = vmax.f32 %v2094, %v2095
    %v2097 = vrot.slane %v2096, 2
    %v2098 = vmax.f32 %v2096, %v2097
    %v2099 = vrot.slane %v2098, 1
    %v2100 = vmax.f32 %v2098, %v2099
    %v2101 = vsel %vm23, %v354, -inf
    %v2102 = vrot.slane %v2101, 4
    %v2103 = vmax.f32 %v2101, %v2102
    %v2104 = vrot.slane %v2103, 2
    %v2105 = vmax.f32 %v2103, %v2104
    %v2106 = vrot.slane %v2105, 1
    %v2107 = vmax.f32 %v2105, %v2106
    %v2108 = vsel %vm23, %v355, -inf
    %v2109 = vrot.slane %v2108, 4
    %v2110 = vmax.f32 %v2108, %v2109
    %v2111 = vrot.slane %v2110, 2
    %v2112 = vmax.f32 %v2110, %v2111
    %v2113 = vrot.slane %v2112, 1
    %v2114 = vmax.f32 %v2112, %v2113
    %v2115 = vsel %vm23, %v118, -inf
    %v2116 = vrot.slane %v2115, 4
    %v2117 = vmax.f32 %v2115, %v2116
    %v2118 = vrot.slane %v2117, 2
    %v2119 = vmax.f32 %v2117, %v2118
    %v2120 = vrot.slane %v2119, 1
    %v2121 = vmax.f32 %v2119, %v2120
    %v2122 = vsel %vm23, %v356, -inf
    %v2123 = vrot.slane %v2122, 4
    %v2124 = vmax.f32 %v2122, %v2123
    %v2125 = vrot.slane %v2124, 2
    %v2126 = vmax.f32 %v2124, %v2125
    %v2127 = vrot.slane %v2126, 1
    %v2128 = vmax.f32 %v2126, %v2127
    %v2129 = vsel %vm23, %v357, -inf
    %v2130 = vrot.slane %v2129, 4
    %v2131 = vmax.f32 %v2129, %v2130
    %v2132 = vrot.slane %v2131, 2
    %v2133 = vmax.f32 %v2131, %v2132
    %v2134 = vrot.slane %v2133, 1
    %v2135 = vmax.f32 %v2133, %v2134
    %v2136 = vsel %vm23, %v358, -inf
    %v2137 = vrot.slane %v2136, 4
    %v2138 = vmax.f32 %v2136, %v2137
    %v2139 = vrot.slane %v2138, 2
    %v2140 = vmax.f32 %v2138, %v2139
    %v2141 = vrot.slane %v2140, 1
    %v2142 = vmax.f32 %v2140, %v2141
    %v2143 = vsel %vm23, %v119, -inf
    %v2144 = vrot.slane %v2143, 4
    %v2145 = vmax.f32 %v2143, %v2144
    %v2146 = vrot.slane %v2145, 2
    %v2147 = vmax.f32 %v2145, %v2146
    %v2148 = vrot.slane %v2147, 1
    %v2149 = vmax.f32 %v2147, %v2148
    %v2150 = vsel %vm23, %v359, -inf
    %v2151 = vrot.slane %v2150, 4
    %v2152 = vmax.f32 %v2150, %v2151
    %v2153 = vrot.slane %v2152, 2
    %v2154 = vmax.f32 %v2152, %v2153
    %v2155 = vrot.slane %v2154, 1
    %v2156 = vmax.f32 %v2154, %v2155
    %v2157 = vsel %vm23, %v360, -inf
    %v2158 = vrot.slane %v2157, 4
    %v2159 = vmax.f32 %v2157, %v2158
    %v2160 = vrot.slane %v2159, 2
    %v2161 = vmax.f32 %v2159, %v2160
    %v2162 = vrot.slane %v2161, 1
    %v2163 = vmax.f32 %v2161, %v2162
    %v2164 = vsel %vm23, %v361, -inf
    %v2165 = vrot.slane %v2164, 4
    %v2166 = vmax.f32 %v2164, %v2165
    %v2167 = vrot.slane %v2166, 2
    %v2168 = vmax.f32 %v2166, %v2167
    %v2169 = vrot.slane %v2168, 1
    %v2170 = vmax.f32 %v2168, %v2169
    %v2171 = vsel %vm23, %v120, -inf
    %v2172 = vrot.slane %v2171, 4
    %v2173 = vmax.f32 %v2171, %v2172
    %v2174 = vrot.slane %v2173, 2
    %v2175 = vmax.f32 %v2173, %v2174
    %v2176 = vrot.slane %v2175, 1
    %v2177 = vmax.f32 %v2175, %v2176
    %v2178 = vsel %vm23, %v362, -inf
    %v2179 = vrot.slane %v2178, 4
    %v2180 = vmax.f32 %v2178, %v2179
    %v2181 = vrot.slane %v2180, 2
    %v2182 = vmax.f32 %v2180, %v2181
    %v2183 = vrot.slane %v2182, 1
    %v2184 = vmax.f32 %v2182, %v2183
    %v2185 = vsel %vm23, %v363, -inf
    %v2186 = vrot.slane %v2185, 4
    %v2187 = vmax.f32 %v2185, %v2186
    %v2188 = vrot.slane %v2187, 2
    %v2189 = vmax.f32 %v2187, %v2188
    %v2190 = vrot.slane %v2189, 1
    %v2191 = vmax.f32 %v2189, %v2190
    %v2192 = vsel %vm23, %v364, -inf
    %v2193 = vrot.slane %v2192, 4
    %v2194 = vmax.f32 %v2192, %v2193
    %v2195 = vrot.slane %v2194, 2
    %v2196 = vmax.f32 %v2194, %v2195
    %v2197 = vrot.slane %v2196, 1
    %v2198 = vmax.f32 %v2196, %v2197
    %v2199 = vsel %vm23, %v121, -inf
    %v2200 = vrot.slane %v2199, 4
    %v2201 = vmax.f32 %v2199, %v2200
    %v2202 = vrot.slane %v2201, 2
    %v2203 = vmax.f32 %v2201, %v2202
    %v2204 = vrot.slane %v2203, 1
    %v2205 = vmax.f32 %v2203, %v2204
    %v2206 = vsel %vm23, %v365, -inf
    %v2207 = vrot.slane %v2206, 4
    %v2208 = vmax.f32 %v2206, %v2207
    %v2209 = vrot.slane %v2208, 2
    %v2210 = vmax.f32 %v2208, %v2209
    %v2211 = vrot.slane %v2210, 1
    %v2212 = vmax.f32 %v2210, %v2211
    %v2213 = vsel %vm23, %v366, -inf
    %v2214 = vrot.slane %v2213, 4
    %v2215 = vmax.f32 %v2213, %v2214
    %v2216 = vrot.slane %v2215, 2
    %v2217 = vmax.f32 %v2215, %v2216
    %v2218 = vrot.slane %v2217, 1
    %v2219 = vmax.f32 %v2217, %v2218
    %v2220 = vsel %vm23, %v367, -inf
    %v2221 = vrot.slane %v2220, 4
    %v2222 = vmax.f32 %v2220, %v2221
    %v2223 = vrot.slane %v2222, 2
    %v2224 = vmax.f32 %v2222, %v2223
    %v2225 = vrot.slane %v2224, 1
    %v2226 = vmax.f32 %v2224, %v2225
    %v2227 = vsel %vm23, %v122, -inf
    %v2228 = vrot.slane %v2227, 4
    %v2229 = vmax.f32 %v2227, %v2228
    %v2230 = vrot.slane %v2229, 2
    %v2231 = vmax.f32 %v2229, %v2230
    %v2232 = vrot.slane %v2231, 1
    %v2233 = vmax.f32 %v2231, %v2232
    %v2234 = vsel %vm23, %v368, -inf
    %v2235 = vrot.slane %v2234, 4
    %v2236 = vmax.f32 %v2234, %v2235
    %v2237 = vrot.slane %v2236, 2
    %v2238 = vmax.f32 %v2236, %v2237
    %v2239 = vrot.slane %v2238, 1
    %v2240 = vmax.f32 %v2238, %v2239
    %v2241 = vsel %vm23, %v369, -inf
    %v2242 = vrot.slane %v2241, 4
    %v2243 = vmax.f32 %v2241, %v2242
    %v2244 = vrot.slane %v2243, 2
    %v2245 = vmax.f32 %v2243, %v2244
    %v2246 = vrot.slane %v2245, 1
    %v2247 = vmax.f32 %v2245, %v2246
    %v2248 = vsel %vm23, %v370, -inf
    %v2249 = vrot.slane %v2248, 4
    %v2250 = vmax.f32 %v2248, %v2249
    %v2251 = vrot.slane %v2250, 2
    %v2252 = vmax.f32 %v2250, %v2251
    %v2253 = vrot.slane %v2252, 1
    %v2254 = vmax.f32 %v2252, %v2253
    %v2255 = vsel %vm23, %v123, -inf
    %v2256 = vrot.slane %v2255, 4
    %v2257 = vmax.f32 %v2255, %v2256
    %v2258 = vrot.slane %v2257, 2
    %v2259 = vmax.f32 %v2257, %v2258
    %v2260 = vrot.slane %v2259, 1
    %v2261 = vmax.f32 %v2259, %v2260
    %v2262 = vsel %vm23, %v371, -inf
    %v2263 = vrot.slane %v2262, 4
    %v2264 = vmax.f32 %v2262, %v2263
    %v2265 = vrot.slane %v2264, 2
    %v2266 = vmax.f32 %v2264, %v2265
    %v2267 = vrot.slane %v2266, 1
    %v2268 = vmax.f32 %v2266, %v2267
    %v2269 = vsel %vm23, %v372, -inf
    %v2270 = vrot.slane %v2269, 4
    %v2271 = vmax.f32 %v2269, %v2270
    %v2272 = vrot.slane %v2271, 2
    %v2273 = vmax.f32 %v2271, %v2272
    %v2274 = vrot.slane %v2273, 1
    %v2275 = vmax.f32 %v2273, %v2274
    %v2276 = vsel %vm23, %v373, -inf
    %v2277 = vrot.slane %v2276, 4
    %v2278 = vmax.f32 %v2276, %v2277
    %v2279 = vrot.slane %v2278, 2
    %v2280 = vmax.f32 %v2278, %v2279
    %v2281 = vrot.slane %v2280, 1
    %v2282 = vmax.f32 %v2280, %v2281
    %v2283 = vsel %vm23, %v124, -inf
    %v2284 = vrot.slane %v2283, 4
    %v2285 = vmax.f32 %v2283, %v2284
    %v2286 = vrot.slane %v2285, 2
    %v2287 = vmax.f32 %v2285, %v2286
    %v2288 = vrot.slane %v2287, 1
    %v2289 = vmax.f32 %v2287, %v2288
    %v2290 = vsel %vm23, %v374, -inf
    %v2291 = vrot.slane %v2290, 4
    %v2292 = vmax.f32 %v2290, %v2291
    %v2293 = vrot.slane %v2292, 2
    %v2294 = vmax.f32 %v2292, %v2293
    %v2295 = vrot.slane %v2294, 1
    %v2296 = vmax.f32 %v2294, %v2295
    %v2297 = vsel %vm23, %v375, -inf
    %v2298 = vrot.slane %v2297, 4
    %v2299 = vmax.f32 %v2297, %v2298
    %v2300 = vrot.slane %v2299, 2
    %v2301 = vmax.f32 %v2299, %v2300
    %v2302 = vrot.slane %v2301, 1
    %v2303 = vmax.f32 %v2301, %v2302
    %v2304 = vsel %vm23, %v376, -inf
    %v2305 = vrot.slane %v2304, 4
    %v2306 = vmax.f32 %v2304, %v2305
    %v2307 = vrot.slane %v2306, 2
    %v2308 = vmax.f32 %v2306, %v2307
    %v2309 = vrot.slane %v2308, 1
    %v2310 = vmax.f32 %v2308, %v2309
    %v2311 = vsel %vm23, %v125, -inf
    %v2312 = vrot.slane %v2311, 4
    %v2313 = vmax.f32 %v2311, %v2312
    %v2314 = vrot.slane %v2313, 2
    %v2315 = vmax.f32 %v2313, %v2314
    %v2316 = vrot.slane %v2315, 1
    %v2317 = vmax.f32 %v2315, %v2316
    %v2318 = vsel %vm23, %v377, -inf
    %v2319 = vrot.slane %v2318, 4
    %v2320 = vmax.f32 %v2318, %v2319
    %v2321 = vrot.slane %v2320, 2
    %v2322 = vmax.f32 %v2320, %v2321
    %v2323 = vrot.slane %v2322, 1
    %v2324 = vmax.f32 %v2322, %v2323
    %v2325 = vsel %vm23, %v378, -inf
    %v2326 = vrot.slane %v2325, 4
    %v2327 = vmax.f32 %v2325, %v2326
    %v2328 = vrot.slane %v2327, 2
    %v2329 = vmax.f32 %v2327, %v2328
    %v2330 = vrot.slane %v2329, 1
    %v2331 = vmax.f32 %v2329, %v2330
    %v2332 = vsel %vm23, %v379, -inf
    %v2333 = vrot.slane %v2332, 4
    %v2334 = vmax.f32 %v2332, %v2333
    %v2335 = vrot.slane %v2334, 2
    %v2336 = vmax.f32 %v2334, %v2335
    %v2337 = vrot.slane %v2336, 1
    %v2338 = vmax.f32 %v2336, %v2337
    %v2339 = vsel %vm23, %v126, -inf
    %v2340 = vrot.slane %v2339, 4
    %v2341 = vmax.f32 %v2339, %v2340
    %v2342 = vrot.slane %v2341, 2
    %v2343 = vmax.f32 %v2341, %v2342
    %v2344 = vrot.slane %v2343, 1
    %v2345 = vmax.f32 %v2343, %v2344
    %v2346 = vsel %vm23, %v380, -inf
    %v2347 = vrot.slane %v2346, 4
    %v2348 = vmax.f32 %v2346, %v2347
    %v2349 = vrot.slane %v2348, 2
    %v2350 = vmax.f32 %v2348, %v2349
    %v2351 = vrot.slane %v2350, 1
    %v2352 = vmax.f32 %v2350, %v2351
    %v2353 = vsel %vm23, %v381, -inf
    %v2354 = vrot.slane %v2353, 4
    %v2355 = vmax.f32 %v2353, %v2354
    %v2356 = vrot.slane %v2355, 2
    %v2357 = vmax.f32 %v2355, %v2356
    %v2358 = vrot.slane %v2357, 1
    %v2359 = vmax.f32 %v2357, %v2358
    %v2360 = vsel %vm23, %v382, -inf
    %v2361 = vrot.slane %v2360, 4
    %v2362 = vmax.f32 %v2360, %v2361
    %v2363 = vrot.slane %v2362, 2
    %v2364 = vmax.f32 %v2362, %v2363
    %v2365 = vrot.slane %v2364, 1
    %v2366 = vmax.f32 %v2364, %v2365
    %v2367 = vsel %vm21, %v581, -inf
    %v2368 = vsel %vm21, %v637, -inf
    %v2369 = vmax.f32 %v2367, %v2368
    %v2370 = vsel %vm21, %v588, -inf
    %v2371 = vsel %vm21, %v644, -inf
    %v2372 = vmax.f32 %v2370, %v2371
    %v2373 = vsel %vm21, %v595, -inf
    %v2374 = vsel %vm21, %v651, -inf
    %v2375 = vmax.f32 %v2373, %v2374
    %v2376 = vsel %vm21, %v602, -inf
    %v2377 = vsel %vm21, %v658, -inf
    %v2378 = vmax.f32 %v2376, %v2377
    %v2379 = vsel %vm21, %v609, -inf
    %v2380 = vsel %vm21, %v665, -inf
    %v2381 = vmax.f32 %v2379, %v2380
    %v2382 = vsel %vm21, %v616, -inf
    %v2383 = vsel %vm21, %v672, -inf
    %v2384 = vmax.f32 %v2382, %v2383
    %v2385 = vsel %vm21, %v623, -inf
    %v2386 = vsel %vm21, %v679, -inf
    %v2387 = vmax.f32 %v2385, %v2386
    %v2388 = vsel %vm21, %v630, -inf
    %v2389 = vsel %vm21, %v686, -inf
    %v2390 = vmax.f32 %v2388, %v2389
    %v2391 = vsel %vm21, %v693, -inf
    %v2392 = vsel %vm21, %v749, -inf
    %v2393 = vmax.f32 %v2391, %v2392
    %v2394 = vsel %vm21, %v700, -inf
    %v2395 = vsel %vm21, %v756, -inf
    %v2396 = vmax.f32 %v2394, %v2395
    %v2397 = vsel %vm21, %v707, -inf
    %v2398 = vsel %vm21, %v763, -inf
    %v2399 = vmax.f32 %v2397, %v2398
    %v2400 = vsel %vm21, %v714, -inf
    %v2401 = vsel %vm21, %v770, -inf
    %v2402 = vmax.f32 %v2400, %v2401
    %v2403 = vsel %vm21, %v721, -inf
    %v2404 = vsel %vm21, %v777, -inf
    %v2405 = vmax.f32 %v2403, %v2404
    %v2406 = vsel %vm21, %v728, -inf
    %v2407 = vsel %vm21, %v784, -inf
    %v2408 = vmax.f32 %v2406, %v2407
    %v2409 = vsel %vm21, %v735, -inf
    %v2410 = vsel %vm21, %v791, -inf
    %v2411 = vmax.f32 %v2409, %v2410
    %v2412 = vsel %vm21, %v742, -inf
    %v2413 = vsel %vm21, %v798, -inf
    %v2414 = vmax.f32 %v2412, %v2413
    %v2415 = vsel %vm21, %v805, -inf
    %v2416 = vsel %vm21, %v861, -inf
    %v2417 = vmax.f32 %v2415, %v2416
    %v2418 = vsel %vm21, %v812, -inf
    %v2419 = vsel %vm21, %v868, -inf
    %v2420 = vmax.f32 %v2418, %v2419
    %v2421 = vsel %vm21, %v819, -inf
    %v2422 = vsel %vm21, %v875, -inf
    %v2423 = vmax.f32 %v2421, %v2422
    %v2424 = vsel %vm21, %v826, -inf
    %v2425 = vsel %vm21, %v882, -inf
    %v2426 = vmax.f32 %v2424, %v2425
    %v2427 = vsel %vm21, %v833, -inf
    %v2428 = vsel %vm21, %v889, -inf
    %v2429 = vmax.f32 %v2427, %v2428
    %v2430 = vsel %vm21, %v840, -inf
    %v2431 = vsel %vm21, %v896, -inf
    %v2432 = vmax.f32 %v2430, %v2431
    %v2433 = vsel %vm21, %v847, -inf
    %v2434 = vsel %vm21, %v903, -inf
    %v2435 = vmax.f32 %v2433, %v2434
    %v2436 = vsel %vm21, %v854, -inf
    %v2437 = vsel %vm21, %v910, -inf
    %v2438 = vmax.f32 %v2436, %v2437
    %v2439 = vsel %vm21, %v917, -inf
    %v2440 = vsel %vm21, %v973, -inf
    %v2441 = vmax.f32 %v2439, %v2440
    %v2442 = vsel %vm21, %v924, -inf
    %v2443 = vsel %vm21, %v980, -inf
    %v2444 = vmax.f32 %v2442, %v2443
    %v2445 = vsel %vm21, %v931, -inf
    %v2446 = vsel %vm21, %v987, -inf
    %v2447 = vmax.f32 %v2445, %v2446
    %v2448 = vsel %vm21, %v938, -inf
    %v2449 = vsel %vm21, %v994, -inf
    %v2450 = vmax.f32 %v2448, %v2449
    %v2451 = vsel %vm21, %v945, -inf
    %v2452 = vsel %vm21, %v1001, -inf
    %v2453 = vmax.f32 %v2451, %v2452
    %v2454 = vsel %vm21, %v952, -inf
    %v2455 = vsel %vm21, %v1008, -inf
    %v2456 = vmax.f32 %v2454, %v2455
    %v2457 = vsel %vm21, %v959, -inf
    %v2458 = vsel %vm21, %v1015, -inf
    %v2459 = vmax.f32 %v2457, %v2458
    %v2460 = vsel %vm21, %v966, -inf
    %v2461 = vsel %vm21, %v1022, -inf
    %v2462 = vmax.f32 %v2460, %v2461
    %v2463 = vsel %vm21, %v1029, -inf
    %v2464 = vsel %vm21, %v1085, -inf
    %v2465 = vmax.f32 %v2463, %v2464
    %v2466 = vsel %vm21, %v1036, -inf
    %v2467 = vsel %vm21, %v1092, -inf
    %v2468 = vmax.f32 %v2466, %v2467
    %v2469 = vsel %vm21, %v1043, -inf
    %v2470 = vsel %vm21, %v1099, -inf
    %v2471 = vmax.f32 %v2469, %v2470
    %v2472 = vsel %vm21, %v1050, -inf
    %v2473 = vsel %vm21, %v1106, -inf
    %v2474 = vmax.f32 %v2472, %v2473
    %v2475 = vsel %vm21, %v1057, -inf
    %v2476 = vsel %vm21, %v1113, -inf
    %v2477 = vmax.f32 %v2475, %v2476
    %v2478 = vsel %vm21, %v1064, -inf
    %v2479 = vsel %vm21, %v1120, -inf
    %v2480 = vmax.f32 %v2478, %v2479
    %v2481 = vsel %vm21, %v1071, -inf
    %v2482 = vsel %vm21, %v1127, -inf
    %v2483 = vmax.f32 %v2481, %v2482
    %v2484 = vsel %vm21, %v1078, -inf
    %v2485 = vsel %vm21, %v1134, -inf
    %v2486 = vmax.f32 %v2484, %v2485
    %v2487 = vsel %vm21, %v1141, -inf
    %v2488 = vsel %vm21, %v1197, -inf
    %v2489 = vmax.f32 %v2487, %v2488
    %v2490 = vsel %vm21, %v1148, -inf
    %v2491 = vsel %vm21, %v1204, -inf
    %v2492 = vmax.f32 %v2490, %v2491
    %v2493 = vsel %vm21, %v1155, -inf
    %v2494 = vsel %vm21, %v1211, -inf
    %v2495 = vmax.f32 %v2493, %v2494
    %v2496 = vsel %vm21, %v1162, -inf
    %v2497 = vsel %vm21, %v1218, -inf
    %v2498 = vmax.f32 %v2496, %v2497
    %v2499 = vsel %vm21, %v1169, -inf
    %v2500 = vsel %vm21, %v1225, -inf
    %v2501 = vmax.f32 %v2499, %v2500
    %v2502 = vsel %vm21, %v1176, -inf
    %v2503 = vsel %vm21, %v1232, -inf
    %v2504 = vmax.f32 %v2502, %v2503
    %v2505 = vsel %vm21, %v1183, -inf
    %v2506 = vsel %vm21, %v1239, -inf
    %v2507 = vmax.f32 %v2505, %v2506
    %v2508 = vsel %vm21, %v1190, -inf
    %v2509 = vsel %vm21, %v1246, -inf
    %v2510 = vmax.f32 %v2508, %v2509
    %v2511 = vsel %vm21, %v1253, -inf
    %v2512 = vsel %vm21, %v1309, -inf
    %v2513 = vmax.f32 %v2511, %v2512
    %v2514 = vsel %vm21, %v1260, -inf
    %v2515 = vsel %vm21, %v1316, -inf
    %v2516 = vmax.f32 %v2514, %v2515
    %v2517 = vsel %vm21, %v1267, -inf
    %v2518 = vsel %vm21, %v1323, -inf
    %v2519 = vmax.f32 %v2517, %v2518
    %v2520 = vsel %vm21, %v1274, -inf
    %v2521 = vsel %vm21, %v1330, -inf
    %v2522 = vmax.f32 %v2520, %v2521
    %v2523 = vsel %vm21, %v1281, -inf
    %v2524 = vsel %vm21, %v1337, -inf
    %v2525 = vmax.f32 %v2523, %v2524
    %v2526 = vsel %vm21, %v1288, -inf
    %v2527 = vsel %vm21, %v1344, -inf
    %v2528 = vmax.f32 %v2526, %v2527
    %v2529 = vsel %vm21, %v1295, -inf
    %v2530 = vsel %vm21, %v1351, -inf
    %v2531 = vmax.f32 %v2529, %v2530
    %v2532 = vsel %vm21, %v1302, -inf
    %v2533 = vsel %vm21, %v1358, -inf
    %v2534 = vmax.f32 %v2532, %v2533
    %v2535 = vsel %vm21, %v1365, -inf
    %v2536 = vsel %vm21, %v1421, -inf
    %v2537 = vmax.f32 %v2535, %v2536
    %v2538 = vsel %vm21, %v1372, -inf
    %v2539 = vsel %vm21, %v1428, -inf
    %v2540 = vmax.f32 %v2538, %v2539
    %v2541 = vsel %vm21, %v1379, -inf
    %v2542 = vsel %vm21, %v1435, -inf
    %v2543 = vmax.f32 %v2541, %v2542
    %v2544 = vsel %vm21, %v1386, -inf
    %v2545 = vsel %vm21, %v1442, -inf
    %v2546 = vmax.f32 %v2544, %v2545
    %v2547 = vsel %vm21, %v1393, -inf
    %v2548 = vsel %vm21, %v1449, -inf
    %v2549 = vmax.f32 %v2547, %v2548
    %v2550 = vsel %vm21, %v1400, -inf
    %v2551 = vsel %vm21, %v1456, -inf
    %v2552 = vmax.f32 %v2550, %v2551
    %v2553 = vsel %vm21, %v1407, -inf
    %v2554 = vsel %vm21, %v1463, -inf
    %v2555 = vmax.f32 %v2553, %v2554
    %v2556 = vsel %vm21, %v1414, -inf
    %v2557 = vsel %vm21, %v1470, -inf
    %v2558 = vmax.f32 %v2556, %v2557
    %v2559 = vsel %vm21, %v1477, -inf
    %v2560 = vsel %vm21, %v1533, -inf
    %v2561 = vmax.f32 %v2559, %v2560
    %v2562 = vsel %vm21, %v1484, -inf
    %v2563 = vsel %vm21, %v1540, -inf
    %v2564 = vmax.f32 %v2562, %v2563
    %v2565 = vsel %vm21, %v1491, -inf
    %v2566 = vsel %vm21, %v1547, -inf
    %v2567 = vmax.f32 %v2565, %v2566
    %v2568 = vsel %vm21, %v1498, -inf
    %v2569 = vsel %vm21, %v1554, -inf
    %v2570 = vmax.f32 %v2568, %v2569
    %v2571 = vsel %vm21, %v1505, -inf
    %v2572 = vsel %vm21, %v1561, -inf
    %v2573 = vmax.f32 %v2571, %v2572
    %v2574 = vsel %vm21, %v1512, -inf
    %v2575 = vsel %vm21, %v1568, -inf
    %v2576 = vmax.f32 %v2574, %v2575
    %v2577 = vsel %vm21, %v1519, -inf
    %v2578 = vsel %vm21, %v1575, -inf
    %v2579 = vmax.f32 %v2577, %v2578
    %v2580 = vsel %vm21, %v1526, -inf
    %v2581 = vsel %vm21, %v1582, -inf
    %v2582 = vmax.f32 %v2580, %v2581
    %v2583 = vsel %vm21, %v1589, -inf
    %v2584 = vsel %vm21, %v1645, -inf
    %v2585 = vmax.f32 %v2583, %v2584
    %v2586 = vsel %vm21, %v1596, -inf
    %v2587 = vsel %vm21, %v1652, -inf
    %v2588 = vmax.f32 %v2586, %v2587
    %v2589 = vsel %vm21, %v1603, -inf
    %v2590 = vsel %vm21, %v1659, -inf
    %v2591 = vmax.f32 %v2589, %v2590
    %v2592 = vsel %vm21, %v1610, -inf
    %v2593 = vsel %vm21, %v1666, -inf
    %v2594 = vmax.f32 %v2592, %v2593
    %v2595 = vsel %vm21, %v1617, -inf
    %v2596 = vsel %vm21, %v1673, -inf
    %v2597 = vmax.f32 %v2595, %v2596
    %v2598 = vsel %vm21, %v1624, -inf
    %v2599 = vsel %vm21, %v1680, -inf
    %v2600 = vmax.f32 %v2598, %v2599
    %v2601 = vsel %vm21, %v1631, -inf
    %v2602 = vsel %vm21, %v1687, -inf
    %v2603 = vmax.f32 %v2601, %v2602
    %v2604 = vsel %vm21, %v1638, -inf
    %v2605 = vsel %vm21, %v1694, -inf
    %v2606 = vmax.f32 %v2604, %v2605
    %v2607 = vsel %vm21, %v1701, -inf
    %v2608 = vsel %vm21, %v1757, -inf
    %v2609 = vmax.f32 %v2607, %v2608
    %v2610 = vsel %vm21, %v1708, -inf
    %v2611 = vsel %vm21, %v1764, -inf
    %v2612 = vmax.f32 %v2610, %v2611
    %v2613 = vsel %vm21, %v1715, -inf
    %v2614 = vsel %vm21, %v1771, -inf
    %v2615 = vmax.f32 %v2613, %v2614
    %v2616 = vsel %vm21, %v1722, -inf
    %v2617 = vsel %vm21, %v1778, -inf
    %v2618 = vmax.f32 %v2616, %v2617
    %v2619 = vsel %vm21, %v1729, -inf
    %v2620 = vsel %vm21, %v1785, -inf
    %v2621 = vmax.f32 %v2619, %v2620
    %v2622 = vsel %vm21, %v1736, -inf
    %v2623 = vsel %vm21, %v1792, -inf
    %v2624 = vmax.f32 %v2622, %v2623
    %v2625 = vsel %vm21, %v1743, -inf
    %v2626 = vsel %vm21, %v1799, -inf
    %v2627 = vmax.f32 %v2625, %v2626
    %v2628 = vsel %vm21, %v1750, -inf
    %v2629 = vsel %vm21, %v1806, -inf
    %v2630 = vmax.f32 %v2628, %v2629
    %v2631 = vsel %vm21, %v1813, -inf
    %v2632 = vsel %vm21, %v1869, -inf
    %v2633 = vmax.f32 %v2631, %v2632
    %v2634 = vsel %vm21, %v1820, -inf
    %v2635 = vsel %vm21, %v1876, -inf
    %v2636 = vmax.f32 %v2634, %v2635
    %v2637 = vsel %vm21, %v1827, -inf
    %v2638 = vsel %vm21, %v1883, -inf
    %v2639 = vmax.f32 %v2637, %v2638
    %v2640 = vsel %vm21, %v1834, -inf
    %v2641 = vsel %vm21, %v1890, -inf
    %v2642 = vmax.f32 %v2640, %v2641
    %v2643 = vsel %vm21, %v1841, -inf
    %v2644 = vsel %vm21, %v1897, -inf
    %v2645 = vmax.f32 %v2643, %v2644
    %v2646 = vsel %vm21, %v1848, -inf
    %v2647 = vsel %vm21, %v1904, -inf
    %v2648 = vmax.f32 %v2646, %v2647
    %v2649 = vsel %vm21, %v1855, -inf
    %v2650 = vsel %vm21, %v1911, -inf
    %v2651 = vmax.f32 %v2649, %v2650
    %v2652 = vsel %vm21, %v1862, -inf
    %v2653 = vsel %vm21, %v1918, -inf
    %v2654 = vmax.f32 %v2652, %v2653
    %v2655 = vsel %vm21, %v1925, -inf
    %v2656 = vsel %vm21, %v1981, -inf
    %v2657 = vmax.f32 %v2655, %v2656
    %v2658 = vsel %vm21, %v1932, -inf
    %v2659 = vsel %vm21, %v1988, -inf
    %v2660 = vmax.f32 %v2658, %v2659
    %v2661 = vsel %vm21, %v1939, -inf
    %v2662 = vsel %vm21, %v1995, -inf
    %v2663 = vmax.f32 %v2661, %v2662
    %v2664 = vsel %vm21, %v1946, -inf
    %v2665 = vsel %vm21, %v2002, -inf
    %v2666 = vmax.f32 %v2664, %v2665
    %v2667 = vsel %vm21, %v1953, -inf
    %v2668 = vsel %vm21, %v2009, -inf
    %v2669 = vmax.f32 %v2667, %v2668
    %v2670 = vsel %vm21, %v1960, -inf
    %v2671 = vsel %vm21, %v2016, -inf
    %v2672 = vmax.f32 %v2670, %v2671
    %v2673 = vsel %vm21, %v1967, -inf
    %v2674 = vsel %vm21, %v2023, -inf
    %v2675 = vmax.f32 %v2673, %v2674
    %v2676 = vsel %vm21, %v1974, -inf
    %v2677 = vsel %vm21, %v2030, -inf
    %v2678 = vmax.f32 %v2676, %v2677
    %v2679 = vsel %vm21, %v2037, -inf
    %v2680 = vsel %vm21, %v2093, -inf
    %v2681 = vmax.f32 %v2679, %v2680
    %v2682 = vsel %vm21, %v2044, -inf
    %v2683 = vsel %vm21, %v2100, -inf
    %v2684 = vmax.f32 %v2682, %v2683
    %v2685 = vsel %vm21, %v2051, -inf
    %v2686 = vsel %vm21, %v2107, -inf
    %v2687 = vmax.f32 %v2685, %v2686
    %v2688 = vsel %vm21, %v2058, -inf
    %v2689 = vsel %vm21, %v2114, -inf
    %v2690 = vmax.f32 %v2688, %v2689
    %v2691 = vsel %vm21, %v2065, -inf
    %v2692 = vsel %vm21, %v2121, -inf
    %v2693 = vmax.f32 %v2691, %v2692
    %v2694 = vsel %vm21, %v2072, -inf
    %v2695 = vsel %vm21, %v2128, -inf
    %v2696 = vmax.f32 %v2694, %v2695
    %v2697 = vsel %vm21, %v2079, -inf
    %v2698 = vsel %vm21, %v2135, -inf
    %v2699 = vmax.f32 %v2697, %v2698
    %v2700 = vsel %vm21, %v2086, -inf
    %v2701 = vsel %vm21, %v2142, -inf
    %v2702 = vmax.f32 %v2700, %v2701
    %v2703 = vsel %vm21, %v2149, -inf
    %v2704 = vsel %vm21, %v2205, -inf
    %v2705 = vmax.f32 %v2703, %v2704
    %v2706 = vsel %vm21, %v2156, -inf
    %v2707 = vsel %vm21, %v2212, -inf
    %v2708 = vmax.f32 %v2706, %v2707
    %v2709 = vsel %vm21, %v2163, -inf
    %v2710 = vsel %vm21, %v2219, -inf
    %v2711 = vmax.f32 %v2709, %v2710
    %v2712 = vsel %vm21, %v2170, -inf
    %v2713 = vsel %vm21, %v2226, -inf
    %v2714 = vmax.f32 %v2712, %v2713
    %v2715 = vsel %vm21, %v2177, -inf
    %v2716 = vsel %vm21, %v2233, -inf
    %v2717 = vmax.f32 %v2715, %v2716
    %v2718 = vsel %vm21, %v2184, -inf
    %v2719 = vsel %vm21, %v2240, -inf
    %v2720 = vmax.f32 %v2718, %v2719
    %v2721 = vsel %vm21, %v2191, -inf
    %v2722 = vsel %vm21, %v2247, -inf
    %v2723 = vmax.f32 %v2721, %v2722
    %v2724 = vsel %vm21, %v2198, -inf
    %v2725 = vsel %vm21, %v2254, -inf
    %v2726 = vmax.f32 %v2724, %v2725
    %v2727 = vsel %vm21, %v2261, -inf
    %v2728 = vsel %vm21, %v2317, -inf
    %v2729 = vmax.f32 %v2727, %v2728
    %v2730 = vsel %vm21, %v2268, -inf
    %v2731 = vsel %vm21, %v2324, -inf
    %v2732 = vmax.f32 %v2730, %v2731
    %v2733 = vsel %vm21, %v2275, -inf
    %v2734 = vsel %vm21, %v2331, -inf
    %v2735 = vmax.f32 %v2733, %v2734
    %v2736 = vsel %vm21, %v2282, -inf
    %v2737 = vsel %vm21, %v2338, -inf
    %v2738 = vmax.f32 %v2736, %v2737
    %v2739 = vsel %vm21, %v2289, -inf
    %v2740 = vsel %vm21, %v2345, -inf
    %v2741 = vmax.f32 %v2739, %v2740
    %v2742 = vsel %vm21, %v2296, -inf
    %v2743 = vsel %vm21, %v2352, -inf
    %v2744 = vmax.f32 %v2742, %v2743
    %v2745 = vsel %vm21, %v2303, -inf
    %v2746 = vsel %vm21, %v2359, -inf
    %v2747 = vmax.f32 %v2745, %v2746
    %v2748 = vsel %vm21, %v2310, -inf
    %v2749 = vsel %vm21, %v2366, -inf
    %v2750 = vmax.f32 %v2748, %v2749
    %vm2879 = vcmask 1041409
    %v2880 = vsel %vm2879, %v2372, %v2369
    %vm2881 = vcmask 1042434
    %v2882 = vsel %vm2881, %v2375, %v2880
    %vm2883 = vcmask 1043459
    %v2884 = vsel %vm2883, %v2378, %v2882
    %vm2885 = vcmask 1044484
    %v2886 = vsel %vm2885, %v2381, %v2884
    %vm2887 = vcmask 1045509
    %v2888 = vsel %vm2887, %v2384, %v2886
    %vm2889 = vcmask 1046534
    %v2890 = vsel %vm2889, %v2387, %v2888
    %vm2891 = vcmask 1047559
    %v2892 = vsel %vm2891, %v2390, %v2890
    %v2893 = vsel %vm2879, %v2396, %v2393
    %v2894 = vsel %vm2881, %v2399, %v2893
    %v2895 = vsel %vm2883, %v2402, %v2894
    %v2896 = vsel %vm2885, %v2405, %v2895
    %v2897 = vsel %vm2887, %v2408, %v2896
    %v2898 = vsel %vm2889, %v2411, %v2897
    %v2899 = vsel %vm2891, %v2414, %v2898
    %v2900 = vsel %vm2879, %v2420, %v2417
    %v2901 = vsel %vm2881, %v2423, %v2900
    %v2902 = vsel %vm2883, %v2426, %v2901
    %v2903 = vsel %vm2885, %v2429, %v2902
    %v2904 = vsel %vm2887, %v2432, %v2903
    %v2905 = vsel %vm2889, %v2435, %v2904
    %v2906 = vsel %vm2891, %v2438, %v2905
    %v2907 = vsel %vm2879, %v2444, %v2441
    %v2908 = vsel %vm2881, %v2447, %v2907
    %v2909 = vsel %vm2883, %v2450, %v2908
    %v2910 = vsel %vm2885, %v2453, %v2909
    %v2911 = vsel %vm2887, %v2456, %v2910
    %v2912 = vsel %vm2889, %v2459, %v2911
    %v2913 = vsel %vm2891, %v2462, %v2912
    %v2914 = vsel %vm2879, %v2468, %v2465
    %v2915 = vsel %vm2881, %v2471, %v2914
    %v2916 = vsel %vm2883, %v2474, %v2915
    %v2917 = vsel %vm2885, %v2477, %v2916
    %v2918 = vsel %vm2887, %v2480, %v2917
    %v2919 = vsel %vm2889, %v2483, %v2918
    %v2920 = vsel %vm2891, %v2486, %v2919
    %v2921 = vsel %vm2879, %v2492, %v2489
    %v2922 = vsel %vm2881, %v2495, %v2921
    %v2923 = vsel %vm2883, %v2498, %v2922
    %v2924 = vsel %vm2885, %v2501, %v2923
    %v2925 = vsel %vm2887, %v2504, %v2924
    %v2926 = vsel %vm2889, %v2507, %v2925
    %v2927 = vsel %vm2891, %v2510, %v2926
    %v2928 = vsel %vm2879, %v2516, %v2513
    %v2929 = vsel %vm2881, %v2519, %v2928
    %v2930 = vsel %vm2883, %v2522, %v2929
    %v2931 = vsel %vm2885, %v2525, %v2930
    %v2932 = vsel %vm2887, %v2528, %v2931
    %v2933 = vsel %vm2889, %v2531, %v2932
    %v2934 = vsel %vm2891, %v2534, %v2933
    %v2935 = vsel %vm2879, %v2540, %v2537
    %v2936 = vsel %vm2881, %v2543, %v2935
    %v2937 = vsel %vm2883, %v2546, %v2936
    %v2938 = vsel %vm2885, %v2549, %v2937
    %v2939 = vsel %vm2887, %v2552, %v2938
    %v2940 = vsel %vm2889, %v2555, %v2939
    %v2941 = vsel %vm2891, %v2558, %v2940
    %v2942 = vsel %vm2879, %v2564, %v2561
    %v2943 = vsel %vm2881, %v2567, %v2942
    %v2944 = vsel %vm2883, %v2570, %v2943
    %v2945 = vsel %vm2885, %v2573, %v2944
    %v2946 = vsel %vm2887, %v2576, %v2945
    %v2947 = vsel %vm2889, %v2579, %v2946
    %v2948 = vsel %vm2891, %v2582, %v2947
    %v2949 = vsel %vm2879, %v2588, %v2585
    %v2950 = vsel %vm2881, %v2591, %v2949
    %v2951 = vsel %vm2883, %v2594, %v2950
    %v2952 = vsel %vm2885, %v2597, %v2951
    %v2953 = vsel %vm2887, %v2600, %v2952
    %v2954 = vsel %vm2889, %v2603, %v2953
    %v2955 = vsel %vm2891, %v2606, %v2954
    %v2956 = vsel %vm2879, %v2612, %v2609
    %v2957 = vsel %vm2881, %v2615, %v2956
    %v2958 = vsel %vm2883, %v2618, %v2957
    %v2959 = vsel %vm2885, %v2621, %v2958
    %v2960 = vsel %vm2887, %v2624, %v2959
    %v2961 = vsel %vm2889, %v2627, %v2960
    %v2962 = vsel %vm2891, %v2630, %v2961
    %v2963 = vsel %vm2879, %v2636, %v2633
    %v2964 = vsel %vm2881, %v2639, %v2963
    %v2965 = vsel %vm2883, %v2642, %v2964
    %v2966 = vsel %vm2885, %v2645, %v2965
    %v2967 = vsel %vm2887, %v2648, %v2966
    %v2968 = vsel %vm2889, %v2651, %v2967
    %v2969 = vsel %vm2891, %v2654, %v2968
    %v2970 = vsel %vm2879, %v2660, %v2657
    %v2971 = vsel %vm2881, %v2663, %v2970
    %v2972 = vsel %vm2883, %v2666, %v2971
    %v2973 = vsel %vm2885, %v2669, %v2972
    %v2974 = vsel %vm2887, %v2672, %v2973
    %v2975 = vsel %vm2889, %v2675, %v2974
    %v2976 = vsel %vm2891, %v2678, %v2975
    %v2977 = vsel %vm2879, %v2684, %v2681
    %v2978 = vsel %vm2881, %v2687, %v2977
    %v2979 = vsel %vm2883, %v2690, %v2978
    %v2980 = vsel %vm2885, %v2693, %v2979
    %v2981 = vsel %vm2887, %v2696, %v2980
    %v2982 = vsel %vm2889, %v2699, %v2981
    %v2983 = vsel %vm2891, %v2702, %v2982
    %v2984 = vsel %vm2879, %v2708, %v2705
    %v2985 = vsel %vm2881, %v2711, %v2984
    %v2986 = vsel %vm2883, %v2714, %v2985
    %v2987 = vsel %vm2885, %v2717, %v2986
    %v2988 = vsel %vm2887, %v2720, %v2987
    %v2989 = vsel %vm2889, %v2723, %v2988
    %v2990 = vsel %vm2891, %v2726, %v2989
    %v2991 = vsel %vm2879, %v2732, %v2729
    %v2992 = vsel %vm2881, %v2735, %v2991
    %v2993 = vsel %vm2883, %v2738, %v2992
    %v2994 = vsel %vm2885, %v2741, %v2993
    %v2995 = vsel %vm2887, %v2744, %v2994
    %v2996 = vsel %vm2889, %v2747, %v2995
    %v2997 = vsel %vm2891, %v2750, %v2996
    %s3014 = scalar_lea.vmem [#allocation2], 16
    %3015 = vst.msk [vmem:[%s3014 + $0x1] sm:$0xff] %vm21, %v2892
    %3016 = vst.msk [vmem:[%s3014 + $0x11] sm:$0xff] %vm21, %v2899
    %3017 = vst.msk [vmem:[%s3014 + $0x21] sm:$0xff] %vm21, %v2906
    %3018 = vst.msk [vmem:[%s3014 + $0x31] sm:$0xff] %vm21, %v2913
    %3019 = vst.msk [vmem:[%s3014 + $0x41] sm:$0xff] %vm21, %v2920
    %3020 = vst.msk [vmem:[%s3014 + $0x51] sm:$0xff] %vm21, %v2927
    %3021 = vst.msk [vmem:[%s3014 + $0x61] sm:$0xff] %vm21, %v2934
    %3022 = vst.msk [vmem:[%s3014 + $0x71] sm:$0xff] %vm21, %v2941
    %3023 = vst.msk [vmem:[%s3014 + $0xa1] sm:$0xff] %vm21, %v2948
    %3024 = vst.msk [vmem:[%s3014 + $0xb1] sm:$0xff] %vm21, %v2955
    %3025 = vst.msk [vmem:[%s3014 + $0xc1] sm:$0xff] %vm21, %v2962
    %3026 = vst.msk [vmem:[%s3014 + $0xd1] sm:$0xff] %vm21, %v2969
    %3027 = vst.msk [vmem:[%s3014 + $0xe1] sm:$0xff] %vm21, %v2976
    %3028 = vst.msk [vmem:[%s3014 + $0xf1] sm:$0xff] %vm21, %v2983
    %3029 = vst.msk [vmem:[%s3014 + $0x101] sm:$0xff] %vm21, %v2990
    %3030 = vst.msk [vmem:[%s3014 + $0x111] sm:$0xff] %vm21, %v2997
    %v3031 = vld [vmem:[#allocation2] sm:$0xff]
    %v3032 = vld [vmem:[#allocation2 + $0x10] sm:$0xff]
    %v3033 = vld [vmem:[#allocation2 + $0x20] sm:$0xff]
    %v3034 = vld [vmem:[#allocation2 + $0x30] sm:$0xff]
    %v3035 = vld [vmem:[#allocation2 + $0x40] sm:$0xff]
    %v3036 = vld [vmem:[#allocation2 + $0x50] sm:$0xff]
    %v3037 = vld [vmem:[#allocation2 + $0x60] sm:$0xff]
    %v3038 = vld [vmem:[#allocation2 + $0x70] sm:$0xff]
    %v3039 = vld [vmem:[#allocation2 + $0xa0] sm:$0xff]
    %v3040 = vld [vmem:[#allocation2 + $0xb0] sm:$0xff]
    %v3041 = vld [vmem:[#allocation2 + $0xc0] sm:$0xff]
    %v3042 = vld [vmem:[#allocation2 + $0xd0] sm:$0xff]
    %v3043 = vld [vmem:[#allocation2 + $0xe0] sm:$0xff]
    %v3044 = vld [vmem:[#allocation2 + $0xf0] sm:$0xff]
    %v3045 = vld [vmem:[#allocation2 + $0x100] sm:$0xff]
    %v3046 = vld [vmem:[#allocation2 + $0x110] sm:$0xff]
    %3047 = vst.msk [vmem:[#allocation3] sm:$0xff] %vm21, %v3031
    %3048 = vst.msk [vmem:[#allocation3 + $0x8] sm:$0xff] %vm21, %v3032
    %3049 = vst.msk [vmem:[#allocation3 + $0x10] sm:$0xff] %vm21, %v3033
    %3050 = vst.msk [vmem:[#allocation3 + $0x18] sm:$0xff] %vm21, %v3034
    %3051 = vst.msk [vmem:[#allocation3 + $0x20] sm:$0xff] %vm21, %v3035
    %3052 = vst.msk [vmem:[#allocation3 + $0x28] sm:$0xff] %vm21, %v3036
    %3053 = vst.msk [vmem:[#allocation3 + $0x30] sm:$0xff] %vm21, %v3037
    %3054 = vst.msk [vmem:[#allocation3 + $0x38] sm:$0xff] %vm21, %v3038
    %3055 = vst.msk [vmem:[#allocation3 + $0x40] sm:$0xff] %vm21, %v3039
    %3056 = vst.msk [vmem:[#allocation3 + $0x48] sm:$0xff] %vm21, %v3040
    %3057 = vst.msk [vmem:[#allocation3 + $0x50] sm:$0xff] %vm21, %v3041
    %3058 = vst.msk [vmem:[#allocation3 + $0x58] sm:$0xff] %vm21, %v3042
    %3059 = vst.msk [vmem:[#allocation3 + $0x60] sm:$0xff] %vm21, %v3043
    %3060 = vst.msk [vmem:[#allocation3 + $0x68] sm:$0xff] %vm21, %v3044
    %3061 = vst.msk [vmem:[#allocation3 + $0x70] sm:$0xff] %vm21, %v3045
    %3062 = vst.msk [vmem:[#allocation3 + $0x78] sm:$0xff] %vm21, %v3046
    %v3063 = vld [vmem:[#allocation2 + $0x1] sm:$0xff]
    %v3064 = vld [vmem:[#allocation2 + $0x11] sm:$0xff]
    %v3065 = vld [vmem:[#allocation2 + $0x21] sm:$0xff]
    %v3066 = vld [vmem:[#allocation2 + $0x31] sm:$0xff]
    %v3067 = vld [vmem:[#allocation2 + $0x41] sm:$0xff]
    %v3068 = vld [vmem:[#allocation2 + $0x51] sm:$0xff]
    %v3069 = vld [vmem:[#allocation2 + $0x61] sm:$0xff]
    %v3070 = vld [vmem:[#allocation2 + $0x71] sm:$0xff]
    %v3071 = vld [vmem:[#allocation2 + $0xa1] sm:$0xff]
    %v3072 = vld [vmem:[#allocation2 + $0xb1] sm:$0xff]
    %v3073 = vld [vmem:[#allocation2 + $0xc1] sm:$0xff]
    %v3074 = vld [vmem:[#allocation2 + $0xd1] sm:$0xff]
    %v3075 = vld [vmem:[#allocation2 + $0xe1] sm:$0xff]
    %v3076 = vld [vmem:[#allocation2 + $0xf1] sm:$0xff]
    %v3077 = vld [vmem:[#allocation2 + $0x101] sm:$0xff]
    %v3078 = vld [vmem:[#allocation2 + $0x111] sm:$0xff]
    %3095 = vrot.lane.b32.xlu0 %v3063, 4
    %v3096 = vpop.permute.xlu0 %3095
    %3097 = vrot.lane.b32.xlu0 %v3064, 4
    %v3098 = vpop.permute.xlu0 %3097
    %3099 = vrot.lane.b32.xlu0 %v3065, 4
    %v3100 = vpop.permute.xlu0 %3099
    %3101 = vrot.lane.b32.xlu0 %v3066, 4
    %v3102 = vpop.permute.xlu0 %3101
    %3103 = vrot.lane.b32.xlu0 %v3067, 4
    %v3104 = vpop.permute.xlu0 %3103
    %3105 = vrot.lane.b32.xlu0 %v3068, 4
    %v3106 = vpop.permute.xlu0 %3105
    %3107 = vrot.lane.b32.xlu0 %v3069, 4
    %v3108 = vpop.permute.xlu0 %3107
    %3109 = vrot.lane.b32.xlu0 %v3070, 4
    %v3110 = vpop.permute.xlu0 %3109
    %3111 = vrot.lane.b32.xlu0 %v3071, 4
    %v3112 = vpop.permute.xlu0 %3111
    %3113 = vrot.lane.b32.xlu0 %v3072, 4
    %v3114 = vpop.permute.xlu0 %3113
    %3115 = vrot.lane.b32.xlu0 %v3073, 4
    %v3116 = vpop.permute.xlu0 %3115
    %3117 = vrot.lane.b32.xlu0 %v3074, 4
    %v3118 = vpop.permute.xlu0 %3117
    %3119 = vrot.lane.b32.xlu0 %v3075, 4
    %v3120 = vpop.permute.xlu0 %3119
    %3121 = vrot.lane.b32.xlu0 %v3076, 4
    %v3122 = vpop.permute.xlu0 %3121
    %3123 = vrot.lane.b32.xlu0 %v3077, 4
    %v3124 = vpop.permute.xlu0 %3123
    %3125 = vrot.lane.b32.xlu0 %v3078, 4
    %v3126 = vpop.permute.xlu0 %3125
    %vm3143 = vcmask 64544
    %3144 = vst.msk [vmem:[#allocation3] sm:$0xff] %vm3143, %v3096
    %3145 = vst.msk [vmem:[#allocation3 + $0x8] sm:$0xff] %vm3143, %v3098
    %3146 = vst.msk [vmem:[#allocation3 + $0x10] sm:$0xff] %vm3143, %v3100
    %3147 = vst.msk [vmem:[#allocation3 + $0x18] sm:$0xff] %vm3143, %v3102
    %3148 = vst.msk [vmem:[#allocation3 + $0x20] sm:$0xff] %vm3143, %v3104
    %3149 = vst.msk [vmem:[#allocation3 + $0x28] sm:$0xff] %vm3143, %v3106
    %3150 = vst.msk [vmem:[#allocation3 + $0x30] sm:$0xff] %vm3143, %v3108
    %3151 = vst.msk [vmem:[#allocation3 + $0x38] sm:$0xff] %vm3143, %v3110
    %3152 = vst.msk [vmem:[#allocation3 + $0x40] sm:$0xff] %vm3143, %v3112
    %3153 = vst.msk [vmem:[#allocation3 + $0x48] sm:$0xff] %vm3143, %v3114
    %3154 = vst.msk [vmem:[#allocation3 + $0x50] sm:$0xff] %vm3143, %v3116
    %3155 = vst.msk [vmem:[#allocation3 + $0x58] sm:$0xff] %vm3143, %v3118
    %3156 = vst.msk [vmem:[#allocation3 + $0x60] sm:$0xff] %vm3143, %v3120
    %3157 = vst.msk [vmem:[#allocation3 + $0x68] sm:$0xff] %vm3143, %v3122
    %3158 = vst.msk [vmem:[#allocation3 + $0x70] sm:$0xff] %vm3143, %v3124
    %3159 = vst.msk [vmem:[#allocation3 + $0x78] sm:$0xff] %vm3143, %v3126
    %v3160 = vld [vmem:[#allocation2 + $0x2] sm:$0xff]
    %v3161 = vld [vmem:[#allocation2 + $0x12] sm:$0xff]
    %v3162 = vld [vmem:[#allocation2 + $0x22] sm:$0xff]
    %v3163 = vld [vmem:[#allocation2 + $0x32] sm:$0xff]
    %v3164 = vld [vmem:[#allocation2 + $0x42] sm:$0xff]
    %v3165 = vld [vmem:[#allocation2 + $0x52] sm:$0xff]
    %v3166 = vld [vmem:[#allocation2 + $0x62] sm:$0xff]
    %v3167 = vld [vmem:[#allocation2 + $0x72] sm:$0xff]
    %v3168 = vld [vmem:[#allocation2 + $0xa2] sm:$0xff]
    %v3169 = vld [vmem:[#allocation2 + $0xb2] sm:$0xff]
    %v3170 = vld [vmem:[#allocation2 + $0xc2] sm:$0xff]
    %v3171 = vld [vmem:[#allocation2 + $0xd2] sm:$0xff]
    %v3172 = vld [vmem:[#allocation2 + $0xe2] sm:$0xff]
    %v3173 = vld [vmem:[#allocation2 + $0xf2] sm:$0xff]
    %v3174 = vld [vmem:[#allocation2 + $0x102] sm:$0xff]
    %v3175 = vld [vmem:[#allocation2 + $0x112] sm:$0xff]
    %3192 = vrot.lane.b32.xlu0 %v3160, 8
    %v3193 = vpop.permute.xlu0 %3192
    %3194 = vrot.lane.b32.xlu0 %v3161, 8
    %v3195 = vpop.permute.xlu0 %3194
    %3196 = vrot.lane.b32.xlu0 %v3162, 8
    %v3197 = vpop.permute.xlu0 %3196
    %3198 = vrot.lane.b32.xlu0 %v3163, 8
    %v3199 = vpop.permute.xlu0 %3198
    %3200 = vrot.lane.b32.xlu0 %v3164, 8
    %v3201 = vpop.permute.xlu0 %3200
    %3202 = vrot.lane.b32.xlu0 %v3165, 8
    %v3203 = vpop.permute.xlu0 %3202
    %3204 = vrot.lane.b32.xlu0 %v3166, 8
    %v3205 = vpop.permute.xlu0 %3204
    %3206 = vrot.lane.b32.xlu0 %v3167, 8
    %v3207 = vpop.permute.xlu0 %3206
    %3208 = vrot.lane.b32.xlu0 %v3168, 8
    %v3209 = vpop.permute.xlu0 %3208
    %3210 = vrot.lane.b32.xlu0 %v3169, 8
    %v3211 = vpop.permute.xlu0 %3210
    %3212 = vrot.lane.b32.xlu0 %v3170, 8
    %v3213 = vpop.permute.xlu0 %3212
    %3214 = vrot.lane.b32.xlu0 %v3171, 8
    %v3215 = vpop.permute.xlu0 %3214
    %3216 = vrot.lane.b32.xlu0 %v3172, 8
    %v3217 = vpop.permute.xlu0 %3216
    %3218 = vrot.lane.b32.xlu0 %v3173, 8
    %v3219 = vpop.permute.xlu0 %3218
    %3220 = vrot.lane.b32.xlu0 %v3174, 8
    %v3221 = vpop.permute.xlu0 %3220
    %3222 = vrot.lane.b32.xlu0 %v3175, 8
    %v3223 = vpop.permute.xlu0 %3222
    %vm3240 = vcmask 97344
    %3241 = vst.msk [vmem:[#allocation3] sm:$0xff] %vm3240, %v3193
    %3242 = vst.msk [vmem:[#allocation3 + $0x8] sm:$0xff] %vm3240, %v3195
    %3243 = vst.msk [vmem:[#allocation3 + $0x10] sm:$0xff] %vm3240, %v3197
    %3244 = vst.msk [vmem:[#allocation3 + $0x18] sm:$0xff] %vm3240, %v3199
    %3245 = vst.msk [vmem:[#allocation3 + $0x20] sm:$0xff] %vm3240, %v3201
    %3246 = vst.msk [vmem:[#allocation3 + $0x28] sm:$0xff] %vm3240, %v3203
    %3247 = vst.msk [vmem:[#allocation3 + $0x30] sm:$0xff] %vm3240, %v3205
    %3248 = vst.msk [vmem:[#allocation3 + $0x38] sm:$0xff] %vm3240, %v3207
    %3249 = vst.msk [vmem:[#allocation3 + $0x40] sm:$0xff] %vm3240, %v3209
    %3250 = vst.msk [vmem:[#allocation3 + $0x48] sm:$0xff] %vm3240, %v3211
    %3251 = vst.msk [vmem:[#allocation3 + $0x50] sm:$0xff] %vm3240, %v3213
    %3252 = vst.msk [vmem:[#allocation3 + $0x58] sm:$0xff] %vm3240, %v3215
    %3253 = vst.msk [vmem:[#allocation3 + $0x60] sm:$0xff] %vm3240, %v3217
    %3254 = vst.msk [vmem:[#allocation3 + $0x68] sm:$0xff] %vm3240, %v3219
    %3255 = vst.msk [vmem:[#allocation3 + $0x70] sm:$0xff] %vm3240, %v3221
    %3256 = vst.msk [vmem:[#allocation3 + $0x78] sm:$0xff] %vm3240, %v3223
    %v3257 = vld [vmem:[%s3014] sm:$0xff]
    %v3258 = vld [vmem:[%s3014 + $0x10] sm:$0xff]
    %v3259 = vld [vmem:[%s3014 + $0x20] sm:$0xff]
    %v3260 = vld [vmem:[%s3014 + $0x30] sm:$0xff]
    %v3261 = vld [vmem:[%s3014 + $0x40] sm:$0xff]
    %v3262 = vld [vmem:[%s3014 + $0x50] sm:$0xff]
    %v3263 = vld [vmem:[%s3014 + $0x60] sm:$0xff]
    %v3264 = vld [vmem:[%s3014 + $0x70] sm:$0xff]
    %v3265 = vld [vmem:[%s3014 + $0xa0] sm:$0xff]
    %v3266 = vld [vmem:[%s3014 + $0xb0] sm:$0xff]
    %v3267 = vld [vmem:[%s3014 + $0xc0] sm:$0xff]
    %v3268 = vld [vmem:[%s3014 + $0xd0] sm:$0xff]
    %v3269 = vld [vmem:[%s3014 + $0xe0] sm:$0xff]
    %v3270 = vld [vmem:[%s3014 + $0xf0] sm:$0xff]
    %v3271 = vld [vmem:[%s3014 + $0x100] sm:$0xff]
    %v3272 = vld [vmem:[%s3014 + $0x110] sm:$0xff]
    %3289 = vrot.lane.b32.xlu0 %v3257, 12
    %v3290 = vpop.permute.xlu0 %3289
    %3291 = vrot.lane.b32.xlu0 %v3258, 12
    %v3292 = vpop.permute.xlu0 %3291
    %3293 = vrot.lane.b32.xlu0 %v3259, 12
    %v3294 = vpop.permute.xlu0 %3293
    %3295 = vrot.lane.b32.xlu0 %v3260, 12
    %v3296 = vpop.permute.xlu0 %3295
    %3297 = vrot.lane.b32.xlu0 %v3261, 12
    %v3298 = vpop.permute.xlu0 %3297
    %3299 = vrot.lane.b32.xlu0 %v3262, 12
    %v3300 = vpop.permute.xlu0 %3299
    %3301 = vrot.lane.b32.xlu0 %v3263, 12
    %v3302 = vpop.permute.xlu0 %3301
    %3303 = vrot.lane.b32.xlu0 %v3264, 12
    %v3304 = vpop.permute.xlu0 %3303
    %3305 = vrot.lane.b32.xlu0 %v3265, 12
    %v3306 = vpop.permute.xlu0 %3305
    %3307 = vrot.lane.b32.xlu0 %v3266, 12
    %v3308 = vpop.permute.xlu0 %3307
    %3309 = vrot.lane.b32.xlu0 %v3267, 12
    %v3310 = vpop.permute.xlu0 %3309
    %3311 = vrot.lane.b32.xlu0 %v3268, 12
    %v3312 = vpop.permute.xlu0 %3311
    %3313 = vrot.lane.b32.xlu0 %v3269, 12
    %v3314 = vpop.permute.xlu0 %3313
    %3315 = vrot.lane.b32.xlu0 %v3270, 12
    %v3316 = vpop.permute.xlu0 %3315
    %3317 = vrot.lane.b32.xlu0 %v3271, 12
    %v3318 = vpop.permute.xlu0 %3317
    %3319 = vrot.lane.b32.xlu0 %v3272, 12
    %v3320 = vpop.permute.xlu0 %3319
    %vm3337 = vcmask 130144
    %3338 = vst.msk [vmem:[#allocation3] sm:$0xff] %vm3337, %v3290
    %3339 = vst.msk [vmem:[#allocation3 + $0x8] sm:$0xff] %vm3337, %v3292
    %3340 = vst.msk [vmem:[#allocation3 + $0x10] sm:$0xff] %vm3337, %v3294
    %3341 = vst.msk [vmem:[#allocation3 + $0x18] sm:$0xff] %vm3337, %v3296
    %3342 = vst.msk [vmem:[#allocation3 + $0x20] sm:$0xff] %vm3337, %v3298
    %3343 = vst.msk [vmem:[#allocation3 + $0x28] sm:$0xff] %vm3337, %v3300
    %3344 = vst.msk [vmem:[#allocation3 + $0x30] sm:$0xff] %vm3337, %v3302
    %3345 = vst.msk [vmem:[#allocation3 + $0x38] sm:$0xff] %vm3337, %v3304
    %3346 = vst.msk [vmem:[#allocation3 + $0x40] sm:$0xff] %vm3337, %v3306
    %3347 = vst.msk [vmem:[#allocation3 + $0x48] sm:$0xff] %vm3337, %v3308
    %3348 = vst.msk [vmem:[#allocation3 + $0x50] sm:$0xff] %vm3337, %v3310
    %3349 = vst.msk [vmem:[#allocation3 + $0x58] sm:$0xff] %vm3337, %v3312
    %3350 = vst.msk [vmem:[#allocation3 + $0x60] sm:$0xff] %vm3337, %v3314
    %3351 = vst.msk [vmem:[#allocation3 + $0x68] sm:$0xff] %vm3337, %v3316
    %3352 = vst.msk [vmem:[#allocation3 + $0x70] sm:$0xff] %vm3337, %v3318
    %3353 = vst.msk [vmem:[#allocation3 + $0x78] sm:$0xff] %vm3337, %v3320
    %v3354 = vld [vmem:[%s3014 + $0x1] sm:$0xff]
    %v3355 = vld [vmem:[%s3014 + $0x11] sm:$0xff]
    %v3356 = vld [vmem:[%s3014 + $0x21] sm:$0xff]
    %v3357 = vld [vmem:[%s3014 + $0x31] sm:$0xff]
    %v3358 = vld [vmem:[%s3014 + $0x41] sm:$0xff]
    %v3359 = vld [vmem:[%s3014 + $0x51] sm:$0xff]
    %v3360 = vld [vmem:[%s3014 + $0x61] sm:$0xff]
    %v3361 = vld [vmem:[%s3014 + $0x71] sm:$0xff]
    %v3362 = vld [vmem:[%s3014 + $0xa1] sm:$0xff]
    %v3363 = vld [vmem:[%s3014 + $0xb1] sm:$0xff]
    %v3364 = vld [vmem:[%s3014 + $0xc1] sm:$0xff]
    %v3365 = vld [vmem:[%s3014 + $0xd1] sm:$0xff]
    %v3366 = vld [vmem:[%s3014 + $0xe1] sm:$0xff]
    %v3367 = vld [vmem:[%s3014 + $0xf1] sm:$0xff]
    %v3368 = vld [vmem:[%s3014 + $0x101] sm:$0xff]
    %v3369 = vld [vmem:[%s3014 + $0x111] sm:$0xff]
    %3386 = vrot.lane.b32.xlu0 %v3354, 16
    %v3387 = vpop.permute.xlu0 %3386
    %3388 = vrot.lane.b32.xlu0 %v3355, 16
    %v3389 = vpop.permute.xlu0 %3388
    %3390 = vrot.lane.b32.xlu0 %v3356, 16
    %v3391 = vpop.permute.xlu0 %3390
    %3392 = vrot.lane.b32.xlu0 %v3357, 16
    %v3393 = vpop.permute.xlu0 %3392
    %3394 = vrot.lane.b32.xlu0 %v3358, 16
    %v3395 = vpop.permute.xlu0 %3394
    %3396 = vrot.lane.b32.xlu0 %v3359, 16
    %v3397 = vpop.permute.xlu0 %3396
    %3398 = vrot.lane.b32.xlu0 %v3360, 16
    %v3399 = vpop.permute.xlu0 %3398
    %3400 = vrot.lane.b32.xlu0 %v3361, 16
    %v3401 = vpop.permute.xlu0 %3400
    %3402 = vrot.lane.b32.xlu0 %v3362, 16
    %v3403 = vpop.permute.xlu0 %3402
    %3404 = vrot.lane.b32.xlu0 %v3363, 16
    %v3405 = vpop.permute.xlu0 %3404
    %3406 = vrot.lane.b32.xlu0 %v3364, 16
    %v3407 = vpop.permute.xlu0 %3406
    %3408 = vrot.lane.b32.xlu0 %v3365, 16
    %v3409 = vpop.permute.xlu0 %3408
    %3410 = vrot.lane.b32.xlu0 %v3366, 16
    %v3411 = vpop.permute.xlu0 %3410
    %3412 = vrot.lane.b32.xlu0 %v3367, 16
    %v3413 = vpop.permute.xlu0 %3412
    %3414 = vrot.lane.b32.xlu0 %v3368, 16
    %v3415 = vpop.permute.xlu0 %3414
    %3416 = vrot.lane.b32.xlu0 %v3369, 16
    %v3417 = vpop.permute.xlu0 %3416
    %vm3434 = vcmask 162944
    %3435 = vst.msk [vmem:[#allocation3] sm:$0xff] %vm3434, %v3387
    %3436 = vst.msk [vmem:[#allocation3 + $0x8] sm:$0xff] %vm3434, %v3389
    %3437 = vst.msk [vmem:[#allocation3 + $0x10] sm:$0xff] %vm3434, %v3391
    %3438 = vst.msk [vmem:[#allocation3 + $0x18] sm:$0xff] %vm3434, %v3393
    %3439 = vst.msk [vmem:[#allocation3 + $0x20] sm:$0xff] %vm3434, %v3395
    %3440 = vst.msk [vmem:[#allocation3 + $0x28] sm:$0xff] %vm3434, %v3397
    %3441 = vst.msk [vmem:[#allocation3 + $0x30] sm:$0xff] %vm3434, %v3399
    %3442 = vst.msk [vmem:[#allocation3 + $0x38] sm:$0xff] %vm3434, %v3401
    %3443 = vst.msk [vmem:[#allocation3 + $0x40] sm:$0xff] %vm3434, %v3403
    %3444 = vst.msk [vmem:[#allocation3 + $0x48] sm:$0xff] %vm3434, %v3405
    %3445 = vst.msk [vmem:[#allocation3 + $0x50] sm:$0xff] %vm3434, %v3407
    %3446 = vst.msk [vmem:[#allocation3 + $0x58] sm:$0xff] %vm3434, %v3409
    %3447 = vst.msk [vmem:[#allocation3 + $0x60] sm:$0xff] %vm3434, %v3411
    %3448 = vst.msk [vmem:[#allocation3 + $0x68] sm:$0xff] %vm3434, %v3413
    %3449 = vst.msk [vmem:[#allocation3 + $0x70] sm:$0xff] %vm3434, %v3415
    %3450 = vst.msk [vmem:[#allocation3 + $0x78] sm:$0xff] %vm3434, %v3417
    %v3451 = vld [vmem:[%s3014 + $0x2] sm:$0xff]
    %v3452 = vld [vmem:[%s3014 + $0x12] sm:$0xff]
    %v3453 = vld [vmem:[%s3014 + $0x22] sm:$0xff]
    %v3454 = vld [vmem:[%s3014 + $0x32] sm:$0xff]
    %v3455 = vld [vmem:[%s3014 + $0x42] sm:$0xff]
    %v3456 = vld [vmem:[%s3014 + $0x52] sm:$0xff]
    %v3457 = vld [vmem:[%s3014 + $0x62] sm:$0xff]
    %v3458 = vld [vmem:[%s3014 + $0x72] sm:$0xff]
    %v3459 = vld [vmem:[%s3014 + $0xa2] sm:$0xff]
    %v3460 = vld [vmem:[%s3014 + $0xb2] sm:$0xff]
    %v3461 = vld [vmem:[%s3014 + $0xc2] sm:$0xff]
    %v3462 = vld [vmem:[%s3014 + $0xd2] sm:$0xff]
    %v3463 = vld [vmem:[%s3014 + $0xe2] sm:$0xff]
    %v3464 = vld [vmem:[%s3014 + $0xf2] sm:$0xff]
    %v3465 = vld [vmem:[%s3014 + $0x102] sm:$0xff]
    %v3466 = vld [vmem:[%s3014 + $0x112] sm:$0xff]
    %3483 = vrot.lane.b32.xlu0 %v3451, 20
    %v3484 = vpop.permute.xlu0 %3483
    %3485 = vrot.lane.b32.xlu0 %v3452, 20
    %v3486 = vpop.permute.xlu0 %3485
    %3487 = vrot.lane.b32.xlu0 %v3453, 20
    %v3488 = vpop.permute.xlu0 %3487
    %3489 = vrot.lane.b32.xlu0 %v3454, 20
    %v3490 = vpop.permute.xlu0 %3489
    %3491 = vrot.lane.b32.xlu0 %v3455, 20
    %v3492 = vpop.permute.xlu0 %3491
    %3493 = vrot.lane.b32.xlu0 %v3456, 20
    %v3494 = vpop.permute.xlu0 %3493
    %3495 = vrot.lane.b32.xlu0 %v3457, 20
    %v3496 = vpop.permute.xlu0 %3495
    %3497 = vrot.lane.b32.xlu0 %v3458, 20
    %v3498 = vpop.permute.xlu0 %3497
    %3499 = vrot.lane.b32.xlu0 %v3459, 20
    %v3500 = vpop.permute.xlu0 %3499
    %3501 = vrot.lane.b32.xlu0 %v3460, 20
    %v3502 = vpop.permute.xlu0 %3501
    %3503 = vrot.lane.b32.xlu0 %v3461, 20
    %v3504 = vpop.permute.xlu0 %3503
    %3505 = vrot.lane.b32.xlu0 %v3462, 20
    %v3506 = vpop.permute.xlu0 %3505
    %3507 = vrot.lane.b32.xlu0 %v3463, 20
    %v3508 = vpop.permute.xlu0 %3507
    %3509 = vrot.lane.b32.xlu0 %v3464, 20
    %v3510 = vpop.permute.xlu0 %3509
    %3511 = vrot.lane.b32.xlu0 %v3465, 20
    %v3512 = vpop.permute.xlu0 %3511
    %3513 = vrot.lane.b32.xlu0 %v3466, 20
    %v3514 = vpop.permute.xlu0 %3513
    %vm3531 = vcmask 195744
    %3532 = vst.msk [vmem:[#allocation3] sm:$0xff] %vm3531, %v3484
    %3533 = vst.msk [vmem:[#allocation3 + $0x8] sm:$0xff] %vm3531, %v3486
    %3534 = vst.msk [vmem:[#allocation3 + $0x10] sm:$0xff] %vm3531, %v3488
    %3535 = vst.msk [vmem:[#allocation3 + $0x18] sm:$0xff] %vm3531, %v3490
    %3536 = vst.msk [vmem:[#allocation3 + $0x20] sm:$0xff] %vm3531, %v3492
    %3537 = vst.msk [vmem:[#allocation3 + $0x28] sm:$0xff] %vm3531, %v3494
    %3538 = vst.msk [vmem:[#allocation3 + $0x30] sm:$0xff] %vm3531, %v3496
    %3539 = vst.msk [vmem:[#allocation3 + $0x38] sm:$0xff] %vm3531, %v3498
    %3540 = vst.msk [vmem:[#allocation3 + $0x40] sm:$0xff] %vm3531, %v3500
    %3541 = vst.msk [vmem:[#allocation3 + $0x48] sm:$0xff] %vm3531, %v3502
    %3542 = vst.msk [vmem:[#allocation3 + $0x50] sm:$0xff] %vm3531, %v3504
    %3543 = vst.msk [vmem:[#allocation3 + $0x58] sm:$0xff] %vm3531, %v3506
    %3544 = vst.msk [vmem:[#allocation3 + $0x60] sm:$0xff] %vm3531, %v3508
    %3545 = vst.msk [vmem:[#allocation3 + $0x68] sm:$0xff] %vm3531, %v3510
    %3546 = vst.msk [vmem:[#allocation3 + $0x70] sm:$0xff] %vm3531, %v3512
    %3547 = vst.msk [vmem:[#allocation3 + $0x78] sm:$0xff] %vm3531, %v3514
    %s3548 = scalar_lea.vmem [#allocation2], 32
    %v3549 = vld [vmem:[%s3548] sm:$0xff]
    %v3550 = vld [vmem:[%s3548 + $0x10] sm:$0xff]
    %v3551 = vld [vmem:[%s3548 + $0x20] sm:$0xff]
    %v3552 = vld [vmem:[%s3548 + $0x30] sm:$0xff]
    %v3553 = vld [vmem:[%s3548 + $0x40] sm:$0xff]
    %v3554 = vld [vmem:[%s3548 + $0x50] sm:$0xff]
    %v3555 = vld [vmem:[%s3548 + $0x60] sm:$0xff]
    %v3556 = vld [vmem:[%s3548 + $0x70] sm:$0xff]
    %v3557 = vld [vmem:[%s3548 + $0xa0] sm:$0xff]
    %v3558 = vld [vmem:[%s3548 + $0xb0] sm:$0xff]
    %v3559 = vld [vmem:[%s3548 + $0xc0] sm:$0xff]
    %v3560 = vld [vmem:[%s3548 + $0xd0] sm:$0xff]
    %v3561 = vld [vmem:[%s3548 + $0xe0] sm:$0xff]
    %v3562 = vld [vmem:[%s3548 + $0xf0] sm:$0xff]
    %v3563 = vld [vmem:[%s3548 + $0x100] sm:$0xff]
    %v3564 = vld [vmem:[%s3548 + $0x110] sm:$0xff]
    %3581 = vrot.lane.b32.xlu0 %v3549, 24
    %v3582 = vpop.permute.xlu0 %3581
    %3583 = vrot.lane.b32.xlu0 %v3550, 24
    %v3584 = vpop.permute.xlu0 %3583
    %3585 = vrot.lane.b32.xlu0 %v3551, 24
    %v3586 = vpop.permute.xlu0 %3585
    %3587 = vrot.lane.b32.xlu0 %v3552, 24
    %v3588 = vpop.permute.xlu0 %3587
    %3589 = vrot.lane.b32.xlu0 %v3553, 24
    %v3590 = vpop.permute.xlu0 %3589
    %3591 = vrot.lane.b32.xlu0 %v3554, 24
    %v3592 = vpop.permute.xlu0 %3591
    %3593 = vrot.lane.b32.xlu0 %v3555, 24
    %v3594 = vpop.permute.xlu0 %3593
    %3595 = vrot.lane.b32.xlu0 %v3556, 24
    %v3596 = vpop.permute.xlu0 %3595
    %3597 = vrot.lane.b32.xlu0 %v3557, 24
    %v3598 = vpop.permute.xlu0 %3597
    %3599 = vrot.lane.b32.xlu0 %v3558, 24
    %v3600 = vpop.permute.xlu0 %3599
    %3601 = vrot.lane.b32.xlu0 %v3559, 24
    %v3602 = vpop.permute.xlu0 %3601
    %3603 = vrot.lane.b32.xlu0 %v3560, 24
    %v3604 = vpop.permute.xlu0 %3603
    %3605 = vrot.lane.b32.xlu0 %v3561, 24
    %v3606 = vpop.permute.xlu0 %3605
    %3607 = vrot.lane.b32.xlu0 %v3562, 24
    %v3608 = vpop.permute.xlu0 %3607
    %3609 = vrot.lane.b32.xlu0 %v3563, 24
    %v3610 = vpop.permute.xlu0 %3609
    %3611 = vrot.lane.b32.xlu0 %v3564, 24
    %v3612 = vpop.permute.xlu0 %3611
    %vm3629 = vcmask 228544
    %3630 = vst.msk [vmem:[#allocation3] sm:$0xff] %vm3629, %v3582
    %3631 = vst.msk [vmem:[#allocation3 + $0x8] sm:$0xff] %vm3629, %v3584
    %3632 = vst.msk [vmem:[#allocation3 + $0x10] sm:$0xff] %vm3629, %v3586
    %3633 = vst.msk [vmem:[#allocation3 + $0x18] sm:$0xff] %vm3629, %v3588
    %3634 = vst.msk [vmem:[#allocation3 + $0x20] sm:$0xff] %vm3629, %v3590
    %3635 = vst.msk [vmem:[#allocation3 + $0x28] sm:$0xff] %vm3629, %v3592
    %3636 = vst.msk [vmem:[#allocation3 + $0x30] sm:$0xff] %vm3629, %v3594
    %3637 = vst.msk [vmem:[#allocation3 + $0x38] sm:$0xff] %vm3629, %v3596
    %3638 = vst.msk [vmem:[#allocation3 + $0x40] sm:$0xff] %vm3629, %v3598
    %3639 = vst.msk [vmem:[#allocation3 + $0x48] sm:$0xff] %vm3629, %v3600
    %3640 = vst.msk [vmem:[#allocation3 + $0x50] sm:$0xff] %vm3629, %v3602
    %3641 = vst.msk [vmem:[#allocation3 + $0x58] sm:$0xff] %vm3629, %v3604
    %3642 = vst.msk [vmem:[#allocation3 + $0x60] sm:$0xff] %vm3629, %v3606
    %3643 = vst.msk [vmem:[#allocation3 + $0x68] sm:$0xff] %vm3629, %v3608
    %3644 = vst.msk [vmem:[#allocation3 + $0x70] sm:$0xff] %vm3629, %v3610
    %3645 = vst.msk [vmem:[#allocation3 + $0x78] sm:$0xff] %vm3629, %v3612
    %v3646 = vld [vmem:[%s3548 + $0x1] sm:$0xff]
    %v3647 = vld [vmem:[%s3548 + $0x11] sm:$0xff]
    %v3648 = vld [vmem:[%s3548 + $0x21] sm:$0xff]
    %v3649 = vld [vmem:[%s3548 + $0x31] sm:$0xff]
    %v3650 = vld [vmem:[%s3548 + $0x41] sm:$0xff]
    %v3651 = vld [vmem:[%s3548 + $0x51] sm:$0xff]
    %v3652 = vld [vmem:[%s3548 + $0x61] sm:$0xff]
    %v3653 = vld [vmem:[%s3548 + $0x71] sm:$0xff]
    %v3654 = vld [vmem:[%s3548 + $0xa1] sm:$0xff]
    %v3655 = vld [vmem:[%s3548 + $0xb1] sm:$0xff]
    %v3656 = vld [vmem:[%s3548 + $0xc1] sm:$0xff]
    %v3657 = vld [vmem:[%s3548 + $0xd1] sm:$0xff]
    %v3658 = vld [vmem:[%s3548 + $0xe1] sm:$0xff]
    %v3659 = vld [vmem:[%s3548 + $0xf1] sm:$0xff]
    %v3660 = vld [vmem:[%s3548 + $0x101] sm:$0xff]
    %v3661 = vld [vmem:[%s3548 + $0x111] sm:$0xff]
    %3678 = vrot.lane.b32.xlu0 %v3646, 28
    %v3679 = vpop.permute.xlu0 %3678
    %3680 = vrot.lane.b32.xlu0 %v3647, 28
    %v3681 = vpop.permute.xlu0 %3680
    %3682 = vrot.lane.b32.xlu0 %v3648, 28
    %v3683 = vpop.permute.xlu0 %3682
    %3684 = vrot.lane.b32.xlu0 %v3649, 28
    %v3685 = vpop.permute.xlu0 %3684
    %3686 = vrot.lane.b32.xlu0 %v3650, 28
    %v3687 = vpop.permute.xlu0 %3686
    %3688 = vrot.lane.b32.xlu0 %v3651, 28
    %v3689 = vpop.permute.xlu0 %3688
    %3690 = vrot.lane.b32.xlu0 %v3652, 28
    %v3691 = vpop.permute.xlu0 %3690
    %3692 = vrot.lane.b32.xlu0 %v3653, 28
    %v3693 = vpop.permute.xlu0 %3692
    %3694 = vrot.lane.b32.xlu0 %v3654, 28
    %v3695 = vpop.permute.xlu0 %3694
    %3696 = vrot.lane.b32.xlu0 %v3655, 28
    %v3697 = vpop.permute.xlu0 %3696
    %3698 = vrot.lane.b32.xlu0 %v3656, 28
    %v3699 = vpop.permute.xlu0 %3698
    %3700 = vrot.lane.b32.xlu0 %v3657, 28
    %v3701 = vpop.permute.xlu0 %3700
    %3702 = vrot.lane.b32.xlu0 %v3658, 28
    %v3703 = vpop.permute.xlu0 %3702
    %3704 = vrot.lane.b32.xlu0 %v3659, 28
    %v3705 = vpop.permute.xlu0 %3704
    %3706 = vrot.lane.b32.xlu0 %v3660, 28
    %v3707 = vpop.permute.xlu0 %3706
    %3708 = vrot.lane.b32.xlu0 %v3661, 28
    %v3709 = vpop.permute.xlu0 %3708
    %vm3726 = vcmask 261344
    %3727 = vst.msk [vmem:[#allocation3] sm:$0xff] %vm3726, %v3679
    %3728 = vst.msk [vmem:[#allocation3 + $0x8] sm:$0xff] %vm3726, %v3681
    %3729 = vst.msk [vmem:[#allocation3 + $0x10] sm:$0xff] %vm3726, %v3683
    %3730 = vst.msk [vmem:[#allocation3 + $0x18] sm:$0xff] %vm3726, %v3685
    %3731 = vst.msk [vmem:[#allocation3 + $0x20] sm:$0xff] %vm3726, %v3687
    %3732 = vst.msk [vmem:[#allocation3 + $0x28] sm:$0xff] %vm3726, %v3689
    %3733 = vst.msk [vmem:[#allocation3 + $0x30] sm:$0xff] %vm3726, %v3691
    %3734 = vst.msk [vmem:[#allocation3 + $0x38] sm:$0xff] %vm3726, %v3693
    %3735 = vst.msk [vmem:[#allocation3 + $0x40] sm:$0xff] %vm3726, %v3695
    %3736 = vst.msk [vmem:[#allocation3 + $0x48] sm:$0xff] %vm3726, %v3697
    %3737 = vst.msk [vmem:[#allocation3 + $0x50] sm:$0xff] %vm3726, %v3699
    %3738 = vst.msk [vmem:[#allocation3 + $0x58] sm:$0xff] %vm3726, %v3701
    %3739 = vst.msk [vmem:[#allocation3 + $0x60] sm:$0xff] %vm3726, %v3703
    %3740 = vst.msk [vmem:[#allocation3 + $0x68] sm:$0xff] %vm3726, %v3705
    %3741 = vst.msk [vmem:[#allocation3 + $0x70] sm:$0xff] %vm3726, %v3707
    %3742 = vst.msk [vmem:[#allocation3 + $0x78] sm:$0xff] %vm3726, %v3709
    %v3743 = vld [vmem:[%s3548 + $0x2] sm:$0xff]
    %v3744 = vld [vmem:[%s3548 + $0x12] sm:$0xff]
    %v3745 = vld [vmem:[%s3548 + $0x22] sm:$0xff]
    %v3746 = vld [vmem:[%s3548 + $0x32] sm:$0xff]
    %v3747 = vld [vmem:[%s3548 + $0x42] sm:$0xff]
    %v3748 = vld [vmem:[%s3548 + $0x52] sm:$0xff]
    %v3749 = vld [vmem:[%s3548 + $0x62] sm:$0xff]
    %v3750 = vld [vmem:[%s3548 + $0x72] sm:$0xff]
    %v3751 = vld [vmem:[%s3548 + $0xa2] sm:$0xff]
    %v3752 = vld [vmem:[%s3548 + $0xb2] sm:$0xff]
    %v3753 = vld [vmem:[%s3548 + $0xc2] sm:$0xff]
    %v3754 = vld [vmem:[%s3548 + $0xd2] sm:$0xff]
    %v3755 = vld [vmem:[%s3548 + $0xe2] sm:$0xff]
    %v3756 = vld [vmem:[%s3548 + $0xf2] sm:$0xff]
    %v3757 = vld [vmem:[%s3548 + $0x102] sm:$0xff]
    %v3758 = vld [vmem:[%s3548 + $0x112] sm:$0xff]
    %3775 = vrot.lane.b32.xlu0 %v3743, 32
    %v3776 = vpop.permute.xlu0 %3775
    %3777 = vrot.lane.b32.xlu0 %v3744, 32
    %v3778 = vpop.permute.xlu0 %3777
    %3779 = vrot.lane.b32.xlu0 %v3745, 32
    %v3780 = vpop.permute.xlu0 %3779
    %3781 = vrot.lane.b32.xlu0 %v3746, 32
    %v3782 = vpop.permute.xlu0 %3781
    %3783 = vrot.lane.b32.xlu0 %v3747, 32
    %v3784 = vpop.permute.xlu0 %3783
    %3785 = vrot.lane.b32.xlu0 %v3748, 32
    %v3786 = vpop.permute.xlu0 %3785
    %3787 = vrot.lane.b32.xlu0 %v3749, 32
    %v3788 = vpop.permute.xlu0 %3787
    %3789 = vrot.lane.b32.xlu0 %v3750, 32
    %v3790 = vpop.permute.xlu0 %3789
    %3791 = vrot.lane.b32.xlu0 %v3751, 32
    %v3792 = vpop.permute.xlu0 %3791
    %3793 = vrot.lane.b32.xlu0 %v3752, 32
    %v3794 = vpop.permute.xlu0 %3793
    %3795 = vrot.lane.b32.xlu0 %v3753, 32
    %v3796 = vpop.permute.xlu0 %3795
    %3797 = vrot.lane.b32.xlu0 %v3754, 32
    %v3798 = vpop.permute.xlu0 %3797
    %3799 = vrot.lane.b32.xlu0 %v3755, 32
    %v3800 = vpop.permute.xlu0 %3799
    %3801 = vrot.lane.b32.xlu0 %v3756, 32
    %v3802 = vpop.permute.xlu0 %3801
    %3803 = vrot.lane.b32.xlu0 %v3757, 32
    %v3804 = vpop.permute.xlu0 %3803
    %3805 = vrot.lane.b32.xlu0 %v3758, 32
    %v3806 = vpop.permute.xlu0 %3805
    %vm3823 = vcmask 294144
    %3824 = vst.msk [vmem:[#allocation3] sm:$0xff] %vm3823, %v3776
    %3825 = vst.msk [vmem:[#allocation3 + $0x8] sm:$0xff] %vm3823, %v3778
    %3826 = vst.msk [vmem:[#allocation3 + $0x10] sm:$0xff] %vm3823, %v3780
    %3827 = vst.msk [vmem:[#allocation3 + $0x18] sm:$0xff] %vm3823, %v3782
    %3828 = vst.msk [vmem:[#allocation3 + $0x20] sm:$0xff] %vm3823, %v3784
    %3829 = vst.msk [vmem:[#allocation3 + $0x28] sm:$0xff] %vm3823, %v3786
    %3830 = vst.msk [vmem:[#allocation3 + $0x30] sm:$0xff] %vm3823, %v3788
    %3831 = vst.msk [vmem:[#allocation3 + $0x38] sm:$0xff] %vm3823, %v3790
    %3832 = vst.msk [vmem:[#allocation3 + $0x40] sm:$0xff] %vm3823, %v3792
    %3833 = vst.msk [vmem:[#allocation3 + $0x48] sm:$0xff] %vm3823, %v3794
    %3834 = vst.msk [vmem:[#allocation3 + $0x50] sm:$0xff] %vm3823, %v3796
    %3835 = vst.msk [vmem:[#allocation3 + $0x58] sm:$0xff] %vm3823, %v3798
    %3836 = vst.msk [vmem:[#allocation3 + $0x60] sm:$0xff] %vm3823, %v3800
    %3837 = vst.msk [vmem:[#allocation3 + $0x68] sm:$0xff] %vm3823, %v3802
    %3838 = vst.msk [vmem:[#allocation3 + $0x70] sm:$0xff] %vm3823, %v3804
    %3839 = vst.msk [vmem:[#allocation3 + $0x78] sm:$0xff] %vm3823, %v3806
    %v3840 = vld [vmem:[#allocation3] sm:$0xff]
    %v3841 = vld [vmem:[#allocation3 + $0x8] sm:$0xff]
    %v3842 = vld [vmem:[#allocation3 + $0x10] sm:$0xff]
    %v3843 = vld [vmem:[#allocation3 + $0x18] sm:$0xff]
    %v3844 = vld [vmem:[#allocation3 + $0x20] sm:$0xff]
    %v3845 = vld [vmem:[#allocation3 + $0x28] sm:$0xff]
    %v3846 = vld [vmem:[#allocation3 + $0x30] sm:$0xff]
    %v3847 = vld [vmem:[#allocation3 + $0x38] sm:$0xff]
    %v3848 = vld [vmem:[#allocation3 + $0x40] sm:$0xff]
    %v3849 = vld [vmem:[#allocation3 + $0x48] sm:$0xff]
    %v3850 = vld [vmem:[#allocation3 + $0x50] sm:$0xff]
    %v3851 = vld [vmem:[#allocation3 + $0x58] sm:$0xff]
    %v3852 = vld [vmem:[#allocation3 + $0x60] sm:$0xff]
    %v3853 = vld [vmem:[#allocation3 + $0x68] sm:$0xff]
    %v3854 = vld [vmem:[#allocation3 + $0x70] sm:$0xff]
    %v3855 = vld [vmem:[#allocation3 + $0x78] sm:$0xff]
    %v3856 = vld [vmem:[%s1] sm:$0xff]
    %v3857 = vld [vmem:[%s1 + $0x8] sm:$0xff]
    %v3858 = vld [vmem:[%s1 + $0x10] sm:$0xff]
    %v3859 = vld [vmem:[%s1 + $0x18] sm:$0xff]
    %v3860 = vld [vmem:[%s1 + $0x20] sm:$0xf]
    %v3861 = vld [vmem:[%s2] sm:$0x1]
    %v3863 = vperm.slane %v3861, 0
    %vm3865 = vcmask 293888
    %v3867 = vsel %vm3865, %v3840, 0
    %v3870 = vsel %vm3865, %v3841, 0
    %v3873 = vsel %vm3865, %v3842, 0
    %v3876 = vsel %vm3865, %v3843, 0
    %v3879 = vsel %vm3865, %v3844, 0
    %v3882 = vsel %vm3865, %v3845, 0
    %v3885 = vsel %vm3865, %v3846, 0
    %v3888 = vsel %vm3865, %v3847, 0
    %v3891 = vsel %vm3865, %v3848, 0
    %v3894 = vsel %vm3865, %v3849, 0
    %v3897 = vsel %vm3865, %v3850, 0
    %v3900 = vsel %vm3865, %v3851, 0
    %v3903 = vsel %vm3865, %v3852, 0
    %v3906 = vsel %vm3865, %v3853, 0
    %v3909 = vsel %vm3865, %v3854, 0
    %v3912 = vsel %vm3865, %v3855, 0
    %vm3914 = vcmask 1043456
    %v3916 = vsel %vm3914, %v3860, 0
    %3918 = vmatpush.msra.mxu0 0.0
    %3919 = vmatpush.msra.mxu0 0.0
    %3920 = vmatpush.msra.mxu0 0.0
    %3921 = vmatpush.msra.mxu0 0.0
    %3922 = vmatpush.msra.mxu0 0.0
    %3923 = vmatpush.msra.mxu0 0.0
    %3924 = vmatpush.msra.mxu0 0.0
    %3925 = vmatpush.msra.mxu0 0.0
    %3926 = vmatpush.msra.mxu0 0.0
    %3927 = vmatpush.msra.mxu0 0.0
    %3928 = vmatpush.msra.mxu0 0.0
    %3929 = vmatpush.msra.mxu0 %v3916
    %3930 = vmatpush.msra.mxu0 %v3859
    %3931 = vmatpush.msra.mxu0 %v3858
    %3932 = vmatpush.msra.mxu0 %v3857
    %3933 = vmatpush.msra.mxu0 %v3856
    %3934 = vmatmul.f32.gmra.mxu0 %v3867
    %v3935 = vpop.f32.mrf.mxu0
    %v3936 = vadd.f32 %v3863, %v3935
    %3937 = vmatmul.f32.gmra.mxu0 %v3870
    %v3938 = vpop.f32.mrf.mxu0
    %v3939 = vadd.f32 %v3863, %v3938
    %3940 = vmatmul.f32.gmra.mxu0 %v3873
    %v3941 = vpop.f32.mrf.mxu0
    %v3942 = vadd.f32 %v3863, %v3941
    %3943 = vmatmul.f32.gmra.mxu0 %v3876
    %v3944 = vpop.f32.mrf.mxu0
    %v3945 = vadd.f32 %v3863, %v3944
    %3946 = vmatmul.f32.gmra.mxu0 %v3879
    %v3947 = vpop.f32.mrf.mxu0
    %v3948 = vadd.f32 %v3863, %v3947
    %3949 = vmatmul.f32.gmra.mxu0 %v3882
    %v3950 = vpop.f32.mrf.mxu0
    %v3951 = vadd.f32 %v3863, %v3950
    %3952 = vmatmul.f32.gmra.mxu0 %v3885
    %v3953 = vpop.f32.mrf.mxu0
    %v3954 = vadd.f32 %v3863, %v3953
    %3955 = vmatmul.f32.gmra.mxu0 %v3888
    %v3956 = vpop.f32.mrf.mxu0
    %v3957 = vadd.f32 %v3863, %v3956
    %3958 = vmatmul.f32.gmra.mxu0 %v3891
    %v3959 = vpop.f32.mrf.mxu0
    %v3960 = vadd.f32 %v3863, %v3959
    %3961 = vmatmul.f32.gmra.mxu0 %v3894
    %v3962 = vpop.f32.mrf.mxu0
    %v3963 = vadd.f32 %v3863, %v3962
    %3964 = vmatmul.f32.gmra.mxu0 %v3897
    %v3965 = vpop.f32.mrf.mxu0
    %v3966 = vadd.f32 %v3863, %v3965
    %3967 = vmatmul.f32.gmra.mxu0 %v3900
    %v3968 = vpop.f32.mrf.mxu0
    %v3969 = vadd.f32 %v3863, %v3968
    %3970 = vmatmul.f32.gmra.mxu0 %v3903
    %v3971 = vpop.f32.mrf.mxu0
    %v3972 = vadd.f32 %v3863, %v3971
    %3973 = vmatmul.f32.gmra.mxu0 %v3906
    %v3974 = vpop.f32.mrf.mxu0
    %v3975 = vadd.f32 %v3863, %v3974
    %3976 = vmatmul.f32.gmra.mxu0 %v3909
    %v3977 = vpop.f32.mrf.mxu0
    %v3978 = vadd.f32 %v3863, %v3977
    %3979 = vmatmul.f32.gmra.mxu0 %v3912
    %v3980 = vpop.f32.mrf.mxu0
    %v3981 = vadd.f32 %v3863, %v3980
    %3982 = vdwg.mxu0
    %v3983 = vmax.f32 %v3936, 0.0
    %v3984 = vmax.f32 %v3939, 0.0
    %v3985 = vmax.f32 %v3942, 0.0
    %v3986 = vmax.f32 %v3945, 0.0
    %v3987 = vmax.f32 %v3948, 0.0
    %v3988 = vmax.f32 %v3951, 0.0
    %v3989 = vmax.f32 %v3954, 0.0
    %v3990 = vmax.f32 %v3957, 0.0
    %v3991 = vmax.f32 %v3960, 0.0
    %v3992 = vmax.f32 %v3963, 0.0
    %v3993 = vmax.f32 %v3966, 0.0
    %v3994 = vmax.f32 %v3969, 0.0
    %v3995 = vmax.f32 %v3972, 0.0
    %v3996 = vmax.f32 %v3975, 0.0
    %v3997 = vmax.f32 %v3978, 0.0
    %v3998 = vmax.f32 %v3981, 0.0
    %vm3999 = vcmask 64512
    %4000 = vst.msk [vmem:[#allocation4] sm:$0xff] %vm3999, 0.0
    %vm4001 = vcmask 58368
    %4002 = vst.msk [vmem:[#allocation4 + $0x8] sm:$0x3] %vm4001, 0.0
    %4003 = vst.msk [vmem:[#allocation4 + $0x10] sm:$0xff] %vm3999, 0.0
    %4004 = vst.msk [vmem:[#allocation4 + $0x18] sm:$0x3] %vm4001, 0.0
    %4005 = vst.msk [vmem:[#allocation4 + $0x20] sm:$0xff] %vm3999, 0.0
    %4006 = vst.msk [vmem:[#allocation4 + $0x28] sm:$0x3] %vm4001, 0.0
    %4007 = vst.msk [vmem:[#allocation4 + $0x30] sm:$0xff] %vm3999, 0.0
    %4008 = vst.msk [vmem:[#allocation4 + $0x38] sm:$0x3] %vm4001, 0.0
    %4009 = vst.msk [vmem:[#allocation4 + $0x40] sm:$0xff] %vm3999, 0.0
    %4010 = vst.msk [vmem:[#allocation4 + $0x48] sm:$0x3] %vm4001, 0.0
    %4011 = vst.msk [vmem:[#allocation4 + $0x50] sm:$0xff] %vm3999, 0.0
    %4012 = vst.msk [vmem:[#allocation4 + $0x58] sm:$0x3] %vm4001, 0.0
    %4013 = vst.msk [vmem:[#allocation4 + $0x60] sm:$0xff] %vm3999, 0.0
    %4014 = vst.msk [vmem:[#allocation4 + $0x68] sm:$0x3] %vm4001, 0.0
    %4015 = vst.msk [vmem:[#allocation4 + $0x70] sm:$0xff] %vm3999, 0.0
    %4016 = vst.msk [vmem:[#allocation4 + $0x78] sm:$0x3] %vm4001, 0.0
    %4017 = vst.msk [vmem:[#allocation4 + $0x80] sm:$0xff] %vm3999, 0.0
    %4018 = vst.msk [vmem:[#allocation4 + $0x88] sm:$0x3] %vm4001, 0.0
    %4019 = vst.msk [vmem:[#allocation4 + $0x90] sm:$0xff] %vm3999, 0.0
    %4020 = vst.msk [vmem:[#allocation4 + $0x98] sm:$0x3] %vm4001, 0.0
    %4021 = vst.msk [vmem:[#allocation4 + $0xa0] sm:$0xff] %vm3999, 0.0
    %4022 = vst.msk [vmem:[#allocation4 + $0xa8] sm:$0x3] %vm4001, 0.0
    %4023 = vst.msk [vmem:[#allocation4 + $0xb0] sm:$0xff] %vm3999, 0.0
    %4024 = vst.msk [vmem:[#allocation4 + $0xb8] sm:$0x3] %vm4001, 0.0
    %4025 = vst.msk [vmem:[#allocation4 + $0xc0] sm:$0xff] %vm3999, 0.0
    %4026 = vst.msk [vmem:[#allocation4 + $0xc8] sm:$0x3] %vm4001, 0.0
    %4027 = vst.msk [vmem:[#allocation4 + $0xd0] sm:$0xff] %vm3999, 0.0
    %4028 = vst.msk [vmem:[#allocation4 + $0xd8] sm:$0x3] %vm4001, 0.0
    %4029 = vst.msk [vmem:[#allocation4 + $0xe0] sm:$0xff] %vm3999, 0.0
    %4030 = vst.msk [vmem:[#allocation4 + $0xe8] sm:$0x3] %vm4001, 0.0
    %4031 = vst.msk [vmem:[#allocation4 + $0xf0] sm:$0xff] %vm3999, 0.0
    %4032 = vst.msk [vmem:[#allocation4 + $0xf8] sm:$0x3] %vm4001, 0.0
    %4033 = vst.msk [vmem:[#allocation4 + $0x100] sm:$0xff] %vm3999, 0.0
    %4034 = vst.msk [vmem:[#allocation4 + $0x108] sm:$0x3] %vm4001, 0.0
    %4035 = vst.msk [vmem:[#allocation4 + $0x110] sm:$0xff] %vm3999, 0.0
    %4036 = vst.msk [vmem:[#allocation4 + $0x118] sm:$0x3] %vm4001, 0.0
    %4037 = vst.msk [vmem:[#allocation4 + $0x120] sm:$0xff] %vm3999, 0.0
    %4038 = vst.msk [vmem:[#allocation4 + $0x128] sm:$0x3] %vm4001, 0.0
    %4039 = vst.msk [vmem:[#allocation4 + $0x130] sm:$0xff] %vm3999, 0.0
    %4040 = vst.msk [vmem:[#allocation4 + $0x138] sm:$0x3] %vm4001, 0.0
    %s4041 = scalar_lea.vmem [#allocation4], 16
    %4042 = vst.msk [vmem:[%s4041 + $0x1] sm:$0xff] %vm3999, %v3983
    %4043 = vst.msk [vmem:[%s4041 + $0x11] sm:$0xff] %vm3999, %v3984
    %4044 = vst.msk [vmem:[%s4041 + $0x21] sm:$0xff] %vm3999, %v3985
    %4045 = vst.msk [vmem:[%s4041 + $0x31] sm:$0xff] %vm3999, %v3986
    %4046 = vst.msk [vmem:[%s4041 + $0x41] sm:$0xff] %vm3999, %v3987
    %4047 = vst.msk [vmem:[%s4041 + $0x51] sm:$0xff] %vm3999, %v3988
    %4048 = vst.msk [vmem:[%s4041 + $0x61] sm:$0xff] %vm3999, %v3989
    %4049 = vst.msk [vmem:[%s4041 + $0x71] sm:$0xff] %vm3999, %v3990
    %4050 = vst.msk [vmem:[%s4041 + $0xa1] sm:$0xff] %vm3999, %v3991
    %4051 = vst.msk [vmem:[%s4041 + $0xb1] sm:$0xff] %vm3999, %v3992
    %4052 = vst.msk [vmem:[%s4041 + $0xc1] sm:$0xff] %vm3999, %v3993
    %4053 = vst.msk [vmem:[%s4041 + $0xd1] sm:$0xff] %vm3999, %v3994
    %4054 = vst.msk [vmem:[%s4041 + $0xe1] sm:$0xff] %vm3999, %v3995
    %4055 = vst.msk [vmem:[%s4041 + $0xf1] sm:$0xff] %vm3999, %v3996
    %4056 = vst.msk [vmem:[%s4041 + $0x101] sm:$0xff] %vm3999, %v3997
    %4057 = vst.msk [vmem:[%s4041 + $0x111] sm:$0xff] %vm3999, %v3998
    %v4058 = vld [vmem:[#allocation4] sm:$0xff]
    %v4059 = vld [vmem:[#allocation4 + $0x10] sm:$0xff]
    %v4060 = vld [vmem:[#allocation4 + $0x20] sm:$0xff]
    %v4061 = vld [vmem:[#allocation4 + $0x30] sm:$0xff]
    %v4062 = vld [vmem:[#allocation4 + $0x40] sm:$0xff]
    %v4063 = vld [vmem:[#allocation4 + $0x50] sm:$0xff]
    %v4064 = vld [vmem:[#allocation4 + $0x60] sm:$0xff]
    %v4065 = vld [vmem:[#allocation4 + $0x70] sm:$0xff]
    %v4066 = vld [vmem:[#allocation4 + $0xa0] sm:$0xff]
    %v4067 = vld [vmem:[#allocation4 + $0xb0] sm:$0xff]
    %v4068 = vld [vmem:[#allocation4 + $0xc0] sm:$0xff]
    %v4069 = vld [vmem:[#allocation4 + $0xd0] sm:$0xff]
    %v4070 = vld [vmem:[#allocation4 + $0xe0] sm:$0xff]
    %v4071 = vld [vmem:[#allocation4 + $0xf0] sm:$0xff]
    %v4072 = vld [vmem:[#allocation4 + $0x100] sm:$0xff]
    %v4073 = vld [vmem:[#allocation4 + $0x110] sm:$0xff]
    %4074 = vst.msk [vmem:[#allocation5] sm:$0xff] %vm3999, %v4058
    %4075 = vst.msk [vmem:[#allocation5 + $0x8] sm:$0xff] %vm3999, %v4059
    %4076 = vst.msk [vmem:[#allocation5 + $0x10] sm:$0xff] %vm3999, %v4060
    %4077 = vst.msk [vmem:[#allocation5 + $0x18] sm:$0xff] %vm3999, %v4061
    %4078 = vst.msk [vmem:[#allocation5 + $0x20] sm:$0xff] %vm3999, %v4062
    %4079 = vst.msk [vmem:[#allocation5 + $0x28] sm:$0xff] %vm3999, %v4063
    %4080 = vst.msk [vmem:[#allocation5 + $0x30] sm:$0xff] %vm3999, %v4064
    %4081 = vst.msk [vmem:[#allocation5 + $0x38] sm:$0xff] %vm3999, %v4065
    %4082 = vst.msk [vmem:[#allocation5 + $0x40] sm:$0xff] %vm3999, %v4066
    %4083 = vst.msk [vmem:[#allocation5 + $0x48] sm:$0xff] %vm3999, %v4067
    %4084 = vst.msk [vmem:[#allocation5 + $0x50] sm:$0xff] %vm3999, %v4068
    %4085 = vst.msk [vmem:[#allocation5 + $0x58] sm:$0xff] %vm3999, %v4069
    %4086 = vst.msk [vmem:[#allocation5 + $0x60] sm:$0xff] %vm3999, %v4070
    %4087 = vst.msk [vmem:[#allocation5 + $0x68] sm:$0xff] %vm3999, %v4071
    %4088 = vst.msk [vmem:[#allocation5 + $0x70] sm:$0xff] %vm3999, %v4072
    %4089 = vst.msk [vmem:[#allocation5 + $0x78] sm:$0xff] %vm3999, %v4073
    %v4090 = vld [vmem:[#allocation4 + $0x1] sm:$0xff]
    %v4091 = vld [vmem:[#allocation4 + $0x11] sm:$0xff]
    %v4092 = vld [vmem:[#allocation4 + $0x21] sm:$0xff]
    %v4093 = vld [vmem:[#allocation4 + $0x31] sm:$0xff]
    %v4094 = vld [vmem:[#allocation4 + $0x41] sm:$0xff]
    %v4095 = vld [vmem:[#allocation4 + $0x51] sm:$0xff]
    %v4096 = vld [vmem:[#allocation4 + $0x61] sm:$0xff]
    %v4097 = vld [vmem:[#allocation4 + $0x71] sm:$0xff]
    %v4098 = vld [vmem:[#allocation4 + $0xa1] sm:$0xff]
    %v4099 = vld [vmem:[#allocation4 + $0xb1] sm:$0xff]
    %v4100 = vld [vmem:[#allocation4 + $0xc1] sm:$0xff]
    %v4101 = vld [vmem:[#allocation4 + $0xd1] sm:$0xff]
    %v4102 = vld [vmem:[#allocation4 + $0xe1] sm:$0xff]
    %v4103 = vld [vmem:[#allocation4 + $0xf1] sm:$0xff]
    %v4104 = vld [vmem:[#allocation4 + $0x101] sm:$0xff]
    %v4105 = vld [vmem:[#allocation4 + $0x111] sm:$0xff]
    %4122 = vrot.lane.b32.xlu0 %v4090, 8
    %v4123 = vpop.permute.xlu0 %4122
    %4124 = vrot.lane.b32.xlu0 %v4091, 8
    %v4125 = vpop.permute.xlu0 %4124
    %4126 = vrot.lane.b32.xlu0 %v4092, 8
    %v4127 = vpop.permute.xlu0 %4126
    %4128 = vrot.lane.b32.xlu0 %v4093, 8
    %v4129 = vpop.permute.xlu0 %4128
    %4130 = vrot.lane.b32.xlu0 %v4094, 8
    %v4131 = vpop.permute.xlu0 %4130
    %4132 = vrot.lane.b32.xlu0 %v4095, 8
    %v4133 = vpop.permute.xlu0 %4132
    %4134 = vrot.lane.b32.xlu0 %v4096, 8
    %v4135 = vpop.permute.xlu0 %4134
    %4136 = vrot.lane.b32.xlu0 %v4097, 8
    %v4137 = vpop.permute.xlu0 %4136
    %4138 = vrot.lane.b32.xlu0 %v4098, 8
    %v4139 = vpop.permute.xlu0 %4138
    %4140 = vrot.lane.b32.xlu0 %v4099, 8
    %v4141 = vpop.permute.xlu0 %4140
    %4142 = vrot.lane.b32.xlu0 %v4100, 8
    %v4143 = vpop.permute.xlu0 %4142
    %4144 = vrot.lane.b32.xlu0 %v4101, 8
    %v4145 = vpop.permute.xlu0 %4144
    %4146 = vrot.lane.b32.xlu0 %v4102, 8
    %v4147 = vpop.permute.xlu0 %4146
    %4148 = vrot.lane.b32.xlu0 %v4103, 8
    %v4149 = vpop.permute.xlu0 %4148
    %4150 = vrot.lane.b32.xlu0 %v4104, 8
    %v4151 = vpop.permute.xlu0 %4150
    %4152 = vrot.lane.b32.xlu0 %v4105, 8
    %v4153 = vpop.permute.xlu0 %4152
    %vm4170 = vcmask 130112
    %4171 = vst.msk [vmem:[#allocation5] sm:$0xff] %vm4170, %v4123
    %4172 = vst.msk [vmem:[#allocation5 + $0x8] sm:$0xff] %vm4170, %v4125
    %4173 = vst.msk [vmem:[#allocation5 + $0x10] sm:$0xff] %vm4170, %v4127
    %4174 = vst.msk [vmem:[#allocation5 + $0x18] sm:$0xff] %vm4170, %v4129
    %4175 = vst.msk [vmem:[#allocation5 + $0x20] sm:$0xff] %vm4170, %v4131
    %4176 = vst.msk [vmem:[#allocation5 + $0x28] sm:$0xff] %vm4170, %v4133
    %4177 = vst.msk [vmem:[#allocation5 + $0x30] sm:$0xff] %vm4170, %v4135
    %4178 = vst.msk [vmem:[#allocation5 + $0x38] sm:$0xff] %vm4170, %v4137
    %4179 = vst.msk [vmem:[#allocation5 + $0x40] sm:$0xff] %vm4170, %v4139
    %4180 = vst.msk [vmem:[#allocation5 + $0x48] sm:$0xff] %vm4170, %v4141
    %4181 = vst.msk [vmem:[#allocation5 + $0x50] sm:$0xff] %vm4170, %v4143
    %4182 = vst.msk [vmem:[#allocation5 + $0x58] sm:$0xff] %vm4170, %v4145
    %4183 = vst.msk [vmem:[#allocation5 + $0x60] sm:$0xff] %vm4170, %v4147
    %4184 = vst.msk [vmem:[#allocation5 + $0x68] sm:$0xff] %vm4170, %v4149
    %4185 = vst.msk [vmem:[#allocation5 + $0x70] sm:$0xff] %vm4170, %v4151
    %4186 = vst.msk [vmem:[#allocation5 + $0x78] sm:$0xff] %vm4170, %v4153
    %v4187 = vld [vmem:[#allocation4 + $0x2] sm:$0xff]
    %v4188 = vld [vmem:[#allocation4 + $0x12] sm:$0xff]
    %v4189 = vld [vmem:[#allocation4 + $0x22] sm:$0xff]
    %v4190 = vld [vmem:[#allocation4 + $0x32] sm:$0xff]
    %v4191 = vld [vmem:[#allocation4 + $0x42] sm:$0xff]
    %v4192 = vld [vmem:[#allocation4 + $0x52] sm:$0xff]
    %v4193 = vld [vmem:[#allocation4 + $0x62] sm:$0xff]
    %v4194 = vld [vmem:[#allocation4 + $0x72] sm:$0xff]
    %v4195 = vld [vmem:[#allocation4 + $0xa2] sm:$0xff]
    %v4196 = vld [vmem:[#allocation4 + $0xb2] sm:$0xff]
    %v4197 = vld [vmem:[#allocation4 + $0xc2] sm:$0xff]
    %v4198 = vld [vmem:[#allocation4 + $0xd2] sm:$0xff]
    %v4199 = vld [vmem:[#allocation4 + $0xe2] sm:$0xff]
    %v4200 = vld [vmem:[#allocation4 + $0xf2] sm:$0xff]
    %v4201 = vld [vmem:[#allocation4 + $0x102] sm:$0xff]
    %v4202 = vld [vmem:[#allocation4 + $0x112] sm:$0xff]
    %4219 = vrot.lane.b32.xlu0 %v4187, 16
    %v4220 = vpop.permute.xlu0 %4219
    %4221 = vrot.lane.b32.xlu0 %v4188, 16
    %v4222 = vpop.permute.xlu0 %4221
    %4223 = vrot.lane.b32.xlu0 %v4189, 16
    %v4224 = vpop.permute.xlu0 %4223
    %4225 = vrot.lane.b32.xlu0 %v4190, 16
    %v4226 = vpop.permute.xlu0 %4225
    %4227 = vrot.lane.b32.xlu0 %v4191, 16
    %v4228 = vpop.permute.xlu0 %4227
    %4229 = vrot.lane.b32.xlu0 %v4192, 16
    %v4230 = vpop.permute.xlu0 %4229
    %4231 = vrot.lane.b32.xlu0 %v4193, 16
    %v4232 = vpop.permute.xlu0 %4231
    %4233 = vrot.lane.b32.xlu0 %v4194, 16
    %v4234 = vpop.permute.xlu0 %4233
    %4235 = vrot.lane.b32.xlu0 %v4195, 16
    %v4236 = vpop.permute.xlu0 %4235
    %4237 = vrot.lane.b32.xlu0 %v4196, 16
    %v4238 = vpop.permute.xlu0 %4237
    %4239 = vrot.lane.b32.xlu0 %v4197, 16
    %v4240 = vpop.permute.xlu0 %4239
    %4241 = vrot.lane.b32.xlu0 %v4198, 16
    %v4242 = vpop.permute.xlu0 %4241
    %4243 = vrot.lane.b32.xlu0 %v4199, 16
    %v4244 = vpop.permute.xlu0 %4243
    %4245 = vrot.lane.b32.xlu0 %v4200, 16
    %v4246 = vpop.permute.xlu0 %4245
    %4247 = vrot.lane.b32.xlu0 %v4201, 16
    %v4248 = vpop.permute.xlu0 %4247
    %4249 = vrot.lane.b32.xlu0 %v4202, 16
    %v4250 = vpop.permute.xlu0 %4249
    %vm4267 = vcmask 195712
    %4268 = vst.msk [vmem:[#allocation5] sm:$0xff] %vm4267, %v4220
    %4269 = vst.msk [vmem:[#allocation5 + $0x8] sm:$0xff] %vm4267, %v4222
    %4270 = vst.msk [vmem:[#allocation5 + $0x10] sm:$0xff] %vm4267, %v4224
    %4271 = vst.msk [vmem:[#allocation5 + $0x18] sm:$0xff] %vm4267, %v4226
    %4272 = vst.msk [vmem:[#allocation5 + $0x20] sm:$0xff] %vm4267, %v4228
    %4273 = vst.msk [vmem:[#allocation5 + $0x28] sm:$0xff] %vm4267, %v4230
    %4274 = vst.msk [vmem:[#allocation5 + $0x30] sm:$0xff] %vm4267, %v4232
    %4275 = vst.msk [vmem:[#allocation5 + $0x38] sm:$0xff] %vm4267, %v4234
    %4276 = vst.msk [vmem:[#allocation5 + $0x40] sm:$0xff] %vm4267, %v4236
    %4277 = vst.msk [vmem:[#allocation5 + $0x48] sm:$0xff] %vm4267, %v4238
    %4278 = vst.msk [vmem:[#allocation5 + $0x50] sm:$0xff] %vm4267, %v4240
    %4279 = vst.msk [vmem:[#allocation5 + $0x58] sm:$0xff] %vm4267, %v4242
    %4280 = vst.msk [vmem:[#allocation5 + $0x60] sm:$0xff] %vm4267, %v4244
    %4281 = vst.msk [vmem:[#allocation5 + $0x68] sm:$0xff] %vm4267, %v4246
    %4282 = vst.msk [vmem:[#allocation5 + $0x70] sm:$0xff] %vm4267, %v4248
    %4283 = vst.msk [vmem:[#allocation5 + $0x78] sm:$0xff] %vm4267, %v4250
    %v4284 = vld [vmem:[%s4041] sm:$0xff]
    %v4285 = vld [vmem:[%s4041 + $0x10] sm:$0xff]
    %v4286 = vld [vmem:[%s4041 + $0x20] sm:$0xff]
    %v4287 = vld [vmem:[%s4041 + $0x30] sm:$0xff]
    %v4288 = vld [vmem:[%s4041 + $0x40] sm:$0xff]
    %v4289 = vld [vmem:[%s4041 + $0x50] sm:$0xff]
    %v4290 = vld [vmem:[%s4041 + $0x60] sm:$0xff]
    %v4291 = vld [vmem:[%s4041 + $0x70] sm:$0xff]
    %v4292 = vld [vmem:[%s4041 + $0xa0] sm:$0xff]
    %v4293 = vld [vmem:[%s4041 + $0xb0] sm:$0xff]
    %v4294 = vld [vmem:[%s4041 + $0xc0] sm:$0xff]
    %v4295 = vld [vmem:[%s4041 + $0xd0] sm:$0xff]
    %v4296 = vld [vmem:[%s4041 + $0xe0] sm:$0xff]
    %v4297 = vld [vmem:[%s4041 + $0xf0] sm:$0xff]
    %v4298 = vld [vmem:[%s4041 + $0x100] sm:$0xff]
    %v4299 = vld [vmem:[%s4041 + $0x110] sm:$0xff]
    %4316 = vrot.lane.b32.xlu0 %v4284, 24
    %v4317 = vpop.permute.xlu0 %4316
    %4318 = vrot.lane.b32.xlu0 %v4285, 24
    %v4319 = vpop.permute.xlu0 %4318
    %4320 = vrot.lane.b32.xlu0 %v4286, 24
    %v4321 = vpop.permute.xlu0 %4320
    %4322 = vrot.lane.b32.xlu0 %v4287, 24
    %v4323 = vpop.permute.xlu0 %4322
    %4324 = vrot.lane.b32.xlu0 %v4288, 24
    %v4325 = vpop.permute.xlu0 %4324
    %4326 = vrot.lane.b32.xlu0 %v4289, 24
    %v4327 = vpop.permute.xlu0 %4326
    %4328 = vrot.lane.b32.xlu0 %v4290, 24
    %v4329 = vpop.permute.xlu0 %4328
    %4330 = vrot.lane.b32.xlu0 %v4291, 24
    %v4331 = vpop.permute.xlu0 %4330
    %4332 = vrot.lane.b32.xlu0 %v4292, 24
    %v4333 = vpop.permute.xlu0 %4332
    %4334 = vrot.lane.b32.xlu0 %v4293, 24
    %v4335 = vpop.permute.xlu0 %4334
    %4336 = vrot.lane.b32.xlu0 %v4294, 24
    %v4337 = vpop.permute.xlu0 %4336
    %4338 = vrot.lane.b32.xlu0 %v4295, 24
    %v4339 = vpop.permute.xlu0 %4338
    %4340 = vrot.lane.b32.xlu0 %v4296, 24
    %v4341 = vpop.permute.xlu0 %4340
    %4342 = vrot.lane.b32.xlu0 %v4297, 24
    %v4343 = vpop.permute.xlu0 %4342
    %4344 = vrot.lane.b32.xlu0 %v4298, 24
    %v4345 = vpop.permute.xlu0 %4344
    %4346 = vrot.lane.b32.xlu0 %v4299, 24
    %v4347 = vpop.permute.xlu0 %4346
    %vm4364 = vcmask 261312
    %4365 = vst.msk [vmem:[#allocation5] sm:$0xff] %vm4364, %v4317
    %4366 = vst.msk [vmem:[#allocation5 + $0x8] sm:$0xff] %vm4364, %v4319
    %4367 = vst.msk [vmem:[#allocation5 + $0x10] sm:$0xff] %vm4364, %v4321
    %4368 = vst.msk [vmem:[#allocation5 + $0x18] sm:$0xff] %vm4364, %v4323
    %4369 = vst.msk [vmem:[#allocation5 + $0x20] sm:$0xff] %vm4364, %v4325
    %4370 = vst.msk [vmem:[#allocation5 + $0x28] sm:$0xff] %vm4364, %v4327
    %4371 = vst.msk [vmem:[#allocation5 + $0x30] sm:$0xff] %vm4364, %v4329
    %4372 = vst.msk [vmem:[#allocation5 + $0x38] sm:$0xff] %vm4364, %v4331
    %4373 = vst.msk [vmem:[#allocation5 + $0x40] sm:$0xff] %vm4364, %v4333
    %4374 = vst.msk [vmem:[#allocation5 + $0x48] sm:$0xff] %vm4364, %v4335
    %4375 = vst.msk [vmem:[#allocation5 + $0x50] sm:$0xff] %vm4364, %v4337
    %4376 = vst.msk [vmem:[#allocation5 + $0x58] sm:$0xff] %vm4364, %v4339
    %4377 = vst.msk [vmem:[#allocation5 + $0x60] sm:$0xff] %vm4364, %v4341
    %4378 = vst.msk [vmem:[#allocation5 + $0x68] sm:$0xff] %vm4364, %v4343
    %4379 = vst.msk [vmem:[#allocation5 + $0x70] sm:$0xff] %vm4364, %v4345
    %4380 = vst.msk [vmem:[#allocation5 + $0x78] sm:$0xff] %vm4364, %v4347
    %v4381 = vld [vmem:[%s4041 + $0x1] sm:$0xff]
    %v4382 = vld [vmem:[%s4041 + $0x11] sm:$0xff]
    %v4383 = vld [vmem:[%s4041 + $0x21] sm:$0xff]
    %v4384 = vld [vmem:[%s4041 + $0x31] sm:$0xff]
    %v4385 = vld [vmem:[%s4041 + $0x41] sm:$0xff]
    %v4386 = vld [vmem:[%s4041 + $0x51] sm:$0xff]
    %v4387 = vld [vmem:[%s4041 + $0x61] sm:$0xff]
    %v4388 = vld [vmem:[%s4041 + $0x71] sm:$0xff]
    %v4389 = vld [vmem:[%s4041 + $0xa1] sm:$0xff]
    %v4390 = vld [vmem:[%s4041 + $0xb1] sm:$0xff]
    %v4391 = vld [vmem:[%s4041 + $0xc1] sm:$0xff]
    %v4392 = vld [vmem:[%s4041 + $0xd1] sm:$0xff]
    %v4393 = vld [vmem:[%s4041 + $0xe1] sm:$0xff]
    %v4394 = vld [vmem:[%s4041 + $0xf1] sm:$0xff]
    %v4395 = vld [vmem:[%s4041 + $0x101] sm:$0xff]
    %v4396 = vld [vmem:[%s4041 + $0x111] sm:$0xff]
    %4413 = vrot.lane.b32.xlu0 %v4381, 32
    %v4414 = vpop.permute.xlu0 %4413
    %4415 = vrot.lane.b32.xlu0 %v4382, 32
    %v4416 = vpop.permute.xlu0 %4415
    %4417 = vrot.lane.b32.xlu0 %v4383, 32
    %v4418 = vpop.permute.xlu0 %4417
    %4419 = vrot.lane.b32.xlu0 %v4384, 32
    %v4420 = vpop.permute.xlu0 %4419
    %4421 = vrot.lane.b32.xlu0 %v4385, 32
    %v4422 = vpop.permute.xlu0 %4421
    %4423 = vrot.lane.b32.xlu0 %v4386, 32
    %v4424 = vpop.permute.xlu0 %4423
    %4425 = vrot.lane.b32.xlu0 %v4387, 32
    %v4426 = vpop.permute.xlu0 %4425
    %4427 = vrot.lane.b32.xlu0 %v4388, 32
    %v4428 = vpop.permute.xlu0 %4427
    %4429 = vrot.lane.b32.xlu0 %v4389, 32
    %v4430 = vpop.permute.xlu0 %4429
    %4431 = vrot.lane.b32.xlu0 %v4390, 32
    %v4432 = vpop.permute.xlu0 %4431
    %4433 = vrot.lane.b32.xlu0 %v4391, 32
    %v4434 = vpop.permute.xlu0 %4433
    %4435 = vrot.lane.b32.xlu0 %v4392, 32
    %v4436 = vpop.permute.xlu0 %4435
    %4437 = vrot.lane.b32.xlu0 %v4393, 32
    %v4438 = vpop.permute.xlu0 %4437
    %4439 = vrot.lane.b32.xlu0 %v4394, 32
    %v4440 = vpop.permute.xlu0 %4439
    %4441 = vrot.lane.b32.xlu0 %v4395, 32
    %v4442 = vpop.permute.xlu0 %4441
    %4443 = vrot.lane.b32.xlu0 %v4396, 32
    %v4444 = vpop.permute.xlu0 %4443
    %vm4461 = vcmask 326912
    %4462 = vst.msk [vmem:[#allocation5] sm:$0xff] %vm4461, %v4414
    %4463 = vst.msk [vmem:[#allocation5 + $0x8] sm:$0xff] %vm4461, %v4416
    %4464 = vst.msk [vmem:[#allocation5 + $0x10] sm:$0xff] %vm4461, %v4418
    %4465 = vst.msk [vmem:[#allocation5 + $0x18] sm:$0xff] %vm4461, %v4420
    %4466 = vst.msk [vmem:[#allocation5 + $0x20] sm:$0xff] %vm4461, %v4422
    %4467 = vst.msk [vmem:[#allocation5 + $0x28] sm:$0xff] %vm4461, %v4424
    %4468 = vst.msk [vmem:[#allocation5 + $0x30] sm:$0xff] %vm4461, %v4426
    %4469 = vst.msk [vmem:[#allocation5 + $0x38] sm:$0xff] %vm4461, %v4428
    %4470 = vst.msk [vmem:[#allocation5 + $0x40] sm:$0xff] %vm4461, %v4430
    %4471 = vst.msk [vmem:[#allocation5 + $0x48] sm:$0xff] %vm4461, %v4432
    %4472 = vst.msk [vmem:[#allocation5 + $0x50] sm:$0xff] %vm4461, %v4434
    %4473 = vst.msk [vmem:[#allocation5 + $0x58] sm:$0xff] %vm4461, %v4436
    %4474 = vst.msk [vmem:[#allocation5 + $0x60] sm:$0xff] %vm4461, %v4438
    %4475 = vst.msk [vmem:[#allocation5 + $0x68] sm:$0xff] %vm4461, %v4440
    %4476 = vst.msk [vmem:[#allocation5 + $0x70] sm:$0xff] %vm4461, %v4442
    %4477 = vst.msk [vmem:[#allocation5 + $0x78] sm:$0xff] %vm4461, %v4444
    %v4478 = vld [vmem:[%s4041 + $0x2] sm:$0xff]
    %v4479 = vld [vmem:[%s4041 + $0x12] sm:$0xff]
    %v4480 = vld [vmem:[%s4041 + $0x22] sm:$0xff]
    %v4481 = vld [vmem:[%s4041 + $0x32] sm:$0xff]
    %v4482 = vld [vmem:[%s4041 + $0x42] sm:$0xff]
    %v4483 = vld [vmem:[%s4041 + $0x52] sm:$0xff]
    %v4484 = vld [vmem:[%s4041 + $0x62] sm:$0xff]
    %v4485 = vld [vmem:[%s4041 + $0x72] sm:$0xff]
    %v4486 = vld [vmem:[%s4041 + $0xa2] sm:$0xff]
    %v4487 = vld [vmem:[%s4041 + $0xb2] sm:$0xff]
    %v4488 = vld [vmem:[%s4041 + $0xc2] sm:$0xff]
    %v4489 = vld [vmem:[%s4041 + $0xd2] sm:$0xff]
    %v4490 = vld [vmem:[%s4041 + $0xe2] sm:$0xff]
    %v4491 = vld [vmem:[%s4041 + $0xf2] sm:$0xff]
    %v4492 = vld [vmem:[%s4041 + $0x102] sm:$0xff]
    %v4493 = vld [vmem:[%s4041 + $0x112] sm:$0xff]
    %4510 = vrot.lane.b32.xlu0 %v4478, 40
    %v4511 = vpop.permute.xlu0 %4510
    %4512 = vrot.lane.b32.xlu0 %v4479, 40
    %v4513 = vpop.permute.xlu0 %4512
    %4514 = vrot.lane.b32.xlu0 %v4480, 40
    %v4515 = vpop.permute.xlu0 %4514
    %4516 = vrot.lane.b32.xlu0 %v4481, 40
    %v4517 = vpop.permute.xlu0 %4516
    %4518 = vrot.lane.b32.xlu0 %v4482, 40
    %v4519 = vpop.permute.xlu0 %4518
    %4520 = vrot.lane.b32.xlu0 %v4483, 40
    %v4521 = vpop.permute.xlu0 %4520
    %4522 = vrot.lane.b32.xlu0 %v4484, 40
    %v4523 = vpop.permute.xlu0 %4522
    %4524 = vrot.lane.b32.xlu0 %v4485, 40
    %v4525 = vpop.permute.xlu0 %4524
    %4526 = vrot.lane.b32.xlu0 %v4486, 40
    %v4527 = vpop.permute.xlu0 %4526
    %4528 = vrot.lane.b32.xlu0 %v4487, 40
    %v4529 = vpop.permute.xlu0 %4528
    %4530 = vrot.lane.b32.xlu0 %v4488, 40
    %v4531 = vpop.permute.xlu0 %4530
    %4532 = vrot.lane.b32.xlu0 %v4489, 40
    %v4533 = vpop.permute.xlu0 %4532
    %4534 = vrot.lane.b32.xlu0 %v4490, 40
    %v4535 = vpop.permute.xlu0 %4534
    %4536 = vrot.lane.b32.xlu0 %v4491, 40
    %v4537 = vpop.permute.xlu0 %4536
    %4538 = vrot.lane.b32.xlu0 %v4492, 40
    %v4539 = vpop.permute.xlu0 %4538
    %4540 = vrot.lane.b32.xlu0 %v4493, 40
    %v4541 = vpop.permute.xlu0 %4540
    %vm4558 = vcmask 392512
    %4559 = vst.msk [vmem:[#allocation5] sm:$0xff] %vm4558, %v4511
    %4560 = vst.msk [vmem:[#allocation5 + $0x8] sm:$0xff] %vm4558, %v4513
    %4561 = vst.msk [vmem:[#allocation5 + $0x10] sm:$0xff] %vm4558, %v4515
    %4562 = vst.msk [vmem:[#allocation5 + $0x18] sm:$0xff] %vm4558, %v4517
    %4563 = vst.msk [vmem:[#allocation5 + $0x20] sm:$0xff] %vm4558, %v4519
    %4564 = vst.msk [vmem:[#allocation5 + $0x28] sm:$0xff] %vm4558, %v4521
    %4565 = vst.msk [vmem:[#allocation5 + $0x30] sm:$0xff] %vm4558, %v4523
    %4566 = vst.msk [vmem:[#allocation5 + $0x38] sm:$0xff] %vm4558, %v4525
    %4567 = vst.msk [vmem:[#allocation5 + $0x40] sm:$0xff] %vm4558, %v4527
    %4568 = vst.msk [vmem:[#allocation5 + $0x48] sm:$0xff] %vm4558, %v4529
    %4569 = vst.msk [vmem:[#allocation5 + $0x50] sm:$0xff] %vm4558, %v4531
    %4570 = vst.msk [vmem:[#allocation5 + $0x58] sm:$0xff] %vm4558, %v4533
    %4571 = vst.msk [vmem:[#allocation5 + $0x60] sm:$0xff] %vm4558, %v4535
    %4572 = vst.msk [vmem:[#allocation5 + $0x68] sm:$0xff] %vm4558, %v4537
    %4573 = vst.msk [vmem:[#allocation5 + $0x70] sm:$0xff] %vm4558, %v4539
    %4574 = vst.msk [vmem:[#allocation5 + $0x78] sm:$0xff] %vm4558, %v4541
    %s4575 = scalar_lea.vmem [#allocation4], 32
    %v4576 = vld [vmem:[%s4575] sm:$0xff]
    %v4577 = vld [vmem:[%s4575 + $0x10] sm:$0xff]
    %v4578 = vld [vmem:[%s4575 + $0x20] sm:$0xff]
    %v4579 = vld [vmem:[%s4575 + $0x30] sm:$0xff]
    %v4580 = vld [vmem:[%s4575 + $0x40] sm:$0xff]
    %v4581 = vld [vmem:[%s4575 + $0x50] sm:$0xff]
    %v4582 = vld [vmem:[%s4575 + $0x60] sm:$0xff]
    %v4583 = vld [vmem:[%s4575 + $0x70] sm:$0xff]
    %v4584 = vld [vmem:[%s4575 + $0xa0] sm:$0xff]
    %v4585 = vld [vmem:[%s4575 + $0xb0] sm:$0xff]
    %v4586 = vld [vmem:[%s4575 + $0xc0] sm:$0xff]
    %v4587 = vld [vmem:[%s4575 + $0xd0] sm:$0xff]
    %v4588 = vld [vmem:[%s4575 + $0xe0] sm:$0xff]
    %v4589 = vld [vmem:[%s4575 + $0xf0] sm:$0xff]
    %v4590 = vld [vmem:[%s4575 + $0x100] sm:$0xff]
    %v4591 = vld [vmem:[%s4575 + $0x110] sm:$0xff]
    %4608 = vrot.lane.b32.xlu0 %v4576, 48
    %v4609 = vpop.permute.xlu0 %4608
    %4610 = vrot.lane.b32.xlu0 %v4577, 48
    %v4611 = vpop.permute.xlu0 %4610
    %4612 = vrot.lane.b32.xlu0 %v4578, 48
    %v4613 = vpop.permute.xlu0 %4612
    %4614 = vrot.lane.b32.xlu0 %v4579, 48
    %v4615 = vpop.permute.xlu0 %4614
    %4616 = vrot.lane.b32.xlu0 %v4580, 48
    %v4617 = vpop.permute.xlu0 %4616
    %4618 = vrot.lane.b32.xlu0 %v4581, 48
    %v4619 = vpop.permute.xlu0 %4618
    %4620 = vrot.lane.b32.xlu0 %v4582, 48
    %v4621 = vpop.permute.xlu0 %4620
    %4622 = vrot.lane.b32.xlu0 %v4583, 48
    %v4623 = vpop.permute.xlu0 %4622
    %4624 = vrot.lane.b32.xlu0 %v4584, 48
    %v4625 = vpop.permute.xlu0 %4624
    %4626 = vrot.lane.b32.xlu0 %v4585, 48
    %v4627 = vpop.permute.xlu0 %4626
    %4628 = vrot.lane.b32.xlu0 %v4586, 48
    %v4629 = vpop.permute.xlu0 %4628
    %4630 = vrot.lane.b32.xlu0 %v4587, 48
    %v4631 = vpop.permute.xlu0 %4630
    %4632 = vrot.lane.b32.xlu0 %v4588, 48
    %v4633 = vpop.permute.xlu0 %4632
    %4634 = vrot.lane.b32.xlu0 %v4589, 48
    %v4635 = vpop.permute.xlu0 %4634
    %4636 = vrot.lane.b32.xlu0 %v4590, 48
    %v4637 = vpop.permute.xlu0 %4636
    %4638 = vrot.lane.b32.xlu0 %v4591, 48
    %v4639 = vpop.permute.xlu0 %4638
    %vm4656 = vcmask 458112
    %4657 = vst.msk [vmem:[#allocation5] sm:$0xff] %vm4656, %v4609
    %4658 = vst.msk [vmem:[#allocation5 + $0x8] sm:$0xff] %vm4656, %v4611
    %4659 = vst.msk [vmem:[#allocation5 + $0x10] sm:$0xff] %vm4656, %v4613
    %4660 = vst.msk [vmem:[#allocation5 + $0x18] sm:$0xff] %vm4656, %v4615
    %4661 = vst.msk [vmem:[#allocation5 + $0x20] sm:$0xff] %vm4656, %v4617
    %4662 = vst.msk [vmem:[#allocation5 + $0x28] sm:$0xff] %vm4656, %v4619
    %4663 = vst.msk [vmem:[#allocation5 + $0x30] sm:$0xff] %vm4656, %v4621
    %4664 = vst.msk [vmem:[#allocation5 + $0x38] sm:$0xff] %vm4656, %v4623
    %4665 = vst.msk [vmem:[#allocation5 + $0x40] sm:$0xff] %vm4656, %v4625
    %4666 = vst.msk [vmem:[#allocation5 + $0x48] sm:$0xff] %vm4656, %v4627
    %4667 = vst.msk [vmem:[#allocation5 + $0x50] sm:$0xff] %vm4656, %v4629
    %4668 = vst.msk [vmem:[#allocation5 + $0x58] sm:$0xff] %vm4656, %v4631
    %4669 = vst.msk [vmem:[#allocation5 + $0x60] sm:$0xff] %vm4656, %v4633
    %4670 = vst.msk [vmem:[#allocation5 + $0x68] sm:$0xff] %vm4656, %v4635
    %4671 = vst.msk [vmem:[#allocation5 + $0x70] sm:$0xff] %vm4656, %v4637
    %4672 = vst.msk [vmem:[#allocation5 + $0x78] sm:$0xff] %vm4656, %v4639
    %v4673 = vld [vmem:[%s4575 + $0x1] sm:$0xff]
    %v4674 = vld [vmem:[%s4575 + $0x11] sm:$0xff]
    %v4675 = vld [vmem:[%s4575 + $0x21] sm:$0xff]
    %v4676 = vld [vmem:[%s4575 + $0x31] sm:$0xff]
    %v4677 = vld [vmem:[%s4575 + $0x41] sm:$0xff]
    %v4678 = vld [vmem:[%s4575 + $0x51] sm:$0xff]
    %v4679 = vld [vmem:[%s4575 + $0x61] sm:$0xff]
    %v4680 = vld [vmem:[%s4575 + $0x71] sm:$0xff]
    %v4681 = vld [vmem:[%s4575 + $0xa1] sm:$0xff]
    %v4682 = vld [vmem:[%s4575 + $0xb1] sm:$0xff]
    %v4683 = vld [vmem:[%s4575 + $0xc1] sm:$0xff]
    %v4684 = vld [vmem:[%s4575 + $0xd1] sm:$0xff]
    %v4685 = vld [vmem:[%s4575 + $0xe1] sm:$0xff]
    %v4686 = vld [vmem:[%s4575 + $0xf1] sm:$0xff]
    %v4687 = vld [vmem:[%s4575 + $0x101] sm:$0xff]
    %v4688 = vld [vmem:[%s4575 + $0x111] sm:$0xff]
    %4705 = vrot.lane.b32.xlu0 %v4673, 56
    %v4706 = vpop.permute.xlu0 %4705
    %4707 = vrot.lane.b32.xlu0 %v4674, 56
    %v4708 = vpop.permute.xlu0 %4707
    %4709 = vrot.lane.b32.xlu0 %v4675, 56
    %v4710 = vpop.permute.xlu0 %4709
    %4711 = vrot.lane.b32.xlu0 %v4676, 56
    %v4712 = vpop.permute.xlu0 %4711
    %4713 = vrot.lane.b32.xlu0 %v4677, 56
    %v4714 = vpop.permute.xlu0 %4713
    %4715 = vrot.lane.b32.xlu0 %v4678, 56
    %v4716 = vpop.permute.xlu0 %4715
    %4717 = vrot.lane.b32.xlu0 %v4679, 56
    %v4718 = vpop.permute.xlu0 %4717
    %4719 = vrot.lane.b32.xlu0 %v4680, 56
    %v4720 = vpop.permute.xlu0 %4719
    %4721 = vrot.lane.b32.xlu0 %v4681, 56
    %v4722 = vpop.permute.xlu0 %4721
    %4723 = vrot.lane.b32.xlu0 %v4682, 56
    %v4724 = vpop.permute.xlu0 %4723
    %4725 = vrot.lane.b32.xlu0 %v4683, 56
    %v4726 = vpop.permute.xlu0 %4725
    %4727 = vrot.lane.b32.xlu0 %v4684, 56
    %v4728 = vpop.permute.xlu0 %4727
    %4729 = vrot.lane.b32.xlu0 %v4685, 56
    %v4730 = vpop.permute.xlu0 %4729
    %4731 = vrot.lane.b32.xlu0 %v4686, 56
    %v4732 = vpop.permute.xlu0 %4731
    %4733 = vrot.lane.b32.xlu0 %v4687, 56
    %v4734 = vpop.permute.xlu0 %4733
    %4735 = vrot.lane.b32.xlu0 %v4688, 56
    %v4736 = vpop.permute.xlu0 %4735
    %vm4753 = vcmask 523712
    %4754 = vst.msk [vmem:[#allocation5] sm:$0xff] %vm4753, %v4706
    %4755 = vst.msk [vmem:[#allocation5 + $0x8] sm:$0xff] %vm4753, %v4708
    %4756 = vst.msk [vmem:[#allocation5 + $0x10] sm:$0xff] %vm4753, %v4710
    %4757 = vst.msk [vmem:[#allocation5 + $0x18] sm:$0xff] %vm4753, %v4712
    %4758 = vst.msk [vmem:[#allocation5 + $0x20] sm:$0xff] %vm4753, %v4714
    %4759 = vst.msk [vmem:[#allocation5 + $0x28] sm:$0xff] %vm4753, %v4716
    %4760 = vst.msk [vmem:[#allocation5 + $0x30] sm:$0xff] %vm4753, %v4718
    %4761 = vst.msk [vmem:[#allocation5 + $0x38] sm:$0xff] %vm4753, %v4720
    %4762 = vst.msk [vmem:[#allocation5 + $0x40] sm:$0xff] %vm4753, %v4722
    %4763 = vst.msk [vmem:[#allocation5 + $0x48] sm:$0xff] %vm4753, %v4724
    %4764 = vst.msk [vmem:[#allocation5 + $0x50] sm:$0xff] %vm4753, %v4726
    %4765 = vst.msk [vmem:[#allocation5 + $0x58] sm:$0xff] %vm4753, %v4728
    %4766 = vst.msk [vmem:[#allocation5 + $0x60] sm:$0xff] %vm4753, %v4730
    %4767 = vst.msk [vmem:[#allocation5 + $0x68] sm:$0xff] %vm4753, %v4732
    %4768 = vst.msk [vmem:[#allocation5 + $0x70] sm:$0xff] %vm4753, %v4734
    %4769 = vst.msk [vmem:[#allocation5 + $0x78] sm:$0xff] %vm4753, %v4736
    %v4770 = vld [vmem:[%s4575 + $0x2] sm:$0xff]
    %v4771 = vld [vmem:[%s4575 + $0x12] sm:$0xff]
    %v4772 = vld [vmem:[%s4575 + $0x22] sm:$0xff]
    %v4773 = vld [vmem:[%s4575 + $0x32] sm:$0xff]
    %v4774 = vld [vmem:[%s4575 + $0x42] sm:$0xff]
    %v4775 = vld [vmem:[%s4575 + $0x52] sm:$0xff]
    %v4776 = vld [vmem:[%s4575 + $0x62] sm:$0xff]
    %v4777 = vld [vmem:[%s4575 + $0x72] sm:$0xff]
    %v4778 = vld [vmem:[%s4575 + $0xa2] sm:$0xff]
    %v4779 = vld [vmem:[%s4575 + $0xb2] sm:$0xff]
    %v4780 = vld [vmem:[%s4575 + $0xc2] sm:$0xff]
    %v4781 = vld [vmem:[%s4575 + $0xd2] sm:$0xff]
    %v4782 = vld [vmem:[%s4575 + $0xe2] sm:$0xff]
    %v4783 = vld [vmem:[%s4575 + $0xf2] sm:$0xff]
    %v4784 = vld [vmem:[%s4575 + $0x102] sm:$0xff]
    %v4785 = vld [vmem:[%s4575 + $0x112] sm:$0xff]
    %4802 = vrot.lane.b32.xlu0 %v4770, 64
    %v4803 = vpop.permute.xlu0 %4802
    %4804 = vrot.lane.b32.xlu0 %v4771, 64
    %v4805 = vpop.permute.xlu0 %4804
    %4806 = vrot.lane.b32.xlu0 %v4772, 64
    %v4807 = vpop.permute.xlu0 %4806
    %4808 = vrot.lane.b32.xlu0 %v4773, 64
    %v4809 = vpop.permute.xlu0 %4808
    %4810 = vrot.lane.b32.xlu0 %v4774, 64
    %v4811 = vpop.permute.xlu0 %4810
    %4812 = vrot.lane.b32.xlu0 %v4775, 64
    %v4813 = vpop.permute.xlu0 %4812
    %4814 = vrot.lane.b32.xlu0 %v4776, 64
    %v4815 = vpop.permute.xlu0 %4814
    %4816 = vrot.lane.b32.xlu0 %v4777, 64
    %v4817 = vpop.permute.xlu0 %4816
    %4818 = vrot.lane.b32.xlu0 %v4778, 64
    %v4819 = vpop.permute.xlu0 %4818
    %4820 = vrot.lane.b32.xlu0 %v4779, 64
    %v4821 = vpop.permute.xlu0 %4820
    %4822 = vrot.lane.b32.xlu0 %v4780, 64
    %v4823 = vpop.permute.xlu0 %4822
    %4824 = vrot.lane.b32.xlu0 %v4781, 64
    %v4825 = vpop.permute.xlu0 %4824
    %4826 = vrot.lane.b32.xlu0 %v4782, 64
    %v4827 = vpop.permute.xlu0 %4826
    %4828 = vrot.lane.b32.xlu0 %v4783, 64
    %v4829 = vpop.permute.xlu0 %4828
    %4830 = vrot.lane.b32.xlu0 %v4784, 64
    %v4831 = vpop.permute.xlu0 %4830
    %4832 = vrot.lane.b32.xlu0 %v4785, 64
    %v4833 = vpop.permute.xlu0 %4832
    %vm4850 = vcmask 589312
    %4851 = vst.msk [vmem:[#allocation5] sm:$0xff] %vm4850, %v4803
    %4852 = vst.msk [vmem:[#allocation5 + $0x8] sm:$0xff] %vm4850, %v4805
    %4853 = vst.msk [vmem:[#allocation5 + $0x10] sm:$0xff] %vm4850, %v4807
    %4854 = vst.msk [vmem:[#allocation5 + $0x18] sm:$0xff] %vm4850, %v4809
    %4855 = vst.msk [vmem:[#allocation5 + $0x20] sm:$0xff] %vm4850, %v4811
    %4856 = vst.msk [vmem:[#allocation5 + $0x28] sm:$0xff] %vm4850, %v4813
    %4857 = vst.msk [vmem:[#allocation5 + $0x30] sm:$0xff] %vm4850, %v4815
    %4858 = vst.msk [vmem:[#allocation5 + $0x38] sm:$0xff] %vm4850, %v4817
    %4859 = vst.msk [vmem:[#allocation5 + $0x40] sm:$0xff] %vm4850, %v4819
    %4860 = vst.msk [vmem:[#allocation5 + $0x48] sm:$0xff] %vm4850, %v4821
    %4861 = vst.msk [vmem:[#allocation5 + $0x50] sm:$0xff] %vm4850, %v4823
    %4862 = vst.msk [vmem:[#allocation5 + $0x58] sm:$0xff] %vm4850, %v4825
    %4863 = vst.msk [vmem:[#allocation5 + $0x60] sm:$0xff] %vm4850, %v4827
    %4864 = vst.msk [vmem:[#allocation5 + $0x68] sm:$0xff] %vm4850, %v4829
    %4865 = vst.msk [vmem:[#allocation5 + $0x70] sm:$0xff] %vm4850, %v4831
    %4866 = vst.msk [vmem:[#allocation5 + $0x78] sm:$0xff] %vm4850, %v4833
    %v4867 = vld [vmem:[#allocation5] sm:$0xff]
    %v4868 = vld [vmem:[#allocation5 + $0x8] sm:$0xff]
    %v4869 = vld [vmem:[#allocation5 + $0x10] sm:$0xff]
    %v4870 = vld [vmem:[#allocation5 + $0x18] sm:$0xff]
    %v4871 = vld [vmem:[#allocation5 + $0x20] sm:$0xff]
    %v4872 = vld [vmem:[#allocation5 + $0x28] sm:$0xff]
    %v4873 = vld [vmem:[#allocation5 + $0x30] sm:$0xff]
    %v4874 = vld [vmem:[#allocation5 + $0x38] sm:$0xff]
    %v4875 = vld [vmem:[#allocation5 + $0x40] sm:$0xff]
    %v4876 = vld [vmem:[#allocation5 + $0x48] sm:$0xff]
    %v4877 = vld [vmem:[#allocation5 + $0x50] sm:$0xff]
    %v4878 = vld [vmem:[#allocation5 + $0x58] sm:$0xff]
    %v4879 = vld [vmem:[#allocation5 + $0x60] sm:$0xff]
    %v4880 = vld [vmem:[#allocation5 + $0x68] sm:$0xff]
    %v4881 = vld [vmem:[#allocation5 + $0x70] sm:$0xff]
    %v4882 = vld [vmem:[#allocation5 + $0x78] sm:$0xff]
    %v4883 = vld [vmem:[%s3] sm:$0xff]
    %v4884 = vld [vmem:[%s3 + $0x8] sm:$0xff]
    %v4885 = vld [vmem:[%s3 + $0x10] sm:$0xff]
    %v4886 = vld [vmem:[%s3 + $0x18] sm:$0xff]
    %v4887 = vld [vmem:[%s3 + $0x20] sm:$0xff]
    %v4888 = vld [vmem:[%s3 + $0x28] sm:$0xff]
    %v4889 = vld [vmem:[%s3 + $0x30] sm:$0xff]
    %v4890 = vld [vmem:[%s3 + $0x38] sm:$0xff]
    %v4891 = vld [vmem:[%s3 + $0x40] sm:$0xff]
    %v4892 = vld [vmem:[%s4] sm:$0x1]
    %v4894 = vperm.slane %v4892, 0
    %vm4896 = vcmask 588800
    %v4898 = vsel %vm4896, %v4867, 0
    %v4901 = vsel %vm4896, %v4868, 0
    %v4904 = vsel %vm4896, %v4869, 0
    %v4907 = vsel %vm4896, %v4870, 0
    %v4910 = vsel %vm4896, %v4871, 0
    %v4913 = vsel %vm4896, %v4872, 0
    %v4916 = vsel %vm4896, %v4873, 0
    %v4919 = vsel %vm4896, %v4874, 0
    %v4922 = vsel %vm4896, %v4875, 0
    %v4925 = vsel %vm4896, %v4876, 0
    %v4928 = vsel %vm4896, %v4877, 0
    %v4931 = vsel %vm4896, %v4878, 0
    %v4934 = vsel %vm4896, %v4879, 0
    %v4937 = vsel %vm4896, %v4880, 0
    %v4940 = vsel %vm4896, %v4881, 0
    %v4943 = vsel %vm4896, %v4882, 0
    %4945 = vmatpush.msra.mxu0 0.0
    %4946 = vmatpush.msra.mxu0 0.0
    %4947 = vmatpush.msra.mxu0 0.0
    %4948 = vmatpush.msra.mxu0 0.0
    %4949 = vmatpush.msra.mxu0 0.0
    %4950 = vmatpush.msra.mxu0 0.0
    %4951 = vmatpush.msra.mxu0 0.0
    %4952 = vmatpush.msra.mxu0 %v4891
    %4953 = vmatpush.msra.mxu0 %v4890
    %4954 = vmatpush.msra.mxu0 %v4889
    %4955 = vmatpush.msra.mxu0 %v4888
    %4956 = vmatpush.msra.mxu0 %v4887
    %4957 = vmatpush.msra.mxu0 %v4886
    %4958 = vmatpush.msra.mxu0 %v4885
    %4959 = vmatpush.msra.mxu0 %v4884
    %4960 = vmatpush.msra.mxu0 %v4883
    %4961 = vmatmul.f32.gmra.mxu0 %v4898
    %v4962 = vpop.f32.mrf.mxu0
    %v4963 = vadd.f32 %v4894, %v4962
    %4964 = vmatmul.f32.gmra.mxu0 %v4901
    %v4965 = vpop.f32.mrf.mxu0
    %v4966 = vadd.f32 %v4894, %v4965
    %4967 = vmatmul.f32.gmra.mxu0 %v4904
    %v4968 = vpop.f32.mrf.mxu0
    %v4969 = vadd.f32 %v4894, %v4968
    %4970 = vmatmul.f32.gmra.mxu0 %v4907
    %v4971 = vpop.f32.mrf.mxu0
    %v4972 = vadd.f32 %v4894, %v4971
    %4973 = vmatmul.f32.gmra.mxu0 %v4910
    %v4974 = vpop.f32.mrf.mxu0
    %v4975 = vadd.f32 %v4894, %v4974
    %4976 = vmatmul.f32.gmra.mxu0 %v4913
    %v4977 = vpop.f32.mrf.mxu0
    %v4978 = vadd.f32 %v4894, %v4977
    %4979 = vmatmul.f32.gmra.mxu0 %v4916
    %v4980 = vpop.f32.mrf.mxu0
    %v4981 = vadd.f32 %v4894, %v4980
    %4982 = vmatmul.f32.gmra.mxu0 %v4919
    %v4983 = vpop.f32.mrf.mxu0
    %v4984 = vadd.f32 %v4894, %v4983
    %4985 = vmatmul.f32.gmra.mxu0 %v4922
    %v4986 = vpop.f32.mrf.mxu0
    %v4987 = vadd.f32 %v4894, %v4986
    %4988 = vmatmul.f32.gmra.mxu0 %v4925
    %v4989 = vpop.f32.mrf.mxu0
    %v4990 = vadd.f32 %v4894, %v4989
    %4991 = vmatmul.f32.gmra.mxu0 %v4928
    %v4992 = vpop.f32.mrf.mxu0
    %v4993 = vadd.f32 %v4894, %v4992
    %4994 = vmatmul.f32.gmra.mxu0 %v4931
    %v4995 = vpop.f32.mrf.mxu0
    %v4996 = vadd.f32 %v4894, %v4995
    %4997 = vmatmul.f32.gmra.mxu0 %v4934
    %v4998 = vpop.f32.mrf.mxu0
    %v4999 = vadd.f32 %v4894, %v4998
    %5000 = vmatmul.f32.gmra.mxu0 %v4937
    %v5001 = vpop.f32.mrf.mxu0
    %v5002 = vadd.f32 %v4894, %v5001
    %5003 = vmatmul.f32.gmra.mxu0 %v4940
    %v5004 = vpop.f32.mrf.mxu0
    %v5005 = vadd.f32 %v4894, %v5004
    %5006 = vmatmul.f32.gmra.mxu0 %v4943
    %v5007 = vpop.f32.mrf.mxu0
    %v5008 = vadd.f32 %v4894, %v5007
    %5009 = vdwg.mxu0
    %v5010 = vmax.f32 %v4963, 0.0
    %v5011 = vmax.f32 %v4966, 0.0
    %v5012 = vmax.f32 %v4969, 0.0
    %v5013 = vmax.f32 %v4972, 0.0
    %v5014 = vmax.f32 %v4975, 0.0
    %v5015 = vmax.f32 %v4978, 0.0
    %v5016 = vmax.f32 %v4981, 0.0
    %v5017 = vmax.f32 %v4984, 0.0
    %v5018 = vmax.f32 %v4987, 0.0
    %v5019 = vmax.f32 %v4990, 0.0
    %v5020 = vmax.f32 %v4993, 0.0
    %v5021 = vmax.f32 %v4996, 0.0
    %v5022 = vmax.f32 %v4999, 0.0
    %v5023 = vmax.f32 %v5002, 0.0
    %v5024 = vmax.f32 %v5005, 0.0
    %v5025 = vmax.f32 %v5008, 0.0
    %v5042 = vrot.slane %v5011, 7
    %v5043 = vsel %vm2879, %v5042, %v5010
    %v5044 = vrot.slane %v5012, 6
    %v5045 = vsel %vm2881, %v5044, %v5043
    %v5046 = vrot.slane %v5013, 5
    %v5047 = vsel %vm2883, %v5046, %v5045
    %v5048 = vrot.slane %v5014, 4
    %v5049 = vsel %vm2885, %v5048, %v5047
    %v5050 = vrot.slane %v5015, 3
    %v5051 = vsel %vm2887, %v5050, %v5049
    %v5052 = vrot.slane %v5016, 2
    %v5053 = vsel %vm2889, %v5052, %v5051
    %v5054 = vrot.slane %v5017, 1
    %v5055 = vsel %vm2891, %v5054, %v5053
    %v5056 = vrot.slane %v5019, 7
    %v5057 = vsel %vm2879, %v5056, %v5018
    %v5058 = vrot.slane %v5020, 6
    %v5059 = vsel %vm2881, %v5058, %v5057
    %v5060 = vrot.slane %v5021, 5
    %v5061 = vsel %vm2883, %v5060, %v5059
    %v5062 = vrot.slane %v5022, 4
    %v5063 = vsel %vm2885, %v5062, %v5061
    %v5064 = vrot.slane %v5023, 3
    %v5065 = vsel %vm2887, %v5064, %v5063
    %v5066 = vrot.slane %v5024, 2
    %v5067 = vsel %vm2889, %v5066, %v5065
    %v5068 = vrot.slane %v5025, 1
    %v5069 = vsel %vm2891, %v5068, %v5067
    %5072 = vst.msk [vmem:[#allocation6] sm:$0xff] %vm3999, %v5055
    %5073 = vst.msk [vmem:[#allocation6 + $0x8] sm:$0xff] %vm3999, %v5069
    %v5074 = vsel %vm2881, %v5042, %v5010
    %v5075 = vsel %vm2883, %v5044, %v5074
    %v5076 = vsel %vm2885, %v5046, %v5075
    %v5077 = vsel %vm2887, %v5048, %v5076
    %v5078 = vsel %vm2889, %v5050, %v5077
    %v5079 = vsel %vm2891, %v5052, %v5078
    %v5080 = vsel %vm2879, %v5018, %v5054
    %v5081 = vsel %vm2881, %v5056, %v5080
    %v5082 = vsel %vm2883, %v5058, %v5081
    %v5083 = vsel %vm2885, %v5060, %v5082
    %v5084 = vsel %vm2887, %v5062, %v5083
    %v5085 = vsel %vm2889, %v5064, %v5084
    %v5086 = vsel %vm2891, %v5066, %v5085
    %5087 = vrot.lane.b32.xlu0 %v5079, 8
    %v5088 = vpop.permute.xlu0 %5087
    %5089 = vrot.lane.b32.xlu0 %v5086, 8
    %v5090 = vpop.permute.xlu0 %5089
    %5091 = vrot.lane.b32.xlu0 %v5068, 8
    %v5092 = vpop.permute.xlu0 %5091
    %vm5096 = vcmask 130113
    %5097 = vst.msk [vmem:[#allocation6 - $0x1] sm:$0xfe] %vm5096, %v5088
    %5098 = vst.msk [vmem:[#allocation6 + $0x7] sm:$0xff] %vm4170, %v5090
    %vm5099 = vcmask 122944
    %5100 = vst.msk [vmem:[#allocation6 + $0xf] sm:$0x1] %vm5099, %v5092
    %v5101 = vsel %vm2883, %v5042, %v5010
    %v5102 = vsel %vm2885, %v5044, %v5101
    %v5103 = vsel %vm2887, %v5046, %v5102
    %v5104 = vsel %vm2889, %v5048, %v5103
    %v5105 = vsel %vm2891, %v5050, %v5104
    %v5106 = vsel %vm2879, %v5054, %v5052
    %v5107 = vsel %vm2881, %v5018, %v5106
    %v5108 = vsel %vm2883, %v5056, %v5107
    %v5109 = vsel %vm2885, %v5058, %v5108
    %v5110 = vsel %vm2887, %v5060, %v5109
    %v5111 = vsel %vm2889, %v5062, %v5110
    %v5112 = vsel %vm2891, %v5064, %v5111
    %v5113 = vsel %vm2879, %v5068, %v5066
    %5114 = vrot.lane.b32.xlu0 %v5105, 16
    %v5115 = vpop.permute.xlu0 %5114
    %5116 = vrot.lane.b32.xlu0 %v5112, 16
    %v5117 = vpop.permute.xlu0 %5116
    %5118 = vrot.lane.b32.xlu0 %v5113, 16
    %v5119 = vpop.permute.xlu0 %5118
    %vm5123 = vcmask 195714
    %5124 = vst.msk [vmem:[#allocation6 - $0x2] sm:$0xfc] %vm5123, %v5115
    %5125 = vst.msk [vmem:[#allocation6 + $0x6] sm:$0xff] %vm4267, %v5117
    %vm5126 = vcmask 189568
    %5127 = vst.msk [vmem:[#allocation6 + $0xe] sm:$0x3] %vm5126, %v5119
    %v5128 = vsel %vm2885, %v5042, %v5010
    %v5129 = vsel %vm2887, %v5044, %v5128
    %v5130 = vsel %vm2889, %v5046, %v5129
    %v5131 = vsel %vm2891, %v5048, %v5130
    %v5132 = vsel %vm2879, %v5052, %v5050
    %v5133 = vsel %vm2881, %v5054, %v5132
    %v5134 = vsel %vm2883, %v5018, %v5133
    %v5135 = vsel %vm2885, %v5056, %v5134
    %v5136 = vsel %vm2887, %v5058, %v5135
    %v5137 = vsel %vm2889, %v5060, %v5136
    %v5138 = vsel %vm2891, %v5062, %v5137
    %v5139 = vsel %vm2879, %v5066, %v5064
    %v5140 = vsel %vm2881, %v5068, %v5139
    %5141 = vrot.lane.b32.xlu0 %v5131, 24
    %v5142 = vpop.permute.xlu0 %5141
    %5143 = vrot.lane.b32.xlu0 %v5138, 24
    %v5144 = vpop.permute.xlu0 %5143
    %5145 = vrot.lane.b32.xlu0 %v5140, 24
    %v5146 = vpop.permute.xlu0 %5145
    %vm5150 = vcmask 261315
    %5151 = vst.msk [vmem:[#allocation6 - $0x3] sm:$0xf8] %vm5150, %v5142
    %5152 = vst.msk [vmem:[#allocation6 + $0x5] sm:$0xff] %vm4364, %v5144
    %vm5153 = vcmask 256192
    %5154 = vst.msk [vmem:[#allocation6 + $0xd] sm:$0x7] %vm5153, %v5146
    %v5155 = vsel %vm2887, %v5042, %v5010
    %v5156 = vsel %vm2889, %v5044, %v5155
    %v5157 = vsel %vm2891, %v5046, %v5156
    %v5158 = vsel %vm2879, %v5050, %v5048
    %v5159 = vsel %vm2881, %v5052, %v5158
    %v5160 = vsel %vm2883, %v5054, %v5159
    %v5161 = vsel %vm2885, %v5018, %v5160
    %v5162 = vsel %vm2887, %v5056, %v5161
    %v5163 = vsel %vm2889, %v5058, %v5162
    %v5164 = vsel %vm2891, %v5060, %v5163
    %v5165 = vsel %vm2879, %v5064, %v5062
    %v5166 = vsel %vm2881, %v5066, %v5165
    %v5167 = vsel %vm2883, %v5068, %v5166
    %5168 = vrot.lane.b32.xlu0 %v5157, 32
    %v5169 = vpop.permute.xlu0 %5168
    %5170 = vrot.lane.b32.xlu0 %v5164, 32
    %v5171 = vpop.permute.xlu0 %5170
    %5172 = vrot.lane.b32.xlu0 %v5167, 32
    %v5173 = vpop.permute.xlu0 %5172
    %vm5177 = vcmask 326916
    %5178 = vst.msk [vmem:[#allocation6 - $0x4] sm:$0xf0] %vm5177, %v5169
    %5179 = vst.msk [vmem:[#allocation6 + $0x4] sm:$0xff] %vm4461, %v5171
    %vm5180 = vcmask 322816
    %5181 = vst.msk [vmem:[#allocation6 + $0xc] sm:$0xf] %vm5180, %v5173
    %v5182 = vsel %vm2889, %v5042, %v5010
    %v5183 = vsel %vm2891, %v5044, %v5182
    %v5184 = vsel %vm2879, %v5048, %v5046
    %v5185 = vsel %vm2881, %v5050, %v5184
    %v5186 = vsel %vm2883, %v5052, %v5185
    %v5187 = vsel %vm2885, %v5054, %v5186
    %v5188 = vsel %vm2887, %v5018, %v5187
    %v5189 = vsel %vm2889, %v5056, %v5188
    %v5190 = vsel %vm2891, %v5058, %v5189
    %v5191 = vsel %vm2879, %v5062, %v5060
    %v5192 = vsel %vm2881, %v5064, %v5191
    %v5193 = vsel %vm2883, %v5066, %v5192
    %v5194 = vsel %vm2885, %v5068, %v5193
    %5195 = vrot.lane.b32.xlu0 %v5183, 40
    %v5196 = vpop.permute.xlu0 %5195
    %5197 = vrot.lane.b32.xlu0 %v5190, 40
    %v5198 = vpop.permute.xlu0 %5197
    %5199 = vrot.lane.b32.xlu0 %v5194, 40
    %v5200 = vpop.permute.xlu0 %5199
    %vm5204 = vcmask 392517
    %5205 = vst.msk [vmem:[#allocation6 - $0x5] sm:$0xe0] %vm5204, %v5196
    %5206 = vst.msk [vmem:[#allocation6 + $0x3] sm:$0xff] %vm4558, %v5198
    %vm5207 = vcmask 389440
    %5208 = vst.msk [vmem:[#allocation6 + $0xb] sm:$0x1f] %vm5207, %v5200
    %v5209 = vsel %vm2891, %v5042, %v5010
    %v5210 = vsel %vm2879, %v5046, %v5044
    %v5211 = vsel %vm2881, %v5048, %v5210
    %v5212 = vsel %vm2883, %v5050, %v5211
    %v5213 = vsel %vm2885, %v5052, %v5212
    %v5214 = vsel %vm2887, %v5054, %v5213
    %v5215 = vsel %vm2889, %v5018, %v5214
    %v5216 = vsel %vm2891, %v5056, %v5215
    %v5217 = vsel %vm2879, %v5060, %v5058
    %v5218 = vsel %vm2881, %v5062, %v5217
    %v5219 = vsel %vm2883, %v5064, %v5218
    %v5220 = vsel %vm2885, %v5066, %v5219
    %v5221 = vsel %vm2887, %v5068, %v5220
    %5222 = vrot.lane.b32.xlu0 %v5209, 48
    %v5223 = vpop.permute.xlu0 %5222
    %5224 = vrot.lane.b32.xlu0 %v5216, 48
    %v5225 = vpop.permute.xlu0 %5224
    %5226 = vrot.lane.b32.xlu0 %v5221, 48
    %v5227 = vpop.permute.xlu0 %5226
    %vm5231 = vcmask 458118
    %5232 = vst.msk [vmem:[#allocation6 - $0x6] sm:$0xc0] %vm5231, %v5223
    %5233 = vst.msk [vmem:[#allocation6 + $0x2] sm:$0xff] %vm4656, %v5225
    %vm5234 = vcmask 456064
    %5235 = vst.msk [vmem:[#allocation6 + $0xa] sm:$0x3f] %vm5234, %v5227
    %v5236 = vsel %vm2879, %v5044, %v5042
    %v5237 = vsel %vm2881, %v5046, %v5236
    %v5238 = vsel %vm2883, %v5048, %v5237
    %v5239 = vsel %vm2885, %v5050, %v5238
    %v5240 = vsel %vm2887, %v5052, %v5239
    %v5241 = vsel %vm2889, %v5054, %v5240
    %v5242 = vsel %vm2891, %v5018, %v5241
    %v5243 = vsel %vm2879, %v5058, %v5056
    %v5244 = vsel %vm2881, %v5060, %v5243
    %v5245 = vsel %vm2883, %v5062, %v5244
    %v5246 = vsel %vm2885, %v5064, %v5245
    %v5247 = vsel %vm2887, %v5066, %v5246
    %v5248 = vsel %vm2889, %v5068, %v5247
    %5249 = vrot.lane.b32.xlu0 %v5010, 56
    %v5250 = vpop.permute.xlu0 %5249
    %5251 = vrot.lane.b32.xlu0 %v5242, 56
    %v5252 = vpop.permute.xlu0 %5251
    %5253 = vrot.lane.b32.xlu0 %v5248, 56
    %v5254 = vpop.permute.xlu0 %5253
    %vm5258 = vcmask 523719
    %5259 = vst.msk [vmem:[#allocation6 - $0x7] sm:$0x80] %vm5258, %v5250
    %5260 = vst.msk [vmem:[#allocation6 + $0x1] sm:$0xff] %vm4753, %v5252
    %vm5261 = vcmask 522688
    %5262 = vst.msk [vmem:[#allocation6 + $0x9] sm:$0x7f] %vm5261, %v5254
    // Predicated region
    $region22: #{tpu_custom_call.1} parent=1 // pred_check
      _
    $region23: #{tpu_custom_call.1} parent=1 // pred_check_branch
      %5264 = sbr.rel (0) target = $region25
    $region24: #{tpu_custom_call.1} parent=1 // pred_region
      %5266 = vsyncadd [#allocation7], 0
      %s5267 = sshll.u32 [#allocation6], 4
      %s5268 = int_to_ptr.vmem [resolvable:$true] %s5267
      %s5269 = sshll.u32 %s5, 4
      %s5270 = int_to_ptr.hbm [resolvable:$true] %s5269
      %5275 = dma.vmem_to_hbm [thread:$0]  %s5268, 256, %s5270, [#allocation7], 128, 128, 8
    $region25: #{tpu_custom_call.1} parent=1 // pred_fallthru
      _
    // Predicated region
    $region26: #{tpu_custom_call.1} parent=1 // pred_check
      _
    $region27: #{tpu_custom_call.1} parent=1 // pred_check_branch
      %5277 = sbr.rel (0) target = $region29
    $region28: #{tpu_custom_call.1} parent=1 // pred_region
      %5279 = dma.done [#allocation7], 256
    $region29: #{tpu_custom_call.1} parent=1 // pred_fallthru
      _
    %5280 = vsyncpa [#allocation7], 1

</llo_original>
